<compile_context>
chip_gen: v7x
topology: tpu7x:2x2x1
jax: 0.10.0
libtpu: 0.0.40
codegen_flags: <defaults>
</compile_context>

<pallas_src>
import math
import jax
import jax.numpy as jnp
from jax.experimental import pallas as pl
from jax.experimental.pallas import tpu as pltpu

# ---------------- configuration (small shapes consistent with the module) -------------
DIM = 32          # model dim
POSE_DIM = 16     # output projection dim
DEPTH = 2
DIM_HEAD = 16
HEADS = 4
FF_MULT = 4
INNER_FF = FF_MULT * DIM          # 128
COSINE_SIM_SCALE = 16.0
EPS = 1e-5
NUM_BUCKETS = 32
MAX_DISTANCE = 128
ROT_DIM = min(32, DIM_HEAD)
NEG_INF = -1e30

B = 2
N = 8

# row layout of the packed LayerNorm-gain array (3*DEPTH + 1 rows)
G_AIN, G_AOUT, G_FF, G_FIN = 0, DEPTH, 2 * DEPTH, 3 * DEPTH


# ---------------- in-kernel helpers ----------------------------------------------------
def _layernorm(x, g, eps=EPS):
    mean = jnp.mean(x, axis=-1, keepdims=True)
    var = jnp.mean((x - mean) ** 2, axis=-1, keepdims=True)
    return (x - mean) * jax.lax.rsqrt(var + eps) * g


def _l2norm(x, scale=1.0):
    # rsqrt rides the EUP slot; `scale` folds the cosine-sim scale into the same multiply
    ss = jnp.sum(x * x, axis=-1, keepdims=True)
    return x * (jax.lax.rsqrt(jnp.maximum(ss, 1e-24)) * scale)


def _apply_rotary(t, cos, sin, S):
    # rotate_half(t) (interleaved pairs) == t @ S; S is zero outside the rotary dims.
    return t * cos + jnp.dot(t, S, preferred_element_type=jnp.float32) * sin


# ---------------- fused Pallas kernel ---------------------------------------------------
def _fused_kernel(x_ref, wq_ref, wkv_ref, wo_ref, w1_ref, w2_ref,
                  g_ref, wproj_ref, cs_ref, S_ref, bm_ref, o_ref):
    bn = x_ref.shape[0]                       # flattened B*N rows (static)
    x = x_ref[...]                            # (bn, DIM)
    S = S_ref[...]                            # (DIM_HEAD, DIM_HEAD)
    cos = cs_ref[0]                           # (HEADS*bn, DIM_HEAD), token tables tiled per head
    sin = cs_ref[1]

    for layer in range(DEPTH):                # static unroll, DEPTH=2
        # -------- attention block --------
        xn = _layernorm(x, g_ref[G_AIN + layer])

        # fused single-head (MQA-style) k/v projection; split with static lane slices
        kv = jnp.dot(xn, wkv_ref[layer], preferred_element_type=jnp.float32)   # (bn, 2d)
        k = kv[:, :DIM_HEAD]
        v = kv[:, DIM_HEAD:]
        k = _l2norm(_apply_rotary(k, cos[:bn], sin[:bn], S))

        # fused all-head q projection, then stack heads along the sublane axis
        q_all = jnp.dot(xn, wq_ref[layer], preferred_element_type=jnp.float32)  # (bn, H*d)
        q = jnp.concatenate(
            [q_all[:, h * DIM_HEAD:(h + 1) * DIM_HEAD] for h in range(HEADS)],
            axis=0)                                                              # (H*bn, d)
        q = _l2norm(_apply_rotary(q, cos, sin, S), COSINE_SIM_SCALE)

        # one sim / softmax / PV chain covering all heads
        sim = jax.lax.dot_general(q, k, (((1,), (1,)), ((), ())),
                                  preferred_element_type=jnp.float32)           # (H*bn, bn)
        sim = sim + bm_ref[...]        # rel-pos bias + causal + batch block-diagonal mask
        m = jnp.max(sim, axis=-1, keepdims=True)
        p = jnp.exp(sim - m)
        p = p * pl.reciprocal(jnp.sum(p, axis=-1, keepdims=True), approx=True)
        oh = jnp.dot(p, v, preferred_element_type=jnp.float32)                  # (H*bn, d)

        # per-head output projection: sublane slices are tile-aligned & free; chain of
        # accumulating matmuls (in-place MRB accumulation on v7x)
        attn = jnp.zeros_like(x)
        for h in range(HEADS):
            attn = attn + jnp.dot(oh[h * bn:(h + 1) * bn], wo_ref[layer, h],
                                  preferred_element_type=jnp.float32)

        x = _layernorm(attn, g_ref[G_AOUT + layer]) + x    # post-LN + residual

        # -------- feedforward block (SwiGLU), fused value/gate matmul --------
        xn = _layernorm(x, g_ref[G_FF + layer])
        ag = jnp.dot(xn, w1_ref[layer], preferred_element_type=jnp.float32)     # (bn, 2*FF)
        a, gate = ag[:, :INNER_FF], ag[:, INNER_FF:]                            # 128-aligned split
        y = a * (gate * jax.nn.sigmoid(gate))
        x = jnp.dot(y, w2_ref[layer], preferred_element_type=jnp.float32) + x

    # -------- final stable LayerNorm + output projection --------
    xs = x * pl.reciprocal(jnp.max(x, axis=-1, keepdims=True), approx=True)     # stable=True
    xn = _layernorm(xs, g_ref[G_FIN])
    o_ref[...] = jnp.dot(xn, wproj_ref[...], preferred_element_type=jnp.float32)


# ---------------- pallas_call wrapper ---------------------------------------------------
def fused_forward(xf, p, cs, S, bm):
    bn = xf.shape[0]
    ins = [xf, p["wq"], p["wkv"], p["wo"], p["w1"], p["w2"],
           p["g_ln"], p["wproj"], cs, S, bm]
    vmem = lambda: pl.BlockSpec(memory_space=pltpu.MemorySpace.VMEM)
    return pl.pallas_call(
        _fused_kernel,
        out_shape=jax.ShapeDtypeStruct((bn, POSE_DIM), jnp.float32),
        in_specs=[vmem() for _ in ins],
        out_specs=vmem(),
    )(*ins)


# ---------------- position-only glue (plain JAX, precomputed once) ----------------------
def make_rotary_tables(b, n, dim_head, rot_dim, theta=10000.0):
    inv_freq = 1.0 / (theta ** (jnp.arange(0, rot_dim, 2).astype(jnp.float32) / rot_dim))
    pos = jnp.arange(n).astype(jnp.float32)
    freqs = pos[:, None] * inv_freq[None, :]               # (n, rot_dim//2)
    freqs = jnp.repeat(freqs, 2, axis=-1)                  # (n, rot_dim)
    cos = jnp.ones((n, dim_head), jnp.float32).at[:, :rot_dim].set(jnp.cos(freqs))
    sin = jnp.zeros((n, dim_head), jnp.float32).at[:, :rot_dim].set(jnp.sin(freqs))
    # rotate_half as a constant matrix: pairs (a, b) -> (-b, a); zero outside rot_dim
    S = jnp.zeros((dim_head, dim_head), jnp.float32)
    for j in range(rot_dim // 2):
        S = S.at[2 * j + 1, 2 * j].set(-1.0)
        S = S.at[2 * j, 2 * j + 1].set(1.0)
    # tables for the flattened (b*n) rows, tiled per head for the head-sublane-stacked q,
    # packed as one (2, HEADS*b*n, dim_head) kernel input
    cos_bn = jnp.tile(cos, (b, 1))
    sin_bn = jnp.tile(sin, (b, 1))
    cs = jnp.stack([jnp.tile(cos_bn, (HEADS, 1)), jnp.tile(sin_bn, (HEADS, 1))])
    return cs, S


def rel_pos_bias_values(emb, n, num_buckets=NUM_BUCKETS, max_distance=MAX_DISTANCE):
    # RelPosBias.forward(i=n, j=n): bucket(relative_position) -> embedding -> (h, i, j)
    q_pos = jnp.arange(n)
    k_pos = jnp.arange(n)
    rel = k_pos[None, :] - q_pos[:, None]
    neg = jnp.maximum(-rel, 0)
    max_exact = num_buckets // 2
    is_small = neg < max_exact
    neg_clip = jnp.maximum(neg, max_exact).astype(jnp.float32)
    val_large = max_exact + (jnp.log(neg_clip / max_exact)
                             / math.log(max_distance / max_exact)
                             * (num_buckets - max_exact)).astype(jnp.int32)
    val_large = jnp.minimum(val_large, num_buckets - 1)
    bucket = jnp.where(is_small, neg, val_large)
    values = emb[bucket]                                   # (n, n, heads)
    return jnp.transpose(values, (2, 0, 1))                # (heads, n, n)


def make_bias_mask(emb, b, n):
    """Fused additive term for the head-sublane-stacked score matrix (HEADS*b*n, b*n):
       rel-pos bias where (same batch AND causal), NEG_INF elsewhere."""
    bias = rel_pos_bias_values(emb, n)                     # (H, n, n)
    i = jnp.arange(n)
    causal_ok = i[None, :] <= i[:, None]                   # (n, n): j <= i allowed
    blk = jnp.where(causal_ok[None], bias, NEG_INF)        # (H, n, n)
    same_batch = jnp.eye(b, dtype=bool)                    # (b, b)
    full = jnp.where(same_batch[None, :, None, :, None],
                     blk[:, None, :, None, :],
                     NEG_INF)                              # (H, b, n, b, n)
    # TODO(synk): at production B*N, generate this mask in-kernel from broadcasted_iota
    # (or grid over batch) instead of materializing an O((B*N)^2) dense array.
    return full.reshape(HEADS * b * n, b * n).astype(jnp.float32)


# ---------------- full forward ----------------------------------------------------------
def causal_transformer_forward(x, params):
    b, n, d = x.shape
    cs, S = make_rotary_tables(b, n, DIM_HEAD, ROT_DIM)
    bm = make_bias_mask(params["rel_emb"], b, n)
    # init_norm is Identity (norm_in=False); dropout probs are 0.0 (identity)
    xf = x.reshape(b * n, d)                               # flatten batch into rows
    out = fused_forward(xf, params, cs, S, bm)             # (b*n, POSE_DIM)
    return out.reshape(b, n, POSE_DIM)


# ---------------- deterministic parameter init ------------------------------------------
def init_params(key):
    ks = jax.random.split(key, 7)

    def rnd(k, shape):
        return 0.02 * jax.random.normal(k, shape, jnp.float32)

    return {
        "rel_emb": jax.random.normal(ks[0], (NUM_BUCKETS, HEADS), jnp.float32),
        # attention weights, fused layouts (see header)
        "wq":  rnd(ks[1], (DEPTH, DIM, HEADS * DIM_HEAD)),   # all heads fused on lanes
        "wkv": rnd(ks[2], (DEPTH, DIM, 2 * DIM_HEAD)),       # k and v fused
        "wo":  rnd(ks[3], (DEPTH, HEADS, DIM_HEAD, DIM)),    # per-head accumulate chain
        # SwiGLU feedforward, value/gate fused (split at 128 lanes in-kernel)
        "w1":  rnd(ks[4], (DEPTH, DIM, 2 * INNER_FF)),
        "w2":  rnd(ks[5], (DEPTH, INNER_FF, DIM)),
        # all LayerNorm gains packed into one array (rows: attn_in[D], attn_out[D], ff[D], final)
        "g_ln": jnp.ones((3 * DEPTH + 1, 1, DIM), jnp.float32),
        "wproj": rnd(ks[6], (DIM, POSE_DIM)),
        # note: null_kv exists in __init__ but is unused by the reference forward -> omitted
    }


if __name__ == "__main__":
    key = jax.random.PRNGKey(0)
    k_x, k_p = jax.random.split(key)
    x = jax.random.normal(k_x, (B, N, DIM), jnp.float32)
    params = init_params(k_p)

    out = causal_transformer_forward(x, params)
    out = jax.block_until_ready(out)
    assert out.shape == (B, N, POSE_DIM), out.shape
    assert bool(jnp.all(jnp.isfinite(out)))
    print("KERNEL_OK")
</pallas_src>

<mosaic_0001>
module attributes {stable_mosaic.version = 11 : i64} {
  func.func @_fused_kernel(%arg0: memref<16x32xf32, #tpu.memory_space<vmem>>, %arg1: memref<2x32x64xf32, #tpu.memory_space<vmem>>, %arg2: memref<2x32x32xf32, #tpu.memory_space<vmem>>, %arg3: memref<2x4x16x32xf32, #tpu.memory_space<vmem>>, %arg4: memref<2x32x256xf32, #tpu.memory_space<vmem>>, %arg5: memref<2x128x32xf32, #tpu.memory_space<vmem>>, %arg6: memref<7x1x32xf32, #tpu.memory_space<vmem>>, %arg7: memref<32x16xf32, #tpu.memory_space<vmem>>, %arg8: memref<2x64x16xf32, #tpu.memory_space<vmem>>, %arg9: memref<16x16xf32, #tpu.memory_space<vmem>>, %arg10: memref<64x16xf32, #tpu.memory_space<vmem>>, %arg11: memref<16x16xf32, #tpu.memory_space<vmem>>) attributes {dimension_semantics = [], scalar_prefetch = 0 : i64, scratch_operands = 0 : i64, tpu.core_type = #tpu.core_type<tc>} {
    %c0 = arith.constant 0 : index
    %c0_0 = arith.constant 0 : index
    %0 = vector.load %arg0[%c0, %c0_0] : memref<16x32xf32, #tpu.memory_space<vmem>>, vector<16x32xf32>
    %c0_1 = arith.constant 0 : index
    %c0_2 = arith.constant 0 : index
    %1 = vector.load %arg9[%c0_1, %c0_2] : memref<16x16xf32, #tpu.memory_space<vmem>>, vector<16x16xf32>
    %c0_3 = arith.constant 0 : index
    %c0_4 = arith.constant 0 : index
    %c0_5 = arith.constant 0 : index
    %2 = vector.load %arg8[%c0_3, %c0_4, %c0_5] : memref<2x64x16xf32, #tpu.memory_space<vmem>>, vector<1x64x16xf32>
    %3 = vector.shape_cast %2 : vector<1x64x16xf32> to vector<64x16xf32>
    %c1 = arith.constant 1 : index
    %c0_6 = arith.constant 0 : index
    %c0_7 = arith.constant 0 : index
    %4 = vector.load %arg8[%c1, %c0_6, %c0_7] : memref<2x64x16xf32, #tpu.memory_space<vmem>>, vector<1x64x16xf32>
    %5 = vector.shape_cast %4 : vector<1x64x16xf32> to vector<64x16xf32>
    %c0_8 = arith.constant 0 : index
    %c0_9 = arith.constant 0 : index
    %c0_10 = arith.constant 0 : index
    %6 = vector.load %arg6[%c0_8, %c0_9, %c0_10] : memref<7x1x32xf32, #tpu.memory_space<vmem>>, vector<1x1x32xf32>
    %7 = vector.shape_cast %6 : vector<1x1x32xf32> to vector<1x32xf32>
    %cst = arith.constant dense<0.000000e+00> : vector<16xf32>
    %8 = vector.multi_reduction <add>, %0, %cst [1] : vector<16x32xf32> to vector<16xf32>
    %9 = vector.shape_cast %8 : vector<16xf32> to vector<16x1xf32>
    %cst_11 = arith.constant 3.200000e+01 : f32
    %10 = vector.broadcast %cst_11 : f32 to vector<16x1xf32>
    %11 = arith.divf %9, %10 : vector<16x1xf32>
    %12 = vector.broadcast %11 : vector<16x1xf32> to vector<16x32xf32>
    %13 = arith.subf %0, %12 : vector<16x32xf32>
    %14 = arith.mulf %13, %13 : vector<16x32xf32>
    %cst_12 = arith.constant dense<0.000000e+00> : vector<16xf32>
    %15 = vector.multi_reduction <add>, %14, %cst_12 [1] : vector<16x32xf32> to vector<16xf32>
    %16 = vector.shape_cast %15 : vector<16xf32> to vector<16x1xf32>
    %cst_13 = arith.constant 3.200000e+01 : f32
    %17 = vector.broadcast %cst_13 : f32 to vector<16x1xf32>
    %18 = arith.divf %16, %17 : vector<16x1xf32>
    %19 = vector.broadcast %11 : vector<16x1xf32> to vector<16x32xf32>
    %20 = arith.subf %0, %19 : vector<16x32xf32>
    %cst_14 = arith.constant 9.99999974E-6 : f32
    %21 = vector.broadcast %cst_14 : f32 to vector<16x1xf32>
    %22 = arith.addf %18, %21 : vector<16x1xf32>
    %23 = math.rsqrt %22 : vector<16x1xf32>
    %24 = vector.broadcast %23 : vector<16x1xf32> to vector<16x32xf32>
    %25 = arith.mulf %20, %24 : vector<16x32xf32>
    %26 = vector.broadcast %7 : vector<1x32xf32> to vector<16x32xf32>
    %27 = arith.mulf %25, %26 : vector<16x32xf32>
    %c0_15 = arith.constant 0 : index
    %c0_16 = arith.constant 0 : index
    %c0_17 = arith.constant 0 : index
    %28 = vector.load %arg2[%c0_15, %c0_16, %c0_17] : memref<2x32x32xf32, #tpu.memory_space<vmem>>, vector<1x32x32xf32>
    %29 = vector.shape_cast %28 : vector<1x32x32xf32> to vector<32x32xf32>
    %cst_18 = arith.constant dense<0.000000e+00> : vector<16x32xf32>
    %30 = tpu.matmul %27, %29, %cst_18 {dimension_numbers = #tpu.dot_dimension_numbers<[1], [0], [0], [1], [0, 0, 1, 1], [], []>} : vector<16x32xf32>, vector<32x32xf32>, vector<16x32xf32> -> vector<16x32xf32>
    %31 = vector.extract_strided_slice %30 {offsets = [0, 0], sizes = [16, 16], strides = [1, 1]} : vector<16x32xf32> to vector<16x16xf32>
    %32 = vector.extract_strided_slice %30 {offsets = [0, 16], sizes = [16, 16], strides = [1, 1]} : vector<16x32xf32> to vector<16x16xf32>
    %33 = vector.extract_strided_slice %3 {offsets = [0, 0], sizes = [16, 16], strides = [1, 1]} : vector<64x16xf32> to vector<16x16xf32>
    %34 = vector.extract_strided_slice %5 {offsets = [0, 0], sizes = [16, 16], strides = [1, 1]} : vector<64x16xf32> to vector<16x16xf32>
    %35 = arith.mulf %31, %33 : vector<16x16xf32>
    %cst_19 = arith.constant dense<0.000000e+00> : vector<16x16xf32>
    %36 = tpu.matmul %31, %1, %cst_19 {dimension_numbers = #tpu.dot_dimension_numbers<[1], [0], [0], [1], [0, 0, 1, 1], [], []>} : vector<16x16xf32>, vector<16x16xf32>, vector<16x16xf32> -> vector<16x16xf32>
    %37 = arith.mulf %36, %34 : vector<16x16xf32>
    %38 = arith.addf %35, %37 : vector<16x16xf32>
    %39 = arith.mulf %38, %38 : vector<16x16xf32>
    %cst_20 = arith.constant dense<0.000000e+00> : vector<16xf32>
    %40 = vector.multi_reduction <add>, %39, %cst_20 [1] : vector<16x16xf32> to vector<16xf32>
    %41 = vector.shape_cast %40 : vector<16xf32> to vector<16x1xf32>
    %cst_21 = arith.constant 1.000000e-24 : f32
    %42 = vector.broadcast %cst_21 : f32 to vector<16x1xf32>
    %43 = arith.maximumf %41, %42 : vector<16x1xf32>
    %44 = math.rsqrt %43 : vector<16x1xf32>
    %cst_22 = arith.constant 1.000000e+00 : f32
    %45 = vector.broadcast %cst_22 : f32 to vector<16x1xf32>
    %46 = arith.mulf %44, %45 : vector<16x1xf32>
    %47 = vector.broadcast %46 : vector<16x1xf32> to vector<16x16xf32>
    %48 = arith.mulf %38, %47 : vector<16x16xf32>
    %c0_23 = arith.constant 0 : index
    %c0_24 = arith.constant 0 : index
    %c0_25 = arith.constant 0 : index
    %49 = vector.load %arg1[%c0_23, %c0_24, %c0_25] : memref<2x32x64xf32, #tpu.memory_space<vmem>>, vector<1x32x64xf32>
    %50 = vector.shape_cast %49 : vector<1x32x64xf32> to vector<32x64xf32>
    %cst_26 = arith.constant dense<0.000000e+00> : vector<16x64xf32>
    %51 = tpu.matmul %27, %50, %cst_26 {dimension_numbers = #tpu.dot_dimension_numbers<[1], [0], [0], [1], [0, 0, 1, 1], [], []>} : vector<16x32xf32>, vector<32x64xf32>, vector<16x64xf32> -> vector<16x64xf32>
    %52 = vector.extract_strided_slice %51 {offsets = [0, 0], sizes = [16, 16], strides = [1, 1]} : vector<16x64xf32> to vector<16x16xf32>
    %53 = vector.extract_strided_slice %51 {offsets = [0, 16], sizes = [16, 16], strides = [1, 1]} : vector<16x64xf32> to vector<16x16xf32>
    %54 = vector.extract_strided_slice %51 {offsets = [0, 32], sizes = [16, 16], strides = [1, 1]} : vector<16x64xf32> to vector<16x16xf32>
    %55 = vector.extract_strided_slice %51 {offsets = [0, 48], sizes = [16, 16], strides = [1, 1]} : vector<16x64xf32> to vector<16x16xf32>
    %56 = tpu.concatenate %52, %53, %54, %55 in 0 : vector<16x16xf32>, vector<16x16xf32>, vector<16x16xf32>, vector<16x16xf32> -> vector<64x16xf32>
    %57 = arith.mulf %56, %3 : vector<64x16xf32>
    %cst_27 = arith.constant dense<0.000000e+00> : vector<64x16xf32>
    %58 = tpu.matmul %56, %1, %cst_27 {dimension_numbers = #tpu.dot_dimension_numbers<[1], [0], [0], [1], [0, 0, 1, 1], [], []>} : vector<64x16xf32>, vector<16x16xf32>, vector<64x16xf32> -> vector<64x16xf32>
    %59 = arith.mulf %58, %5 : vector<64x16xf32>
    %60 = arith.addf %57, %59 : vector<64x16xf32>
    %61 = arith.mulf %60, %60 : vector<64x16xf32>
    %cst_28 = arith.constant dense<0.000000e+00> : vector<64xf32>
    %62 = vector.multi_reduction <add>, %61, %cst_28 [1] : vector<64x16xf32> to vector<64xf32>
    %63 = vector.shape_cast %62 : vector<64xf32> to vector<64x1xf32>
    %cst_29 = arith.constant 1.000000e-24 : f32
    %64 = vector.broadcast %cst_29 : f32 to vector<64x1xf32>
    %65 = arith.maximumf %63, %64 : vector<64x1xf32>
    %66 = math.rsqrt %65 : vector<64x1xf32>
    %cst_30 = arith.constant 1.600000e+01 : f32
    %67 = vector.broadcast %cst_30 : f32 to vector<64x1xf32>
    %68 = arith.mulf %66, %67 : vector<64x1xf32>
    %69 = vector.broadcast %68 : vector<64x1xf32> to vector<64x16xf32>
    %70 = arith.mulf %60, %69 : vector<64x16xf32>
    %cst_31 = arith.constant dense<0.000000e+00> : vector<64x16xf32>
    %71 = tpu.matmul %70, %48, %cst_31 {dimension_numbers = #tpu.dot_dimension_numbers<[1], [1], [0], [0], [0, 0, 1, 0], [], []>} : vector<64x16xf32>, vector<16x16xf32>, vector<64x16xf32> -> vector<64x16xf32>
    %c0_32 = arith.constant 0 : index
    %c0_33 = arith.constant 0 : index
    %72 = vector.load %arg10[%c0_32, %c0_33] : memref<64x16xf32, #tpu.memory_space<vmem>>, vector<64x16xf32>
    %73 = arith.addf %71, %72 : vector<64x16xf32>
    %cst_34 = arith.constant dense<0xFF800000> : vector<64xf32>
    %74 = vector.multi_reduction <maximumf>, %73, %cst_34 [1] : vector<64x16xf32> to vector<64xf32>
    %75 = vector.shape_cast %74 : vector<64xf32> to vector<64x1xf32>
    %76 = vector.broadcast %75 : vector<64x1xf32> to vector<64x16xf32>
    %77 = arith.subf %73, %76 : vector<64x16xf32>
    %78 = math.exp %77 : vector<64x16xf32>
    %cst_35 = arith.constant dense<0.000000e+00> : vector<64xf32>
    %79 = vector.multi_reduction <add>, %78, %cst_35 [1] : vector<64x16xf32> to vector<64xf32>
    %80 = vector.shape_cast %79 : vector<64xf32> to vector<64x1xf32>
    %81 = tpu.reciprocal %80 {approx = true} : vector<64x1xf32> -> vector<64x1xf32>
    %82 = vector.broadcast %81 : vector<64x1xf32> to vector<64x16xf32>
    %83 = arith.mulf %78, %82 : vector<64x16xf32>
    %cst_36 = arith.constant dense<0.000000e+00> : vector<64x16xf32>
    %84 = tpu.matmul %83, %32, %cst_36 {dimension_numbers = #tpu.dot_dimension_numbers<[1], [0], [0], [1], [0, 0, 1, 1], [], []>} : vector<64x16xf32>, vector<16x16xf32>, vector<64x16xf32> -> vector<64x16xf32>
    %cst_37 = arith.constant 0.000000e+00 : f32
    %85 = vector.broadcast %cst_37 : f32 to vector<16x32xf32>
    %86 = vector.extract_strided_slice %84 {offsets = [0, 0], sizes = [16, 16], strides = [1, 1]} : vector<64x16xf32> to vector<16x16xf32>
    %c0_38 = arith.constant 0 : index
    %c0_39 = arith.constant 0 : index
    %c0_40 = arith.constant 0 : index
    %c0_41 = arith.constant 0 : index
    %87 = vector.load %arg3[%c0_38, %c0_39, %c0_40, %c0_41] : memref<2x4x16x32xf32, #tpu.memory_space<vmem>>, vector<1x1x16x32xf32>
    %88 = vector.shape_cast %87 : vector<1x1x16x32xf32> to vector<16x32xf32>
    %cst_42 = arith.constant dense<0.000000e+00> : vector<16x32xf32>
    %89 = tpu.matmul %86, %88, %cst_42 {dimension_numbers = #tpu.dot_dimension_numbers<[1], [0], [0], [1], [0, 0, 1, 1], [], []>} : vector<16x16xf32>, vector<16x32xf32>, vector<16x32xf32> -> vector<16x32xf32>
    %90 = arith.addf %85, %89 : vector<16x32xf32>
    %91 = vector.extract_strided_slice %84 {offsets = [16, 0], sizes = [16, 16], strides = [1, 1]} : vector<64x16xf32> to vector<16x16xf32>
    %c0_43 = arith.constant 0 : index
    %c1_44 = arith.constant 1 : index
    %c0_45 = arith.constant 0 : index
    %c0_46 = arith.constant 0 : index
    %92 = vector.load %arg3[%c0_43, %c1_44, %c0_45, %c0_46] : memref<2x4x16x32xf32, #tpu.memory_space<vmem>>, vector<1x1x16x32xf32>
    %93 = vector.shape_cast %92 : vector<1x1x16x32xf32> to vector<16x32xf32>
    %cst_47 = arith.constant dense<0.000000e+00> : vector<16x32xf32>
    %94 = tpu.matmul %91, %93, %cst_47 {dimension_numbers = #tpu.dot_dimension_numbers<[1], [0], [0], [1], [0, 0, 1, 1], [], []>} : vector<16x16xf32>, vector<16x32xf32>, vector<16x32xf32> -> vector<16x32xf32>
    %95 = arith.addf %90, %94 : vector<16x32xf32>
    %96 = vector.extract_strided_slice %84 {offsets = [32, 0], sizes = [16, 16], strides = [1, 1]} : vector<64x16xf32> to vector<16x16xf32>
    %c0_48 = arith.constant 0 : index
    %c2 = arith.constant 2 : index
    %c0_49 = arith.constant 0 : index
    %c0_50 = arith.constant 0 : index
    %97 = vector.load %arg3[%c0_48, %c2, %c0_49, %c0_50] : memref<2x4x16x32xf32, #tpu.memory_space<vmem>>, vector<1x1x16x32xf32>
    %98 = vector.shape_cast %97 : vector<1x1x16x32xf32> to vector<16x32xf32>
    %cst_51 = arith.constant dense<0.000000e+00> : vector<16x32xf32>
    %99 = tpu.matmul %96, %98, %cst_51 {dimension_numbers = #tpu.dot_dimension_numbers<[1], [0], [0], [1], [0, 0, 1, 1], [], []>} : vector<16x16xf32>, vector<16x32xf32>, vector<16x32xf32> -> vector<16x32xf32>
    %100 = arith.addf %95, %99 : vector<16x32xf32>
    %101 = vector.extract_strided_slice %84 {offsets = [48, 0], sizes = [16, 16], strides = [1, 1]} : vector<64x16xf32> to vector<16x16xf32>
    %c0_52 = arith.constant 0 : index
    %c3 = arith.constant 3 : index
    %c0_53 = arith.constant 0 : index
    %c0_54 = arith.constant 0 : index
    %102 = vector.load %arg3[%c0_52, %c3, %c0_53, %c0_54] : memref<2x4x16x32xf32, #tpu.memory_space<vmem>>, vector<1x1x16x32xf32>
    %103 = vector.shape_cast %102 : vector<1x1x16x32xf32> to vector<16x32xf32>
    %cst_55 = arith.constant dense<0.000000e+00> : vector<16x32xf32>
    %104 = tpu.matmul %101, %103, %cst_55 {dimension_numbers = #tpu.dot_dimension_numbers<[1], [0], [0], [1], [0, 0, 1, 1], [], []>} : vector<16x16xf32>, vector<16x32xf32>, vector<16x32xf32> -> vector<16x32xf32>
    %105 = arith.addf %100, %104 : vector<16x32xf32>
    %c2_56 = arith.constant 2 : index
    %c0_57 = arith.constant 0 : index
    %c0_58 = arith.constant 0 : index
    %106 = vector.load %arg6[%c2_56, %c0_57, %c0_58] : memref<7x1x32xf32, #tpu.memory_space<vmem>>, vector<1x1x32xf32>
    %107 = vector.shape_cast %106 : vector<1x1x32xf32> to vector<1x32xf32>
    %cst_59 = arith.constant dense<0.000000e+00> : vector<16xf32>
    %108 = vector.multi_reduction <add>, %105, %cst_59 [1] : vector<16x32xf32> to vector<16xf32>
    %109 = vector.shape_cast %108 : vector<16xf32> to vector<16x1xf32>
    %cst_60 = arith.constant 3.200000e+01 : f32
    %110 = vector.broadcast %cst_60 : f32 to vector<16x1xf32>
    %111 = arith.divf %109, %110 : vector<16x1xf32>
    %112 = vector.broadcast %111 : vector<16x1xf32> to vector<16x32xf32>
    %113 = arith.subf %105, %112 : vector<16x32xf32>
    %114 = arith.mulf %113, %113 : vector<16x32xf32>
    %cst_61 = arith.constant dense<0.000000e+00> : vector<16xf32>
    %115 = vector.multi_reduction <add>, %114, %cst_61 [1] : vector<16x32xf32> to vector<16xf32>
    %116 = vector.shape_cast %115 : vector<16xf32> to vector<16x1xf32>
    %cst_62 = arith.constant 3.200000e+01 : f32
    %117 = vector.broadcast %cst_62 : f32 to vector<16x1xf32>
    %118 = arith.divf %116, %117 : vector<16x1xf32>
    %119 = vector.broadcast %111 : vector<16x1xf32> to vector<16x32xf32>
    %120 = arith.subf %105, %119 : vector<16x32xf32>
    %cst_63 = arith.constant 9.99999974E-6 : f32
    %121 = vector.broadcast %cst_63 : f32 to vector<16x1xf32>
    %122 = arith.addf %118, %121 : vector<16x1xf32>
    %123 = math.rsqrt %122 : vector<16x1xf32>
    %124 = vector.broadcast %123 : vector<16x1xf32> to vector<16x32xf32>
    %125 = arith.mulf %120, %124 : vector<16x32xf32>
    %126 = vector.broadcast %107 : vector<1x32xf32> to vector<16x32xf32>
    %127 = arith.mulf %125, %126 : vector<16x32xf32>
    %128 = arith.addf %127, %0 : vector<16x32xf32>
    %c4 = arith.constant 4 : index
    %c0_64 = arith.constant 0 : index
    %c0_65 = arith.constant 0 : index
    %129 = vector.load %arg6[%c4, %c0_64, %c0_65] : memref<7x1x32xf32, #tpu.memory_space<vmem>>, vector<1x1x32xf32>
    %130 = vector.shape_cast %129 : vector<1x1x32xf32> to vector<1x32xf32>
    %cst_66 = arith.constant dense<0.000000e+00> : vector<16xf32>
    %131 = vector.multi_reduction <add>, %128, %cst_66 [1] : vector<16x32xf32> to vector<16xf32>
    %132 = vector.shape_cast %131 : vector<16xf32> to vector<16x1xf32>
    %cst_67 = arith.constant 3.200000e+01 : f32
    %133 = vector.broadcast %cst_67 : f32 to vector<16x1xf32>
    %134 = arith.divf %132, %133 : vector<16x1xf32>
    %135 = vector.broadcast %134 : vector<16x1xf32> to vector<16x32xf32>
    %136 = arith.subf %128, %135 : vector<16x32xf32>
    %137 = arith.mulf %136, %136 : vector<16x32xf32>
    %cst_68 = arith.constant dense<0.000000e+00> : vector<16xf32>
    %138 = vector.multi_reduction <add>, %137, %cst_68 [1] : vector<16x32xf32> to vector<16xf32>
    %139 = vector.shape_cast %138 : vector<16xf32> to vector<16x1xf32>
    %cst_69 = arith.constant 3.200000e+01 : f32
    %140 = vector.broadcast %cst_69 : f32 to vector<16x1xf32>
    %141 = arith.divf %139, %140 : vector<16x1xf32>
    %142 = vector.broadcast %134 : vector<16x1xf32> to vector<16x32xf32>
    %143 = arith.subf %128, %142 : vector<16x32xf32>
    %cst_70 = arith.constant 9.99999974E-6 : f32
    %144 = vector.broadcast %cst_70 : f32 to vector<16x1xf32>
    %145 = arith.addf %141, %144 : vector<16x1xf32>
    %146 = math.rsqrt %145 : vector<16x1xf32>
    %147 = vector.broadcast %146 : vector<16x1xf32> to vector<16x32xf32>
    %148 = arith.mulf %143, %147 : vector<16x32xf32>
    %149 = vector.broadcast %130 : vector<1x32xf32> to vector<16x32xf32>
    %150 = arith.mulf %148, %149 : vector<16x32xf32>
    %c0_71 = arith.constant 0 : index
    %c0_72 = arith.constant 0 : index
    %c0_73 = arith.constant 0 : index
    %151 = vector.load %arg4[%c0_71, %c0_72, %c0_73] : memref<2x32x256xf32, #tpu.memory_space<vmem>>, vector<1x32x256xf32>
    %152 = vector.shape_cast %151 : vector<1x32x256xf32> to vector<32x256xf32>
    %cst_74 = arith.constant dense<0.000000e+00> : vector<16x256xf32>
    %153 = tpu.matmul %150, %152, %cst_74 {dimension_numbers = #tpu.dot_dimension_numbers<[1], [0], [0], [1], [0, 0, 1, 1], [], []>} : vector<16x32xf32>, vector<32x256xf32>, vector<16x256xf32> -> vector<16x256xf32>
    %154 = vector.extract_strided_slice %153 {offsets = [0, 0], sizes = [16, 128], strides = [1, 1]} : vector<16x256xf32> to vector<16x128xf32>
    %155 = vector.extract_strided_slice %153 {offsets = [0, 128], sizes = [16, 128], strides = [1, 1]} : vector<16x256xf32> to vector<16x128xf32>
    %156 = arith.negf %155 : vector<16x128xf32>
    %157 = math.exp %156 : vector<16x128xf32>
    %cst_75 = arith.constant 1.000000e+00 : f32
    %158 = vector.broadcast %cst_75 : f32 to vector<16x128xf32>
    %159 = arith.addf %158, %157 : vector<16x128xf32>
    %160 = arith.divf %158, %159 : vector<16x128xf32>
    %161 = arith.mulf %155, %160 : vector<16x128xf32>
    %162 = arith.mulf %154, %161 : vector<16x128xf32>
    %c0_76 = arith.constant 0 : index
    %c0_77 = arith.constant 0 : index
    %c0_78 = arith.constant 0 : index
    %163 = vector.load %arg5[%c0_76, %c0_77, %c0_78] : memref<2x128x32xf32, #tpu.memory_space<vmem>>, vector<1x128x32xf32>
    %164 = vector.shape_cast %163 : vector<1x128x32xf32> to vector<128x32xf32>
    %cst_79 = arith.constant dense<0.000000e+00> : vector<16x32xf32>
    %165 = tpu.matmul %162, %164, %cst_79 {dimension_numbers = #tpu.dot_dimension_numbers<[1], [0], [0], [1], [0, 0, 1, 1], [], []>} : vector<16x128xf32>, vector<128x32xf32>, vector<16x32xf32> -> vector<16x32xf32>
    %166 = arith.addf %165, %128 : vector<16x32xf32>
    %c1_80 = arith.constant 1 : index
    %c0_81 = arith.constant 0 : index
    %c0_82 = arith.constant 0 : index
    %167 = vector.load %arg6[%c1_80, %c0_81, %c0_82] : memref<7x1x32xf32, #tpu.memory_space<vmem>>, vector<1x1x32xf32>
    %168 = vector.shape_cast %167 : vector<1x1x32xf32> to vector<1x32xf32>
    %cst_83 = arith.constant dense<0.000000e+00> : vector<16xf32>
    %169 = vector.multi_reduction <add>, %166, %cst_83 [1] : vector<16x32xf32> to vector<16xf32>
    %170 = vector.shape_cast %169 : vector<16xf32> to vector<16x1xf32>
    %cst_84 = arith.constant 3.200000e+01 : f32
    %171 = vector.broadcast %cst_84 : f32 to vector<16x1xf32>
    %172 = arith.divf %170, %171 : vector<16x1xf32>
    %173 = vector.broadcast %172 : vector<16x1xf32> to vector<16x32xf32>
    %174 = arith.subf %166, %173 : vector<16x32xf32>
    %175 = arith.mulf %174, %174 : vector<16x32xf32>
    %cst_85 = arith.constant dense<0.000000e+00> : vector<16xf32>
    %176 = vector.multi_reduction <add>, %175, %cst_85 [1] : vector<16x32xf32> to vector<16xf32>
    %177 = vector.shape_cast %176 : vector<16xf32> to vector<16x1xf32>
    %cst_86 = arith.constant 3.200000e+01 : f32
    %178 = vector.broadcast %cst_86 : f32 to vector<16x1xf32>
    %179 = arith.divf %177, %178 : vector<16x1xf32>
    %180 = vector.broadcast %172 : vector<16x1xf32> to vector<16x32xf32>
    %181 = arith.subf %166, %180 : vector<16x32xf32>
    %cst_87 = arith.constant 9.99999974E-6 : f32
    %182 = vector.broadcast %cst_87 : f32 to vector<16x1xf32>
    %183 = arith.addf %179, %182 : vector<16x1xf32>
    %184 = math.rsqrt %183 : vector<16x1xf32>
    %185 = vector.broadcast %184 : vector<16x1xf32> to vector<16x32xf32>
    %186 = arith.mulf %181, %185 : vector<16x32xf32>
    %187 = vector.broadcast %168 : vector<1x32xf32> to vector<16x32xf32>
    %188 = arith.mulf %186, %187 : vector<16x32xf32>
    %c1_88 = arith.constant 1 : index
    %c0_89 = arith.constant 0 : index
    %c0_90 = arith.constant 0 : index
    %189 = vector.load %arg2[%c1_88, %c0_89, %c0_90] : memref<2x32x32xf32, #tpu.memory_space<vmem>>, vector<1x32x32xf32>
    %190 = vector.shape_cast %189 : vector<1x32x32xf32> to vector<32x32xf32>
    %cst_91 = arith.constant dense<0.000000e+00> : vector<16x32xf32>
    %191 = tpu.matmul %188, %190, %cst_91 {dimension_numbers = #tpu.dot_dimension_numbers<[1], [0], [0], [1], [0, 0, 1, 1], [], []>} : vector<16x32xf32>, vector<32x32xf32>, vector<16x32xf32> -> vector<16x32xf32>
    %192 = vector.extract_strided_slice %191 {offsets = [0, 0], sizes = [16, 16], strides = [1, 1]} : vector<16x32xf32> to vector<16x16xf32>
    %193 = vector.extract_strided_slice %191 {offsets = [0, 16], sizes = [16, 16], strides = [1, 1]} : vector<16x32xf32> to vector<16x16xf32>
    %194 = vector.extract_strided_slice %3 {offsets = [0, 0], sizes = [16, 16], strides = [1, 1]} : vector<64x16xf32> to vector<16x16xf32>
    %195 = vector.extract_strided_slice %5 {offsets = [0, 0], sizes = [16, 16], strides = [1, 1]} : vector<64x16xf32> to vector<16x16xf32>
    %196 = arith.mulf %192, %194 : vector<16x16xf32>
    %cst_92 = arith.constant dense<0.000000e+00> : vector<16x16xf32>
    %197 = tpu.matmul %192, %1, %cst_92 {dimension_numbers = #tpu.dot_dimension_numbers<[1], [0], [0], [1], [0, 0, 1, 1], [], []>} : vector<16x16xf32>, vector<16x16xf32>, vector<16x16xf32> -> vector<16x16xf32>
    %198 = arith.mulf %197, %195 : vector<16x16xf32>
    %199 = arith.addf %196, %198 : vector<16x16xf32>
    %200 = arith.mulf %199, %199 : vector<16x16xf32>
    %cst_93 = arith.constant dense<0.000000e+00> : vector<16xf32>
    %201 = vector.multi_reduction <add>, %200, %cst_93 [1] : vector<16x16xf32> to vector<16xf32>
    %202 = vector.shape_cast %201 : vector<16xf32> to vector<16x1xf32>
    %cst_94 = arith.constant 1.000000e-24 : f32
    %203 = vector.broadcast %cst_94 : f32 to vector<16x1xf32>
    %204 = arith.maximumf %202, %203 : vector<16x1xf32>
    %205 = math.rsqrt %204 : vector<16x1xf32>
    %cst_95 = arith.constant 1.000000e+00 : f32
    %206 = vector.broadcast %cst_95 : f32 to vector<16x1xf32>
    %207 = arith.mulf %205, %206 : vector<16x1xf32>
    %208 = vector.broadcast %207 : vector<16x1xf32> to vector<16x16xf32>
    %209 = arith.mulf %199, %208 : vector<16x16xf32>
    %c1_96 = arith.constant 1 : index
    %c0_97 = arith.constant 0 : index
    %c0_98 = arith.constant 0 : index
    %210 = vector.load %arg1[%c1_96, %c0_97, %c0_98] : memref<2x32x64xf32, #tpu.memory_space<vmem>>, vector<1x32x64xf32>
    %211 = vector.shape_cast %210 : vector<1x32x64xf32> to vector<32x64xf32>
    %cst_99 = arith.constant dense<0.000000e+00> : vector<16x64xf32>
    %212 = tpu.matmul %188, %211, %cst_99 {dimension_numbers = #tpu.dot_dimension_numbers<[1], [0], [0], [1], [0, 0, 1, 1], [], []>} : vector<16x32xf32>, vector<32x64xf32>, vector<16x64xf32> -> vector<16x64xf32>
    %213 = vector.extract_strided_slice %212 {offsets = [0, 0], sizes = [16, 16], strides = [1, 1]} : vector<16x64xf32> to vector<16x16xf32>
    %214 = vector.extract_strided_slice %212 {offsets = [0, 16], sizes = [16, 16], strides = [1, 1]} : vector<16x64xf32> to vector<16x16xf32>
    %215 = vector.extract_strided_slice %212 {offsets = [0, 32], sizes = [16, 16], strides = [1, 1]} : vector<16x64xf32> to vector<16x16xf32>
    %216 = vector.extract_strided_slice %212 {offsets = [0, 48], sizes = [16, 16], strides = [1, 1]} : vector<16x64xf32> to vector<16x16xf32>
    %217 = tpu.concatenate %213, %214, %215, %216 in 0 : vector<16x16xf32>, vector<16x16xf32>, vector<16x16xf32>, vector<16x16xf32> -> vector<64x16xf32>
    %218 = arith.mulf %217, %3 : vector<64x16xf32>
    %cst_100 = arith.constant dense<0.000000e+00> : vector<64x16xf32>
    %219 = tpu.matmul %217, %1, %cst_100 {dimension_numbers = #tpu.dot_dimension_numbers<[1], [0], [0], [1], [0, 0, 1, 1], [], []>} : vector<64x16xf32>, vector<16x16xf32>, vector<64x16xf32> -> vector<64x16xf32>
    %220 = arith.mulf %219, %5 : vector<64x16xf32>
    %221 = arith.addf %218, %220 : vector<64x16xf32>
    %222 = arith.mulf %221, %221 : vector<64x16xf32>
    %cst_101 = arith.constant dense<0.000000e+00> : vector<64xf32>
    %223 = vector.multi_reduction <add>, %222, %cst_101 [1] : vector<64x16xf32> to vector<64xf32>
    %224 = vector.shape_cast %223 : vector<64xf32> to vector<64x1xf32>
    %cst_102 = arith.constant 1.000000e-24 : f32
    %225 = vector.broadcast %cst_102 : f32 to vector<64x1xf32>
    %226 = arith.maximumf %224, %225 : vector<64x1xf32>
    %227 = math.rsqrt %226 : vector<64x1xf32>
    %cst_103 = arith.constant 1.600000e+01 : f32
    %228 = vector.broadcast %cst_103 : f32 to vector<64x1xf32>
    %229 = arith.mulf %227, %228 : vector<64x1xf32>
    %230 = vector.broadcast %229 : vector<64x1xf32> to vector<64x16xf32>
    %231 = arith.mulf %221, %230 : vector<64x16xf32>
    %cst_104 = arith.constant dense<0.000000e+00> : vector<64x16xf32>
    %232 = tpu.matmul %231, %209, %cst_104 {dimension_numbers = #tpu.dot_dimension_numbers<[1], [1], [0], [0], [0, 0, 1, 0], [], []>} : vector<64x16xf32>, vector<16x16xf32>, vector<64x16xf32> -> vector<64x16xf32>
    %c0_105 = arith.constant 0 : index
    %c0_106 = arith.constant 0 : index
    %233 = vector.load %arg10[%c0_105, %c0_106] : memref<64x16xf32, #tpu.memory_space<vmem>>, vector<64x16xf32>
    %234 = arith.addf %232, %233 : vector<64x16xf32>
    %cst_107 = arith.constant dense<0xFF800000> : vector<64xf32>
    %235 = vector.multi_reduction <maximumf>, %234, %cst_107 [1] : vector<64x16xf32> to vector<64xf32>
    %236 = vector.shape_cast %235 : vector<64xf32> to vector<64x1xf32>
    %237 = vector.broadcast %236 : vector<64x1xf32> to vector<64x16xf32>
    %238 = arith.subf %234, %237 : vector<64x16xf32>
    %239 = math.exp %238 : vector<64x16xf32>
    %cst_108 = arith.constant dense<0.000000e+00> : vector<64xf32>
    %240 = vector.multi_reduction <add>, %239, %cst_108 [1] : vector<64x16xf32> to vector<64xf32>
    %241 = vector.shape_cast %240 : vector<64xf32> to vector<64x1xf32>
    %242 = tpu.reciprocal %241 {approx = true} : vector<64x1xf32> -> vector<64x1xf32>
    %243 = vector.broadcast %242 : vector<64x1xf32> to vector<64x16xf32>
    %244 = arith.mulf %239, %243 : vector<64x16xf32>
    %cst_109 = arith.constant dense<0.000000e+00> : vector<64x16xf32>
    %245 = tpu.matmul %244, %193, %cst_109 {dimension_numbers = #tpu.dot_dimension_numbers<[1], [0], [0], [1], [0, 0, 1, 1], [], []>} : vector<64x16xf32>, vector<16x16xf32>, vector<64x16xf32> -> vector<64x16xf32>
    %cst_110 = arith.constant 0.000000e+00 : f32
    %246 = vector.broadcast %cst_110 : f32 to vector<16x32xf32>
    %247 = vector.extract_strided_slice %245 {offsets = [0, 0], sizes = [16, 16], strides = [1, 1]} : vector<64x16xf32> to vector<16x16xf32>
    %c1_111 = arith.constant 1 : index
    %c0_112 = arith.constant 0 : index
    %c0_113 = arith.constant 0 : index
    %c0_114 = arith.constant 0 : index
    %248 = vector.load %arg3[%c1_111, %c0_112, %c0_113, %c0_114] : memref<2x4x16x32xf32, #tpu.memory_space<vmem>>, vector<1x1x16x32xf32>
    %249 = vector.shape_cast %248 : vector<1x1x16x32xf32> to vector<16x32xf32>
    %cst_115 = arith.constant dense<0.000000e+00> : vector<16x32xf32>
    %250 = tpu.matmul %247, %249, %cst_115 {dimension_numbers = #tpu.dot_dimension_numbers<[1], [0], [0], [1], [0, 0, 1, 1], [], []>} : vector<16x16xf32>, vector<16x32xf32>, vector<16x32xf32> -> vector<16x32xf32>
    %251 = arith.addf %246, %250 : vector<16x32xf32>
    %252 = vector.extract_strided_slice %245 {offsets = [16, 0], sizes = [16, 16], strides = [1, 1]} : vector<64x16xf32> to vector<16x16xf32>
    %c1_116 = arith.constant 1 : index
    %c1_117 = arith.constant 1 : index
    %c0_118 = arith.constant 0 : index
    %c0_119 = arith.constant 0 : index
    %253 = vector.load %arg3[%c1_116, %c1_117, %c0_118, %c0_119] : memref<2x4x16x32xf32, #tpu.memory_space<vmem>>, vector<1x1x16x32xf32>
    %254 = vector.shape_cast %253 : vector<1x1x16x32xf32> to vector<16x32xf32>
    %cst_120 = arith.constant dense<0.000000e+00> : vector<16x32xf32>
    %255 = tpu.matmul %252, %254, %cst_120 {dimension_numbers = #tpu.dot_dimension_numbers<[1], [0], [0], [1], [0, 0, 1, 1], [], []>} : vector<16x16xf32>, vector<16x32xf32>, vector<16x32xf32> -> vector<16x32xf32>
    %256 = arith.addf %251, %255 : vector<16x32xf32>
    %257 = vector.extract_strided_slice %245 {offsets = [32, 0], sizes = [16, 16], strides = [1, 1]} : vector<64x16xf32> to vector<16x16xf32>
    %c1_121 = arith.constant 1 : index
    %c2_122 = arith.constant 2 : index
    %c0_123 = arith.constant 0 : index
    %c0_124 = arith.constant 0 : index
    %258 = vector.load %arg3[%c1_121, %c2_122, %c0_123, %c0_124] : memref<2x4x16x32xf32, #tpu.memory_space<vmem>>, vector<1x1x16x32xf32>
    %259 = vector.shape_cast %258 : vector<1x1x16x32xf32> to vector<16x32xf32>
    %cst_125 = arith.constant dense<0.000000e+00> : vector<16x32xf32>
    %260 = tpu.matmul %257, %259, %cst_125 {dimension_numbers = #tpu.dot_dimension_numbers<[1], [0], [0], [1], [0, 0, 1, 1], [], []>} : vector<16x16xf32>, vector<16x32xf32>, vector<16x32xf32> -> vector<16x32xf32>
    %261 = arith.addf %256, %260 : vector<16x32xf32>
    %262 = vector.extract_strided_slice %245 {offsets = [48, 0], sizes = [16, 16], strides = [1, 1]} : vector<64x16xf32> to vector<16x16xf32>
    %c1_126 = arith.constant 1 : index
    %c3_127 = arith.constant 3 : index
    %c0_128 = arith.constant 0 : index
    %c0_129 = arith.constant 0 : index
    %263 = vector.load %arg3[%c1_126, %c3_127, %c0_128, %c0_129] : memref<2x4x16x32xf32, #tpu.memory_space<vmem>>, vector<1x1x16x32xf32>
    %264 = vector.shape_cast %263 : vector<1x1x16x32xf32> to vector<16x32xf32>
    %cst_130 = arith.constant dense<0.000000e+00> : vector<16x32xf32>
    %265 = tpu.matmul %262, %264, %cst_130 {dimension_numbers = #tpu.dot_dimension_numbers<[1], [0], [0], [1], [0, 0, 1, 1], [], []>} : vector<16x16xf32>, vector<16x32xf32>, vector<16x32xf32> -> vector<16x32xf32>
    %266 = arith.addf %261, %265 : vector<16x32xf32>
    %c3_131 = arith.constant 3 : index
    %c0_132 = arith.constant 0 : index
    %c0_133 = arith.constant 0 : index
    %267 = vector.load %arg6[%c3_131, %c0_132, %c0_133] : memref<7x1x32xf32, #tpu.memory_space<vmem>>, vector<1x1x32xf32>
    %268 = vector.shape_cast %267 : vector<1x1x32xf32> to vector<1x32xf32>
    %cst_134 = arith.constant dense<0.000000e+00> : vector<16xf32>
    %269 = vector.multi_reduction <add>, %266, %cst_134 [1] : vector<16x32xf32> to vector<16xf32>
    %270 = vector.shape_cast %269 : vector<16xf32> to vector<16x1xf32>
    %cst_135 = arith.constant 3.200000e+01 : f32
    %271 = vector.broadcast %cst_135 : f32 to vector<16x1xf32>
    %272 = arith.divf %270, %271 : vector<16x1xf32>
    %273 = vector.broadcast %272 : vector<16x1xf32> to vector<16x32xf32>
    %274 = arith.subf %266, %273 : vector<16x32xf32>
    %275 = arith.mulf %274, %274 : vector<16x32xf32>
    %cst_136 = arith.constant dense<0.000000e+00> : vector<16xf32>
    %276 = vector.multi_reduction <add>, %275, %cst_136 [1] : vector<16x32xf32> to vector<16xf32>
    %277 = vector.shape_cast %276 : vector<16xf32> to vector<16x1xf32>
    %cst_137 = arith.constant 3.200000e+01 : f32
    %278 = vector.broadcast %cst_137 : f32 to vector<16x1xf32>
    %279 = arith.divf %277, %278 : vector<16x1xf32>
    %280 = vector.broadcast %272 : vector<16x1xf32> to vector<16x32xf32>
    %281 = arith.subf %266, %280 : vector<16x32xf32>
    %cst_138 = arith.constant 9.99999974E-6 : f32
    %282 = vector.broadcast %cst_138 : f32 to vector<16x1xf32>
    %283 = arith.addf %279, %282 : vector<16x1xf32>
    %284 = math.rsqrt %283 : vector<16x1xf32>
    %285 = vector.broadcast %284 : vector<16x1xf32> to vector<16x32xf32>
    %286 = arith.mulf %281, %285 : vector<16x32xf32>
    %287 = vector.broadcast %268 : vector<1x32xf32> to vector<16x32xf32>
    %288 = arith.mulf %286, %287 : vector<16x32xf32>
    %289 = arith.addf %288, %166 : vector<16x32xf32>
    %c5 = arith.constant 5 : index
    %c0_139 = arith.constant 0 : index
    %c0_140 = arith.constant 0 : index
    %290 = vector.load %arg6[%c5, %c0_139, %c0_140] : memref<7x1x32xf32, #tpu.memory_space<vmem>>, vector<1x1x32xf32>
    %291 = vector.shape_cast %290 : vector<1x1x32xf32> to vector<1x32xf32>
    %cst_141 = arith.constant dense<0.000000e+00> : vector<16xf32>
    %292 = vector.multi_reduction <add>, %289, %cst_141 [1] : vector<16x32xf32> to vector<16xf32>
    %293 = vector.shape_cast %292 : vector<16xf32> to vector<16x1xf32>
    %cst_142 = arith.constant 3.200000e+01 : f32
    %294 = vector.broadcast %cst_142 : f32 to vector<16x1xf32>
    %295 = arith.divf %293, %294 : vector<16x1xf32>
    %296 = vector.broadcast %295 : vector<16x1xf32> to vector<16x32xf32>
    %297 = arith.subf %289, %296 : vector<16x32xf32>
    %298 = arith.mulf %297, %297 : vector<16x32xf32>
    %cst_143 = arith.constant dense<0.000000e+00> : vector<16xf32>
    %299 = vector.multi_reduction <add>, %298, %cst_143 [1] : vector<16x32xf32> to vector<16xf32>
    %300 = vector.shape_cast %299 : vector<16xf32> to vector<16x1xf32>
    %cst_144 = arith.constant 3.200000e+01 : f32
    %301 = vector.broadcast %cst_144 : f32 to vector<16x1xf32>
    %302 = arith.divf %300, %301 : vector<16x1xf32>
    %303 = vector.broadcast %295 : vector<16x1xf32> to vector<16x32xf32>
    %304 = arith.subf %289, %303 : vector<16x32xf32>
    %cst_145 = arith.constant 9.99999974E-6 : f32
    %305 = vector.broadcast %cst_145 : f32 to vector<16x1xf32>
    %306 = arith.addf %302, %305 : vector<16x1xf32>
    %307 = math.rsqrt %306 : vector<16x1xf32>
    %308 = vector.broadcast %307 : vector<16x1xf32> to vector<16x32xf32>
    %309 = arith.mulf %304, %308 : vector<16x32xf32>
    %310 = vector.broadcast %291 : vector<1x32xf32> to vector<16x32xf32>
    %311 = arith.mulf %309, %310 : vector<16x32xf32>
    %c1_146 = arith.constant 1 : index
    %c0_147 = arith.constant 0 : index
    %c0_148 = arith.constant 0 : index
    %312 = vector.load %arg4[%c1_146, %c0_147, %c0_148] : memref<2x32x256xf32, #tpu.memory_space<vmem>>, vector<1x32x256xf32>
    %313 = vector.shape_cast %312 : vector<1x32x256xf32> to vector<32x256xf32>
    %cst_149 = arith.constant dense<0.000000e+00> : vector<16x256xf32>
    %314 = tpu.matmul %311, %313, %cst_149 {dimension_numbers = #tpu.dot_dimension_numbers<[1], [0], [0], [1], [0, 0, 1, 1], [], []>} : vector<16x32xf32>, vector<32x256xf32>, vector<16x256xf32> -> vector<16x256xf32>
    %315 = vector.extract_strided_slice %314 {offsets = [0, 0], sizes = [16, 128], strides = [1, 1]} : vector<16x256xf32> to vector<16x128xf32>
    %316 = vector.extract_strided_slice %314 {offsets = [0, 128], sizes = [16, 128], strides = [1, 1]} : vector<16x256xf32> to vector<16x128xf32>
    %317 = arith.negf %316 : vector<16x128xf32>
    %318 = math.exp %317 : vector<16x128xf32>
    %cst_150 = arith.constant 1.000000e+00 : f32
    %319 = vector.broadcast %cst_150 : f32 to vector<16x128xf32>
    %320 = arith.addf %319, %318 : vector<16x128xf32>
    %321 = arith.divf %319, %320 : vector<16x128xf32>
    %322 = arith.mulf %316, %321 : vector<16x128xf32>
    %323 = arith.mulf %315, %322 : vector<16x128xf32>
    %c1_151 = arith.constant 1 : index
    %c0_152 = arith.constant 0 : index
    %c0_153 = arith.constant 0 : index
    %324 = vector.load %arg5[%c1_151, %c0_152, %c0_153] : memref<2x128x32xf32, #tpu.memory_space<vmem>>, vector<1x128x32xf32>
    %325 = vector.shape_cast %324 : vector<1x128x32xf32> to vector<128x32xf32>
    %cst_154 = arith.constant dense<0.000000e+00> : vector<16x32xf32>
    %326 = tpu.matmul %323, %325, %cst_154 {dimension_numbers = #tpu.dot_dimension_numbers<[1], [0], [0], [1], [0, 0, 1, 1], [], []>} : vector<16x128xf32>, vector<128x32xf32>, vector<16x32xf32> -> vector<16x32xf32>
    %327 = arith.addf %326, %289 : vector<16x32xf32>
    %cst_155 = arith.constant dense<0xFF800000> : vector<16xf32>
    %328 = vector.multi_reduction <maximumf>, %327, %cst_155 [1] : vector<16x32xf32> to vector<16xf32>
    %329 = vector.shape_cast %328 : vector<16xf32> to vector<16x1xf32>
    %330 = tpu.reciprocal %329 {approx = true} : vector<16x1xf32> -> vector<16x1xf32>
    %331 = vector.broadcast %330 : vector<16x1xf32> to vector<16x32xf32>
    %332 = arith.mulf %327, %331 : vector<16x32xf32>
    %c6 = arith.constant 6 : index
    %c0_156 = arith.constant 0 : index
    %c0_157 = arith.constant 0 : index
    %333 = vector.load %arg6[%c6, %c0_156, %c0_157] : memref<7x1x32xf32, #tpu.memory_space<vmem>>, vector<1x1x32xf32>
    %334 = vector.shape_cast %333 : vector<1x1x32xf32> to vector<1x32xf32>
    %cst_158 = arith.constant dense<0.000000e+00> : vector<16xf32>
    %335 = vector.multi_reduction <add>, %332, %cst_158 [1] : vector<16x32xf32> to vector<16xf32>
    %336 = vector.shape_cast %335 : vector<16xf32> to vector<16x1xf32>
    %cst_159 = arith.constant 3.200000e+01 : f32
    %337 = vector.broadcast %cst_159 : f32 to vector<16x1xf32>
    %338 = arith.divf %336, %337 : vector<16x1xf32>
    %339 = vector.broadcast %338 : vector<16x1xf32> to vector<16x32xf32>
    %340 = arith.subf %332, %339 : vector<16x32xf32>
    %341 = arith.mulf %340, %340 : vector<16x32xf32>
    %cst_160 = arith.constant dense<0.000000e+00> : vector<16xf32>
    %342 = vector.multi_reduction <add>, %341, %cst_160 [1] : vector<16x32xf32> to vector<16xf32>
    %343 = vector.shape_cast %342 : vector<16xf32> to vector<16x1xf32>
    %cst_161 = arith.constant 3.200000e+01 : f32
    %344 = vector.broadcast %cst_161 : f32 to vector<16x1xf32>
    %345 = arith.divf %343, %344 : vector<16x1xf32>
    %346 = vector.broadcast %338 : vector<16x1xf32> to vector<16x32xf32>
    %347 = arith.subf %332, %346 : vector<16x32xf32>
    %cst_162 = arith.constant 9.99999974E-6 : f32
    %348 = vector.broadcast %cst_162 : f32 to vector<16x1xf32>
    %349 = arith.addf %345, %348 : vector<16x1xf32>
    %350 = math.rsqrt %349 : vector<16x1xf32>
    %351 = vector.broadcast %350 : vector<16x1xf32> to vector<16x32xf32>
    %352 = arith.mulf %347, %351 : vector<16x32xf32>
    %353 = vector.broadcast %334 : vector<1x32xf32> to vector<16x32xf32>
    %354 = arith.mulf %352, %353 : vector<16x32xf32>
    %c0_163 = arith.constant 0 : index
    %c0_164 = arith.constant 0 : index
    %355 = vector.load %arg7[%c0_163, %c0_164] : memref<32x16xf32, #tpu.memory_space<vmem>>, vector<32x16xf32>
    %cst_165 = arith.constant dense<0.000000e+00> : vector<16x16xf32>
    %356 = tpu.matmul %354, %355, %cst_165 {dimension_numbers = #tpu.dot_dimension_numbers<[1], [0], [0], [1], [0, 0, 1, 1], [], []>} : vector<16x32xf32>, vector<32x16xf32>, vector<16x16xf32> -> vector<16x16xf32>
    %c0_166 = arith.constant 0 : index
    %c0_167 = arith.constant 0 : index
    %357 = vector.load %arg11[%c0_166, %c0_167] : memref<16x16xf32, #tpu.memory_space<vmem>>, vector<16x16xf32>
    tpu.vector_store %arg11[%c0_166, %c0_167], %356 {strides = array<i32>} : memref<16x16xf32, #tpu.memory_space<vmem>>, vector<16x16xf32>,
    return
  }
}

</mosaic_0001>

<llo_original>
// kernel: tpu_custom_call.1
$region0: #{tpu_custom_call.1}
  #allocation0 [shape = 'u32[]', space=smem, size = 0x4, offset = 0x4, fixed_abs, tag = 'smem constant byte address 0x4 - core index']
  #allocation1 [shape = 'u32[144,128]{1,0:T(1,128)}', space=vmem, size = 0x12000, scoped, tag = 'internal scratch']
  %s0 = inlined_call_operand.vmem [shape: f32[16,32], index: 0, kind: input, shape index: {}]
  %s1 = inlined_call_operand.vmem [shape: f32[2,32,64], index: 1, kind: input, shape index: {}]
  %s2 = inlined_call_operand.vmem [shape: f32[2,32,32], index: 2, kind: input, shape index: {}]
  %s3 = inlined_call_operand.vmem [shape: f32[2,4,16,32], index: 3, kind: input, shape index: {}]
  %s4 = inlined_call_operand.vmem [shape: f32[2,32,256], index: 4, kind: input, shape index: {}]
  %s5 = inlined_call_operand.vmem [shape: f32[2,128,32], index: 5, kind: input, shape index: {}]
  %s6 = inlined_call_operand.vmem [shape: f32[7,1,32], index: 6, kind: input, shape index: {}]
  %s7 = inlined_call_operand.vmem [shape: f32[32,16], index: 7, kind: input, shape index: {}]
  %s8 = inlined_call_operand.vmem [shape: f32[2,64,16], index: 8, kind: input, shape index: {}]
  %s9 = inlined_call_operand.vmem [shape: f32[16,16], index: 9, kind: input, shape index: {}]
  %s10 = inlined_call_operand.vmem [shape: f32[64,16], index: 10, kind: input, shape index: {}]
  %s11 = inlined_call_operand.hbm [shape: f32[16,16], index: 11, kind: output, shape index: {}]
  %s12 = sld [smem:[#allocation0]]
  $region54: #{tpu_custom_call.1} parent=0
    _
  %s14 = ssub.s32 1, %s12
  %s15 = scalar_select 0, %s14, %s12
  $region1: #{tpu_custom_call.1} parent=0
    #allocation2 [shape = 'u8[8192]{0}', space=vmem, size = 0x2000, scoped, tag = 'output window, operand 0, single buffered']
    #allocation3 [shape = 's32[1]{0}', space=sflag, size = 0x4, scoped, tag = 'scoped memory for tpu_custom_call.1']
    %16 = vsyncpa [#allocation3], 0
    // Predicated region
    $region2: #{tpu_custom_call.1} parent=1 // pred_check
      _
    $region3: #{tpu_custom_call.1} parent=1 // pred_check_branch
      %18 = sbr.rel (0) target = $region5
    $region4: #{tpu_custom_call.1} parent=1 // pred_region
      _
    $region5: #{tpu_custom_call.1} parent=1 // pred_fallthru
      _
    // Predicated region
    $region6: #{tpu_custom_call.1} parent=1 // pred_check
      _
    $region7: #{tpu_custom_call.1} parent=1 // pred_check_branch
      %20 = sbr.rel (0) target = $region9
    $region8: #{tpu_custom_call.1} parent=1 // pred_region
      _
    $region9: #{tpu_custom_call.1} parent=1 // pred_fallthru
      _
    // Predicated region
    $region10: #{tpu_custom_call.1} parent=1 // pred_check
      _
    $region11: #{tpu_custom_call.1} parent=1 // pred_check_branch
      %22 = sbr.rel (0) target = $region13
    $region12: #{tpu_custom_call.1} parent=1 // pred_region
      _
    $region13: #{tpu_custom_call.1} parent=1 // pred_fallthru
      _
    // Predicated region
    $region14: #{tpu_custom_call.1} parent=1 // pred_check
      _
    $region15: #{tpu_custom_call.1} parent=1 // pred_check_branch
      %24 = sbr.rel (0) target = $region17
    $region16: #{tpu_custom_call.1} parent=1 // pred_region
      _
    $region17: #{tpu_custom_call.1} parent=1 // pred_fallthru
      _
    // Predicated region
    $region18: #{tpu_custom_call.1} parent=1 // pred_check
      _
    $region19: #{tpu_custom_call.1} parent=1 // pred_check_branch
      %26 = sbr.rel (0) target = $region21
    $region20: #{tpu_custom_call.1} parent=1 // pred_region
      _
    $region21: #{tpu_custom_call.1} parent=1 // pred_fallthru
      _
    // Predicated region
    $region22: #{tpu_custom_call.1} parent=1 // pred_check
      _
    $region23: #{tpu_custom_call.1} parent=1 // pred_check_branch
      %28 = sbr.rel (0) target = $region25
    $region24: #{tpu_custom_call.1} parent=1 // pred_region
      _
    $region25: #{tpu_custom_call.1} parent=1 // pred_fallthru
      _
    // Predicated region
    $region26: #{tpu_custom_call.1} parent=1 // pred_check
      _
    $region27: #{tpu_custom_call.1} parent=1 // pred_check_branch
      %30 = sbr.rel (0) target = $region29
    $region28: #{tpu_custom_call.1} parent=1 // pred_region
      _
    $region29: #{tpu_custom_call.1} parent=1 // pred_fallthru
      _
    // Predicated region
    $region30: #{tpu_custom_call.1} parent=1 // pred_check
      _
    $region31: #{tpu_custom_call.1} parent=1 // pred_check_branch
      %32 = sbr.rel (0) target = $region33
    $region32: #{tpu_custom_call.1} parent=1 // pred_region
      _
    $region33: #{tpu_custom_call.1} parent=1 // pred_fallthru
      _
    // Predicated region
    $region34: #{tpu_custom_call.1} parent=1 // pred_check
      _
    $region35: #{tpu_custom_call.1} parent=1 // pred_check_branch
      %34 = sbr.rel (0) target = $region37
    $region36: #{tpu_custom_call.1} parent=1 // pred_region
      _
    $region37: #{tpu_custom_call.1} parent=1 // pred_fallthru
      _
    // Predicated region
    $region38: #{tpu_custom_call.1} parent=1 // pred_check
      _
    $region39: #{tpu_custom_call.1} parent=1 // pred_check_branch
      %36 = sbr.rel (0) target = $region41
    $region40: #{tpu_custom_call.1} parent=1 // pred_region
      _
    $region41: #{tpu_custom_call.1} parent=1 // pred_fallthru
      _
    // Predicated region
    $region42: #{tpu_custom_call.1} parent=1 // pred_check
      _
    $region43: #{tpu_custom_call.1} parent=1 // pred_check_branch
      %38 = sbr.rel (0) target = $region45
    $region44: #{tpu_custom_call.1} parent=1 // pred_region
      _
    $region45: #{tpu_custom_call.1} parent=1 // pred_fallthru
      _
    %v39 = vld [vmem:[%s0] sm:$0xff]
    %v40 = vld [vmem:[%s0 + $0x8] sm:$0xff]
    %v41 = vld [vmem:[%s9] sm:$0xff]
    %v42 = vld [vmem:[%s9 + $0x8] sm:$0xff]
    %v43 = vld [vmem:[%s8] sm:$0xff]
    %v44 = vld [vmem:[%s8 + $0x8] sm:$0xff]
    %v45 = vld [vmem:[%s8 + $0x10] sm:$0xff]
    %v46 = vld [vmem:[%s8 + $0x18] sm:$0xff]
    %v47 = vld [vmem:[%s8 + $0x20] sm:$0xff]
    %v48 = vld [vmem:[%s8 + $0x28] sm:$0xff]
    %v49 = vld [vmem:[%s8 + $0x30] sm:$0xff]
    %v50 = vld [vmem:[%s8 + $0x38] sm:$0xff]
    %s51 = scalar_lea.vmem %s8, 64
    %v52 = vld [vmem:[%s51] sm:$0xff]
    %v53 = vld [vmem:[%s51 + $0x8] sm:$0xff]
    %v54 = vld [vmem:[%s51 + $0x10] sm:$0xff]
    %v55 = vld [vmem:[%s51 + $0x18] sm:$0xff]
    %v56 = vld [vmem:[%s51 + $0x20] sm:$0xff]
    %v57 = vld [vmem:[%s51 + $0x28] sm:$0xff]
    %v58 = vld [vmem:[%s51 + $0x30] sm:$0xff]
    %v59 = vld [vmem:[%s51 + $0x38] sm:$0xff]
    %v60 = vld [vmem:[%s6] sm:$0x1]
    %vm61 = vcmask 261120
    %v62 = vsel %vm61, %v39, 0.0
    %63 = vadd.xlane.f32.xlu0 %v62
    %v64 = vpop.xlane.xlu0 %63
    %v65 = vsel %vm61, %v40, 0.0
    %66 = vadd.xlane.f32.xlu0 %v65
    %v67 = vpop.xlane.xlu0 %66
    %v68 = vrcp.pop 32.0
    %v69 = vmul.f32 %v64, %v68
    %v70 = vmul.f32 %v67, %v68
    %v71 = vsub.f32 %v39, %v69
    %v72 = vsub.f32 %v40, %v70
    %v73 = vmul.f32 %v71, %v71
    %v74 = vmul.f32 %v72, %v72
    %v75 = vsel %vm61, %v73, 0.0
    %76 = vadd.xlane.f32.xlu0 %v75
    %v77 = vpop.xlane.xlu0 %76
    %v78 = vsel %vm61, %v74, 0.0
    %79 = vadd.xlane.f32.xlu0 %v78
    %v80 = vpop.xlane.xlu0 %79
    %v81 = vmul.f32 %v77, %v68
    %v82 = vmul.f32 %v80, %v68
    %v83 = vadd.f32 %v81, 1e-05
    %v84 = vadd.f32 %v82, 1e-05
    %v85 = vrsqrt.pop %v83
    %v86 = vrsqrt.pop %v84
    %v87 = vmul.f32 %v71, %v85
    %v88 = vmul.f32 %v72, %v86
    %v90 = vlaneseq
    %v91 = vshrl.u32 %v90, 7
    %v92 = vsub.s32 0, %v91
    %v93 = vrot.slane %v60, %v92
    %v95 = vmul.f32 %v87, %v93
    %v96 = vmul.f32 %v88, %v93
    %v97 = vld [vmem:[%s2] sm:$0xff]
    %v98 = vld [vmem:[%s2 + $0x8] sm:$0xff]
    %v99 = vld [vmem:[%s2 + $0x10] sm:$0xff]
    %v100 = vld [vmem:[%s2 + $0x18] sm:$0xff]
    %v102 = vsel %vm61, %v95, 0
    %v105 = vsel %vm61, %v96, 0
    %107 = vmatprep.subr.mxu0 0.0
    %108 = vmatpush1.msra.mxu0 %v97
    %109 = vmatprep.subr.mxu0 0.0
    %110 = vmatpush1.msra.mxu0 %v98
    %111 = vmatprep.subr.mxu0 0.0
    %112 = vmatpush1.msra.mxu0 %v99
    %113 = vmatprep.subr.mxu0 0.0
    %114 = vmatpush1.msra.mxu0 %v100
    %115 = vmatprep.subr.mxu0 0.0
    %116 = vmatpush1.msra.mxu0 0.0
    %117 = vmatprep.subr.mxu0 0.0
    %118 = vmatpush1.msra.mxu0 0.0
    %119 = vmatprep.subr.mxu0 0.0
    %120 = vmatpush1.msra.mxu0 0.0
    %121 = vmatprep.subr.mxu0 0.0
    %122 = vmatpush1.msra.mxu0 0.0
    %123 = vmatprep.subr.mxu0 0.0
    %124 = vmatpush1.msra.mxu0 0.0
    %125 = vmatprep.subr.mxu0 0.0
    %126 = vmatpush1.msra.mxu0 0.0
    %127 = vmatprep.subr.mxu0 0.0
    %128 = vmatpush1.msra.mxu0 0.0
    %129 = vmatprep.subr.mxu0 0.0
    %130 = vmatpush1.msra.mxu0 0.0
    %131 = vmatprep.subr.mxu0 0.0
    %132 = vmatpush1.msra.mxu0 0.0
    %133 = vmatprep.subr.mxu0 0.0
    %134 = vmatpush1.msra.mxu0 0.0
    %135 = vmatprep.subr.mxu0 0.0
    %136 = vmatpush1.msra.mxu0 0.0
    %137 = vmatprep.subr.mxu0 0.0
    %138 = vmatpush1.msra.mxu0 0.0
    %139 = vmatprep.subr.mxu0 0.0
    %140 = vmatpush1.msra.mxu0 0.0
    %141 = vmatprep.subr.mxu0 0.0
    %142 = vmatpush1.msra.mxu0 0.0
    %143 = vmatprep.subr.mxu0 0.0
    %144 = vmatpush1.msra.mxu0 0.0
    %145 = vmatprep.subr.mxu0 0.0
    %146 = vmatpush1.msra.mxu0 0.0
    %147 = vmatprep.subr.mxu0 0.0
    %148 = vmatpush1.msra.mxu0 0.0
    %149 = vmatprep.subr.mxu0 0.0
    %150 = vmatpush1.msra.mxu0 0.0
    %151 = vmatprep.subr.mxu0 0.0
    %152 = vmatpush1.msra.mxu0 0.0
    %153 = vmatprep.subr.mxu0 0.0
    %154 = vmatpush1.msra.mxu0 0.0
    %155 = vmatprep.subr.mxu0 0.0
    %156 = vmatpush1.msra.mxu0 0.0
    %157 = vmatprep.subr.mxu0 0.0
    %158 = vmatpush1.msra.mxu0 0.0
    %159 = vmatprep.subr.mxu0 0.0
    %160 = vmatpush1.msra.mxu0 0.0
    %161 = vmatprep.subr.mxu0 0.0
    %162 = vmatpush1.msra.mxu0 0.0
    %163 = vmatprep.subr.mxu0 0.0
    %164 = vmatpush1.msra.mxu0 0.0
    %165 = vmatprep.subr.mxu0 0.0
    %166 = vmatpush1.msra.mxu0 0.0
    %167 = vmatprep.subr.mxu0 0.0
    %168 = vmatpush1.msra.mxu0 0.0
    %169 = vmatprep.subr.mxu0 0.0
    %170 = vmatpush1.msra.mxu0 0.0
    %171 = vmatprep.mubr.f32.mxu0 0.0
    %172 = vmatmul.mubr.f32.gmra.mrb[0].mxu0 %v102
    %v173 = vpop.f32.mrb[0].mxu0
    %v174 = vadd.f32 0.0, %v173
    %v175 = vpop.f32.mrb[0].mxu0
    %176 = vmatprep.mubr.f32.mxu0 0.0
    %177 = vmatmul.mubr.f32.gmra.mrb[0].mxu0 %v105
    %v178 = vpop.f32.mrb[0].mxu0
    %v179 = vadd.f32 0.0, %v178
    %v180 = vpop.f32.mrb[0].mxu0
    %181 = vdwg.mxu0
    %v182 = vmul.f32 %v174, %v43
    %v183 = vmul.f32 %v179, %v44
    %vm184 = vcmask 130048
    %v186 = vsel %vm184, %v174, 0
    %v189 = vsel %vm184, %v179, 0
    %191 = vmatprep.subr.mxu0 0.0
    %192 = vmatpush1.msra.mxu0 %v41
    %193 = vmatprep.subr.mxu0 0.0
    %194 = vmatpush1.msra.mxu0 %v42
    %195 = vmatprep.subr.mxu0 0.0
    %196 = vmatpush1.msra.mxu0 0.0
    %197 = vmatprep.subr.mxu0 0.0
    %198 = vmatpush1.msra.mxu0 0.0
    %199 = vmatprep.subr.mxu0 0.0
    %200 = vmatpush1.msra.mxu0 0.0
    %201 = vmatprep.subr.mxu0 0.0
    %202 = vmatpush1.msra.mxu0 0.0
    %203 = vmatprep.subr.mxu0 0.0
    %204 = vmatpush1.msra.mxu0 0.0
    %205 = vmatprep.subr.mxu0 0.0
    %206 = vmatpush1.msra.mxu0 0.0
    %207 = vmatprep.subr.mxu0 0.0
    %208 = vmatpush1.msra.mxu0 0.0
    %209 = vmatprep.subr.mxu0 0.0
    %210 = vmatpush1.msra.mxu0 0.0
    %211 = vmatprep.subr.mxu0 0.0
    %212 = vmatpush1.msra.mxu0 0.0
    %213 = vmatprep.subr.mxu0 0.0
    %214 = vmatpush1.msra.mxu0 0.0
    %215 = vmatprep.subr.mxu0 0.0
    %216 = vmatpush1.msra.mxu0 0.0
    %217 = vmatprep.subr.mxu0 0.0
    %218 = vmatpush1.msra.mxu0 0.0
    %219 = vmatprep.subr.mxu0 0.0
    %220 = vmatpush1.msra.mxu0 0.0
    %221 = vmatprep.subr.mxu0 0.0
    %222 = vmatpush1.msra.mxu0 0.0
    %223 = vmatprep.subr.mxu0 0.0
    %224 = vmatpush1.msra.mxu0 0.0
    %225 = vmatprep.subr.mxu0 0.0
    %226 = vmatpush1.msra.mxu0 0.0
    %227 = vmatprep.subr.mxu0 0.0
    %228 = vmatpush1.msra.mxu0 0.0
    %229 = vmatprep.subr.mxu0 0.0
    %230 = vmatpush1.msra.mxu0 0.0
    %231 = vmatprep.subr.mxu0 0.0
    %232 = vmatpush1.msra.mxu0 0.0
    %233 = vmatprep.subr.mxu0 0.0
    %234 = vmatpush1.msra.mxu0 0.0
    %235 = vmatprep.subr.mxu0 0.0
    %236 = vmatpush1.msra.mxu0 0.0
    %237 = vmatprep.subr.mxu0 0.0
    %238 = vmatpush1.msra.mxu0 0.0
    %239 = vmatprep.subr.mxu0 0.0
    %240 = vmatpush1.msra.mxu0 0.0
    %241 = vmatprep.subr.mxu0 0.0
    %242 = vmatpush1.msra.mxu0 0.0
    %243 = vmatprep.subr.mxu0 0.0
    %244 = vmatpush1.msra.mxu0 0.0
    %245 = vmatprep.subr.mxu0 0.0
    %246 = vmatpush1.msra.mxu0 0.0
    %247 = vmatprep.subr.mxu0 0.0
    %248 = vmatpush1.msra.mxu0 0.0
    %249 = vmatprep.subr.mxu0 0.0
    %250 = vmatpush1.msra.mxu0 0.0
    %251 = vmatprep.subr.mxu0 0.0
    %252 = vmatpush1.msra.mxu0 0.0
    %253 = vmatprep.subr.mxu0 0.0
    %254 = vmatpush1.msra.mxu0 0.0
    %255 = vmatprep.mubr.f32.mxu0 0.0
    %256 = vmatmul.mubr.f32.gmra.mrb[0].mxu0 %v186
    %v257 = vpop.f32.mrb[0].mxu0
    %v258 = vadd.f32 0.0, %v257
    %v259 = vpop.f32.mrb[0].mxu0
    %260 = vmatprep.mubr.f32.mxu0 0.0
    %261 = vmatmul.mubr.f32.gmra.mrb[0].mxu0 %v189
    %v262 = vpop.f32.mrb[0].mxu0
    %v263 = vadd.f32 0.0, %v262
    %v264 = vpop.f32.mrb[0].mxu0
    %265 = vdwg.mxu0
    %v266 = vmul.f32 %v258, %v52
    %v267 = vmul.f32 %v263, %v53
    %v268 = vadd.f32 %v182, %v266
    %v269 = vadd.f32 %v183, %v267
    %v270 = vmul.f32 %v268, %v268
    %v271 = vmul.f32 %v269, %v269
    %v272 = vsel %vm184, %v270, 0.0
    %273 = vadd.xlane.f32.xlu0 %v272
    %v274 = vpop.xlane.xlu0 %273
    %v275 = vsel %vm184, %v271, 0.0
    %276 = vadd.xlane.f32.xlu0 %v275
    %v277 = vpop.xlane.xlu0 %276
    %v278 = vmax.f32 %v274, 1e-24
    %v279 = vmax.f32 %v277, 1e-24
    %v280 = vrsqrt.pop %v278
    %v281 = vrsqrt.pop %v279
    %v282 = vmul.f32 %v268, %v280
    %v283 = vmul.f32 %v269, %v281
    %v284 = vld [vmem:[%s1] sm:$0xff]
    %v285 = vld [vmem:[%s1 + $0x8] sm:$0xff]
    %v286 = vld [vmem:[%s1 + $0x10] sm:$0xff]
    %v287 = vld [vmem:[%s1 + $0x18] sm:$0xff]
    %288 = vmatprep.subr.mxu0 0.0
    %289 = vmatpush1.msra.mxu0 %v284
    %290 = vmatprep.subr.mxu0 0.0
    %291 = vmatpush1.msra.mxu0 %v285
    %292 = vmatprep.subr.mxu0 0.0
    %293 = vmatpush1.msra.mxu0 %v286
    %294 = vmatprep.subr.mxu0 0.0
    %295 = vmatpush1.msra.mxu0 %v287
    %296 = vmatprep.subr.mxu0 0.0
    %297 = vmatpush1.msra.mxu0 0.0
    %298 = vmatprep.subr.mxu0 0.0
    %299 = vmatpush1.msra.mxu0 0.0
    %300 = vmatprep.subr.mxu0 0.0
    %301 = vmatpush1.msra.mxu0 0.0
    %302 = vmatprep.subr.mxu0 0.0
    %303 = vmatpush1.msra.mxu0 0.0
    %304 = vmatprep.subr.mxu0 0.0
    %305 = vmatpush1.msra.mxu0 0.0
    %306 = vmatprep.subr.mxu0 0.0
    %307 = vmatpush1.msra.mxu0 0.0
    %308 = vmatprep.subr.mxu0 0.0
    %309 = vmatpush1.msra.mxu0 0.0
    %310 = vmatprep.subr.mxu0 0.0
    %311 = vmatpush1.msra.mxu0 0.0
    %312 = vmatprep.subr.mxu0 0.0
    %313 = vmatpush1.msra.mxu0 0.0
    %314 = vmatprep.subr.mxu0 0.0
    %315 = vmatpush1.msra.mxu0 0.0
    %316 = vmatprep.subr.mxu0 0.0
    %317 = vmatpush1.msra.mxu0 0.0
    %318 = vmatprep.subr.mxu0 0.0
    %319 = vmatpush1.msra.mxu0 0.0
    %320 = vmatprep.subr.mxu0 0.0
    %321 = vmatpush1.msra.mxu0 0.0
    %322 = vmatprep.subr.mxu0 0.0
    %323 = vmatpush1.msra.mxu0 0.0
    %324 = vmatprep.subr.mxu0 0.0
    %325 = vmatpush1.msra.mxu0 0.0
    %326 = vmatprep.subr.mxu0 0.0
    %327 = vmatpush1.msra.mxu0 0.0
    %328 = vmatprep.subr.mxu0 0.0
    %329 = vmatpush1.msra.mxu0 0.0
    %330 = vmatprep.subr.mxu0 0.0
    %331 = vmatpush1.msra.mxu0 0.0
    %332 = vmatprep.subr.mxu0 0.0
    %333 = vmatpush1.msra.mxu0 0.0
    %334 = vmatprep.subr.mxu0 0.0
    %335 = vmatpush1.msra.mxu0 0.0
    %336 = vmatprep.subr.mxu0 0.0
    %337 = vmatpush1.msra.mxu0 0.0
    %338 = vmatprep.subr.mxu0 0.0
    %339 = vmatpush1.msra.mxu0 0.0
    %340 = vmatprep.subr.mxu0 0.0
    %341 = vmatpush1.msra.mxu0 0.0
    %342 = vmatprep.subr.mxu0 0.0
    %343 = vmatpush1.msra.mxu0 0.0
    %344 = vmatprep.subr.mxu0 0.0
    %345 = vmatpush1.msra.mxu0 0.0
    %346 = vmatprep.subr.mxu0 0.0
    %347 = vmatpush1.msra.mxu0 0.0
    %348 = vmatprep.subr.mxu0 0.0
    %349 = vmatpush1.msra.mxu0 0.0
    %350 = vmatprep.subr.mxu0 0.0
    %351 = vmatpush1.msra.mxu0 0.0
    %352 = vmatprep.mubr.f32.mxu0 0.0
    %353 = vmatmul.mubr.f32.gmra.mrb[0].mxu0 %v102
    %v354 = vpop.f32.mrb[0].mxu0
    %v355 = vadd.f32 0.0, %v354
    %v356 = vpop.f32.mrb[0].mxu0
    %357 = vmatprep.mubr.f32.mxu0 0.0
    %358 = vmatmul.mubr.f32.gmra.mrb[0].mxu0 %v105
    %v359 = vpop.f32.mrb[0].mxu0
    %v360 = vadd.f32 0.0, %v359
    %v361 = vpop.f32.mrb[0].mxu0
    %362 = vdwg.mxu0
    %365 = vrot.lane.b32.xlu0 %v355, 112
    %v366 = vpop.permute.xlu0 %365
    %367 = vrot.lane.b32.xlu0 %v360, 112
    %v368 = vpop.permute.xlu0 %367
    %371 = vrot.lane.b32.xlu0 %v355, 96
    %v372 = vpop.permute.xlu0 %371
    %373 = vrot.lane.b32.xlu0 %v360, 96
    %v374 = vpop.permute.xlu0 %373
    %377 = vrot.lane.b32.xlu0 %v355, 80
    %v378 = vpop.permute.xlu0 %377
    %379 = vrot.lane.b32.xlu0 %v360, 80
    %v380 = vpop.permute.xlu0 %379
    %v383 = vmul.f32 %v355, %v43
    %v384 = vmul.f32 %v360, %v44
    %v385 = vmul.f32 %v366, %v45
    %v386 = vmul.f32 %v368, %v46
    %v387 = vmul.f32 %v372, %v47
    %v388 = vmul.f32 %v374, %v48
    %v389 = vmul.f32 %v378, %v49
    %v390 = vmul.f32 %v380, %v50
    %v391 = vsel %vm184, %v355, 0
    %v393 = vsel %vm184, %v360, 0
    %v395 = vsel %vm184, %v366, 0
    %v397 = vsel %vm184, %v368, 0
    %v399 = vsel %vm184, %v372, 0
    %v401 = vsel %vm184, %v374, 0
    %v403 = vsel %vm184, %v378, 0
    %v405 = vsel %vm184, %v380, 0
    %407 = vmatprep.subr.mxu0 0.0
    %408 = vmatpush1.msra.mxu0 %v41
    %409 = vmatprep.subr.mxu0 0.0
    %410 = vmatpush1.msra.mxu0 %v42
    %411 = vmatprep.subr.mxu0 0.0
    %412 = vmatpush1.msra.mxu0 0.0
    %413 = vmatprep.subr.mxu0 0.0
    %414 = vmatpush1.msra.mxu0 0.0
    %415 = vmatprep.subr.mxu0 0.0
    %416 = vmatpush1.msra.mxu0 0.0
    %417 = vmatprep.subr.mxu0 0.0
    %418 = vmatpush1.msra.mxu0 0.0
    %419 = vmatprep.subr.mxu0 0.0
    %420 = vmatpush1.msra.mxu0 0.0
    %421 = vmatprep.subr.mxu0 0.0
    %422 = vmatpush1.msra.mxu0 0.0
    %423 = vmatprep.subr.mxu0 0.0
    %424 = vmatpush1.msra.mxu0 0.0
    %425 = vmatprep.subr.mxu0 0.0
    %426 = vmatpush1.msra.mxu0 0.0
    %427 = vmatprep.subr.mxu0 0.0
    %428 = vmatpush1.msra.mxu0 0.0
    %429 = vmatprep.subr.mxu0 0.0
    %430 = vmatpush1.msra.mxu0 0.0
    %431 = vmatprep.subr.mxu0 0.0
    %432 = vmatpush1.msra.mxu0 0.0
    %433 = vmatprep.subr.mxu0 0.0
    %434 = vmatpush1.msra.mxu0 0.0
    %435 = vmatprep.subr.mxu0 0.0
    %436 = vmatpush1.msra.mxu0 0.0
    %437 = vmatprep.subr.mxu0 0.0
    %438 = vmatpush1.msra.mxu0 0.0
    %439 = vmatprep.subr.mxu0 0.0
    %440 = vmatpush1.msra.mxu0 0.0
    %441 = vmatprep.subr.mxu0 0.0
    %442 = vmatpush1.msra.mxu0 0.0
    %443 = vmatprep.subr.mxu0 0.0
    %444 = vmatpush1.msra.mxu0 0.0
    %445 = vmatprep.subr.mxu0 0.0
    %446 = vmatpush1.msra.mxu0 0.0
    %447 = vmatprep.subr.mxu0 0.0
    %448 = vmatpush1.msra.mxu0 0.0
    %449 = vmatprep.subr.mxu0 0.0
    %450 = vmatpush1.msra.mxu0 0.0
    %451 = vmatprep.subr.mxu0 0.0
    %452 = vmatpush1.msra.mxu0 0.0
    %453 = vmatprep.subr.mxu0 0.0
    %454 = vmatpush1.msra.mxu0 0.0
    %455 = vmatprep.subr.mxu0 0.0
    %456 = vmatpush1.msra.mxu0 0.0
    %457 = vmatprep.subr.mxu0 0.0
    %458 = vmatpush1.msra.mxu0 0.0
    %459 = vmatprep.subr.mxu0 0.0
    %460 = vmatpush1.msra.mxu0 0.0
    %461 = vmatprep.subr.mxu0 0.0
    %462 = vmatpush1.msra.mxu0 0.0
    %463 = vmatprep.subr.mxu0 0.0
    %464 = vmatpush1.msra.mxu0 0.0
    %465 = vmatprep.subr.mxu0 0.0
    %466 = vmatpush1.msra.mxu0 0.0
    %467 = vmatprep.subr.mxu0 0.0
    %468 = vmatpush1.msra.mxu0 0.0
    %469 = vmatprep.subr.mxu0 0.0
    %470 = vmatpush1.msra.mxu0 0.0
    %471 = vmatprep.mubr.f32.mxu0 0.0
    %472 = vmatmul.mubr.f32.gmra.mrb[0].mxu0 %v391
    %v473 = vpop.f32.mrb[0].mxu0
    %v474 = vadd.f32 0.0, %v473
    %v475 = vpop.f32.mrb[0].mxu0
    %476 = vmatprep.mubr.f32.mxu0 0.0
    %477 = vmatmul.mubr.f32.gmra.mrb[0].mxu0 %v393
    %v478 = vpop.f32.mrb[0].mxu0
    %v479 = vadd.f32 0.0, %v478
    %v480 = vpop.f32.mrb[0].mxu0
    %481 = vmatprep.mubr.f32.mxu0 0.0
    %482 = vmatmul.mubr.f32.gmra.mrb[0].mxu0 %v395
    %v483 = vpop.f32.mrb[0].mxu0
    %v484 = vadd.f32 0.0, %v483
    %v485 = vpop.f32.mrb[0].mxu0
    %486 = vmatprep.mubr.f32.mxu0 0.0
    %487 = vmatmul.mubr.f32.gmra.mrb[0].mxu0 %v397
    %v488 = vpop.f32.mrb[0].mxu0
    %v489 = vadd.f32 0.0, %v488
    %v490 = vpop.f32.mrb[0].mxu0
    %491 = vmatprep.mubr.f32.mxu0 0.0
    %492 = vmatmul.mubr.f32.gmra.mrb[0].mxu0 %v399
    %v493 = vpop.f32.mrb[0].mxu0
    %v494 = vadd.f32 0.0, %v493
    %v495 = vpop.f32.mrb[0].mxu0
    %496 = vmatprep.mubr.f32.mxu0 0.0
    %497 = vmatmul.mubr.f32.gmra.mrb[0].mxu0 %v401
    %v498 = vpop.f32.mrb[0].mxu0
    %v499 = vadd.f32 0.0, %v498
    %v500 = vpop.f32.mrb[0].mxu0
    %501 = vmatprep.mubr.f32.mxu0 0.0
    %502 = vmatmul.mubr.f32.gmra.mrb[0].mxu0 %v403
    %v503 = vpop.f32.mrb[0].mxu0
    %v504 = vadd.f32 0.0, %v503
    %v505 = vpop.f32.mrb[0].mxu0
    %506 = vmatprep.mubr.f32.mxu0 0.0
    %507 = vmatmul.mubr.f32.gmra.mrb[0].mxu0 %v405
    %v508 = vpop.f32.mrb[0].mxu0
    %v509 = vadd.f32 0.0, %v508
    %v510 = vpop.f32.mrb[0].mxu0
    %511 = vdwg.mxu0
    %v512 = vmul.f32 %v474, %v52
    %v513 = vmul.f32 %v479, %v53
    %v514 = vmul.f32 %v484, %v54
    %v515 = vmul.f32 %v489, %v55
    %v516 = vmul.f32 %v494, %v56
    %v517 = vmul.f32 %v499, %v57
    %v518 = vmul.f32 %v504, %v58
    %v519 = vmul.f32 %v509, %v59
    %v520 = vadd.f32 %v383, %v512
    %v521 = vadd.f32 %v384, %v513
    %v522 = vadd.f32 %v385, %v514
    %v523 = vadd.f32 %v386, %v515
    %v524 = vadd.f32 %v387, %v516
    %v525 = vadd.f32 %v388, %v517
    %v526 = vadd.f32 %v389, %v518
    %v527 = vadd.f32 %v390, %v519
    %v528 = vmul.f32 %v520, %v520
    %v529 = vmul.f32 %v521, %v521
    %v530 = vmul.f32 %v522, %v522
    %v531 = vmul.f32 %v523, %v523
    %v532 = vmul.f32 %v524, %v524
    %v533 = vmul.f32 %v525, %v525
    %v534 = vmul.f32 %v526, %v526
    %v535 = vmul.f32 %v527, %v527
    %v536 = vsel %vm184, %v528, 0.0
    %537 = vadd.xlane.f32.xlu0 %v536
    %v538 = vpop.xlane.xlu0 %537
    %v539 = vsel %vm184, %v529, 0.0
    %540 = vadd.xlane.f32.xlu0 %v539
    %v541 = vpop.xlane.xlu0 %540
    %v542 = vsel %vm184, %v530, 0.0
    %543 = vadd.xlane.f32.xlu0 %v542
    %v544 = vpop.xlane.xlu0 %543
    %v545 = vsel %vm184, %v531, 0.0
    %546 = vadd.xlane.f32.xlu0 %v545
    %v547 = vpop.xlane.xlu0 %546
    %v548 = vsel %vm184, %v532, 0.0
    %549 = vadd.xlane.f32.xlu0 %v548
    %v550 = vpop.xlane.xlu0 %549
    %v551 = vsel %vm184, %v533, 0.0
    %552 = vadd.xlane.f32.xlu0 %v551
    %v553 = vpop.xlane.xlu0 %552
    %v554 = vsel %vm184, %v534, 0.0
    %555 = vadd.xlane.f32.xlu0 %v554
    %v556 = vpop.xlane.xlu0 %555
    %v557 = vsel %vm184, %v535, 0.0
    %558 = vadd.xlane.f32.xlu0 %v557
    %v559 = vpop.xlane.xlu0 %558
    %v560 = vmax.f32 %v538, 1e-24
    %v561 = vmax.f32 %v541, 1e-24
    %v562 = vmax.f32 %v544, 1e-24
    %v563 = vmax.f32 %v547, 1e-24
    %v564 = vmax.f32 %v550, 1e-24
    %v565 = vmax.f32 %v553, 1e-24
    %v566 = vmax.f32 %v556, 1e-24
    %v567 = vmax.f32 %v559, 1e-24
    %v568 = vrsqrt.pop %v560
    %v569 = vrsqrt.pop %v561
    %v570 = vrsqrt.pop %v562
    %v571 = vrsqrt.pop %v563
    %v572 = vrsqrt.pop %v564
    %v573 = vrsqrt.pop %v565
    %v574 = vrsqrt.pop %v566
    %v575 = vrsqrt.pop %v567
    %v576 = vmul.f32 %v568, 16.0
    %v577 = vmul.f32 %v569, 16.0
    %v578 = vmul.f32 %v570, 16.0
    %v579 = vmul.f32 %v571, 16.0
    %v580 = vmul.f32 %v572, 16.0
    %v581 = vmul.f32 %v573, 16.0
    %v582 = vmul.f32 %v574, 16.0
    %v583 = vmul.f32 %v575, 16.0
    %v584 = vmul.f32 %v520, %v576
    %v585 = vmul.f32 %v521, %v577
    %v586 = vmul.f32 %v522, %v578
    %v587 = vmul.f32 %v523, %v579
    %v588 = vmul.f32 %v524, %v580
    %v589 = vmul.f32 %v525, %v581
    %v590 = vmul.f32 %v526, %v582
    %v591 = vmul.f32 %v527, %v583
    %v592 = vld [vmem:[%s10] sm:$0xff]
    %v593 = vld [vmem:[%s10 + $0x8] sm:$0xff]
    %v594 = vld [vmem:[%s10 + $0x10] sm:$0xff]
    %v595 = vld [vmem:[%s10 + $0x18] sm:$0xff]
    %v596 = vld [vmem:[%s10 + $0x20] sm:$0xff]
    %v597 = vld [vmem:[%s10 + $0x28] sm:$0xff]
    %v598 = vld [vmem:[%s10 + $0x30] sm:$0xff]
    %v599 = vld [vmem:[%s10 + $0x38] sm:$0xff]
    %v601 = vsel %vm184, %v584, 0
    %v604 = vsel %vm184, %v585, 0
    %v607 = vsel %vm184, %v586, 0
    %v610 = vsel %vm184, %v587, 0
    %v613 = vsel %vm184, %v588, 0
    %v616 = vsel %vm184, %v589, 0
    %v619 = vsel %vm184, %v590, 0
    %v622 = vsel %vm184, %v591, 0
    %v625 = vsel %vm184, %v282, 0
    %v628 = vsel %vm184, %v283, 0
    %630 = vmatprep.subr.mxu0 0.0
    %631 = vmatpush1.xpose.msra.mxu0 %v625
    %632 = vmatprep.subr.mxu0 0.0
    %633 = vmatpush1.xpose.msra.mxu0 %v628
    %634 = vmatprep.subr.mxu0 0.0
    %635 = vmatpush1.xpose.msra.mxu0 0.0
    %636 = vmatprep.subr.mxu0 0.0
    %637 = vmatpush1.xpose.msra.mxu0 0.0
    %638 = vmatprep.subr.mxu0 0.0
    %639 = vmatpush1.xpose.msra.mxu0 0.0
    %640 = vmatprep.subr.mxu0 0.0
    %641 = vmatpush1.xpose.msra.mxu0 0.0
    %642 = vmatprep.subr.mxu0 0.0
    %643 = vmatpush1.xpose.msra.mxu0 0.0
    %644 = vmatprep.subr.mxu0 0.0
    %645 = vmatpush1.xpose.msra.mxu0 0.0
    %646 = vmatprep.subr.mxu0 0.0
    %647 = vmatpush1.xpose.msra.mxu0 0.0
    %648 = vmatprep.subr.mxu0 0.0
    %649 = vmatpush1.xpose.msra.mxu0 0.0
    %650 = vmatprep.subr.mxu0 0.0
    %651 = vmatpush1.xpose.msra.mxu0 0.0
    %652 = vmatprep.subr.mxu0 0.0
    %653 = vmatpush1.xpose.msra.mxu0 0.0
    %654 = vmatprep.subr.mxu0 0.0
    %655 = vmatpush1.xpose.msra.mxu0 0.0
    %656 = vmatprep.subr.mxu0 0.0
    %657 = vmatpush1.xpose.msra.mxu0 0.0
    %658 = vmatprep.subr.mxu0 0.0
    %659 = vmatpush1.xpose.msra.mxu0 0.0
    %660 = vmatprep.subr.mxu0 0.0
    %661 = vmatpush1.xpose.msra.mxu0 0.0
    %662 = vmatprep.subr.mxu0 0.0
    %663 = vmatpush1.xpose.msra.mxu0 0.0
    %664 = vmatprep.subr.mxu0 0.0
    %665 = vmatpush1.xpose.msra.mxu0 0.0
    %666 = vmatprep.subr.mxu0 0.0
    %667 = vmatpush1.xpose.msra.mxu0 0.0
    %668 = vmatprep.subr.mxu0 0.0
    %669 = vmatpush1.xpose.msra.mxu0 0.0
    %670 = vmatprep.subr.mxu0 0.0
    %671 = vmatpush1.xpose.msra.mxu0 0.0
    %672 = vmatprep.subr.mxu0 0.0
    %673 = vmatpush1.xpose.msra.mxu0 0.0
    %674 = vmatprep.subr.mxu0 0.0
    %675 = vmatpush1.xpose.msra.mxu0 0.0
    %676 = vmatprep.subr.mxu0 0.0
    %677 = vmatpush1.xpose.msra.mxu0 0.0
    %678 = vmatprep.subr.mxu0 0.0
    %679 = vmatpush1.xpose.msra.mxu0 0.0
    %680 = vmatprep.subr.mxu0 0.0
    %681 = vmatpush1.xpose.msra.mxu0 0.0
    %682 = vmatprep.subr.mxu0 0.0
    %683 = vmatpush1.xpose.msra.mxu0 0.0
    %684 = vmatprep.subr.mxu0 0.0
    %685 = vmatpush1.xpose.msra.mxu0 0.0
    %686 = vmatprep.subr.mxu0 0.0
    %687 = vmatpush1.xpose.msra.mxu0 0.0
    %688 = vmatprep.subr.mxu0 0.0
    %689 = vmatpush1.xpose.msra.mxu0 0.0
    %690 = vmatprep.subr.mxu0 0.0
    %691 = vmatpush1.xpose.msra.mxu0 0.0
    %692 = vmatprep.subr.mxu0 0.0
    %693 = vmatpush1.xpose.msra.mxu0 0.0
    %694 = vmatprep.mubr.f32.mxu0 0.0
    %695 = vmatmul.mubr.f32.gmra.mrb[0].mxu0 %v601
    %v696 = vpop.f32.mrb[0].mxu0
    %v697 = vadd.f32 %v592, %v696
    %v698 = vpop.f32.mrb[0].mxu0
    %699 = vmatprep.mubr.f32.mxu0 0.0
    %700 = vmatmul.mubr.f32.gmra.mrb[0].mxu0 %v604
    %v701 = vpop.f32.mrb[0].mxu0
    %v702 = vadd.f32 %v593, %v701
    %v703 = vpop.f32.mrb[0].mxu0
    %704 = vmatprep.mubr.f32.mxu0 0.0
    %705 = vmatmul.mubr.f32.gmra.mrb[0].mxu0 %v607
    %v706 = vpop.f32.mrb[0].mxu0
    %v707 = vadd.f32 %v594, %v706
    %v708 = vpop.f32.mrb[0].mxu0
    %709 = vmatprep.mubr.f32.mxu0 0.0
    %710 = vmatmul.mubr.f32.gmra.mrb[0].mxu0 %v610
    %v711 = vpop.f32.mrb[0].mxu0
    %v712 = vadd.f32 %v595, %v711
    %v713 = vpop.f32.mrb[0].mxu0
    %714 = vmatprep.mubr.f32.mxu0 0.0
    %715 = vmatmul.mubr.f32.gmra.mrb[0].mxu0 %v613
    %v716 = vpop.f32.mrb[0].mxu0
    %v717 = vadd.f32 %v596, %v716
    %v718 = vpop.f32.mrb[0].mxu0
    %719 = vmatprep.mubr.f32.mxu0 0.0
    %720 = vmatmul.mubr.f32.gmra.mrb[0].mxu0 %v616
    %v721 = vpop.f32.mrb[0].mxu0
    %v722 = vadd.f32 %v597, %v721
    %v723 = vpop.f32.mrb[0].mxu0
    %724 = vmatprep.mubr.f32.mxu0 0.0
    %725 = vmatmul.mubr.f32.gmra.mrb[0].mxu0 %v619
    %v726 = vpop.f32.mrb[0].mxu0
    %v727 = vadd.f32 %v598, %v726
    %v728 = vpop.f32.mrb[0].mxu0
    %729 = vmatprep.mubr.f32.mxu0 0.0
    %730 = vmatmul.mubr.f32.gmra.mrb[0].mxu0 %v622
    %v731 = vpop.f32.mrb[0].mxu0
    %v732 = vadd.f32 %v599, %v731
    %v733 = vpop.f32.mrb[0].mxu0
    %734 = vdwg.mxu0
    %v735 = vsel %vm184, %v697, -inf
    %736 = vmax.xlane.f32.xlu0 %v735
    %v737 = vpop.xlane.xlu0 %736
    %v738 = vsel %vm184, %v702, -inf
    %739 = vmax.xlane.f32.xlu0 %v738
    %v740 = vpop.xlane.xlu0 %739
    %v741 = vsel %vm184, %v707, -inf
    %742 = vmax.xlane.f32.xlu0 %v741
    %v743 = vpop.xlane.xlu0 %742
    %v744 = vsel %vm184, %v712, -inf
    %745 = vmax.xlane.f32.xlu0 %v744
    %v746 = vpop.xlane.xlu0 %745
    %v747 = vsel %vm184, %v717, -inf
    %748 = vmax.xlane.f32.xlu0 %v747
    %v749 = vpop.xlane.xlu0 %748
    %v750 = vsel %vm184, %v722, -inf
    %751 = vmax.xlane.f32.xlu0 %v750
    %v752 = vpop.xlane.xlu0 %751
    %v753 = vsel %vm184, %v727, -inf
    %754 = vmax.xlane.f32.xlu0 %v753
    %v755 = vpop.xlane.xlu0 %754
    %v756 = vsel %vm184, %v732, -inf
    %757 = vmax.xlane.f32.xlu0 %v756
    %v758 = vpop.xlane.xlu0 %757
    %v759 = vsub.f32 %v697, %v737
    %v760 = vsub.f32 %v702, %v740
    %v761 = vsub.f32 %v707, %v743
    %v762 = vsub.f32 %v712, %v746
    %v763 = vsub.f32 %v717, %v749
    %v764 = vsub.f32 %v722, %v752
    %v765 = vsub.f32 %v727, %v755
    %v766 = vsub.f32 %v732, %v758
    %v767 = vmul.f32 %v759, 1.442695
    %v768 = vpow.pop %v767
    %v769 = vmul.f32 %v760, 1.442695
    %v770 = vpow.pop %v769
    %v771 = vmul.f32 %v761, 1.442695
    %v772 = vpow.pop %v771
    %v773 = vmul.f32 %v762, 1.442695
    %v774 = vpow.pop %v773
    %v775 = vmul.f32 %v763, 1.442695
    %v776 = vpow.pop %v775
    %v777 = vmul.f32 %v764, 1.442695
    %v778 = vpow.pop %v777
    %v779 = vmul.f32 %v765, 1.442695
    %v780 = vpow.pop %v779
    %v781 = vmul.f32 %v766, 1.442695
    %v782 = vpow.pop %v781
    %v783 = vsel %vm184, %v768, 0.0
    %784 = vadd.xlane.f32.xlu0 %v783
    %v785 = vpop.xlane.xlu0 %784
    %v786 = vsel %vm184, %v770, 0.0
    %787 = vadd.xlane.f32.xlu0 %v786
    %v788 = vpop.xlane.xlu0 %787
    %v789 = vsel %vm184, %v772, 0.0
    %790 = vadd.xlane.f32.xlu0 %v789
    %v791 = vpop.xlane.xlu0 %790
    %v792 = vsel %vm184, %v774, 0.0
    %793 = vadd.xlane.f32.xlu0 %v792
    %v794 = vpop.xlane.xlu0 %793
    %v795 = vsel %vm184, %v776, 0.0
    %796 = vadd.xlane.f32.xlu0 %v795
    %v797 = vpop.xlane.xlu0 %796
    %v798 = vsel %vm184, %v778, 0.0
    %799 = vadd.xlane.f32.xlu0 %v798
    %v800 = vpop.xlane.xlu0 %799
    %v801 = vsel %vm184, %v780, 0.0
    %802 = vadd.xlane.f32.xlu0 %v801
    %v803 = vpop.xlane.xlu0 %802
    %v804 = vsel %vm184, %v782, 0.0
    %805 = vadd.xlane.f32.xlu0 %v804
    %v806 = vpop.xlane.xlu0 %805
    %v807 = vrcp.pop %v785
    %v808 = vrcp.pop %v788
    %v809 = vrcp.pop %v791
    %v810 = vrcp.pop %v794
    %v811 = vrcp.pop %v797
    %v812 = vrcp.pop %v800
    %v813 = vrcp.pop %v803
    %v814 = vrcp.pop %v806
    %v815 = vmul.f32 %v768, %v807
    %v816 = vmul.f32 %v770, %v808
    %v817 = vmul.f32 %v772, %v809
    %v818 = vmul.f32 %v774, %v810
    %v819 = vmul.f32 %v776, %v811
    %v820 = vmul.f32 %v778, %v812
    %v821 = vmul.f32 %v780, %v813
    %v822 = vmul.f32 %v782, %v814
    %823 = vrot.lane.b32.xlu0 %v174, 112
    %v824 = vpop.permute.xlu0 %823
    %825 = vrot.lane.b32.xlu0 %v179, 112
    %v826 = vpop.permute.xlu0 %825
    %v830 = vsel %vm184, %v815, 0
    %v833 = vsel %vm184, %v816, 0
    %v836 = vsel %vm184, %v817, 0
    %v839 = vsel %vm184, %v818, 0
    %v842 = vsel %vm184, %v819, 0
    %v845 = vsel %vm184, %v820, 0
    %v848 = vsel %vm184, %v821, 0
    %v851 = vsel %vm184, %v822, 0
    %853 = vmatprep.subr.mxu0 0.0
    %854 = vmatpush1.msra.mxu0 %v824
    %855 = vmatprep.subr.mxu0 0.0
    %856 = vmatpush1.msra.mxu0 %v826
    %857 = vmatprep.subr.mxu0 0.0
    %858 = vmatpush1.msra.mxu0 0.0
    %859 = vmatprep.subr.mxu0 0.0
    %860 = vmatpush1.msra.mxu0 0.0
    %861 = vmatprep.subr.mxu0 0.0
    %862 = vmatpush1.msra.mxu0 0.0
    %863 = vmatprep.subr.mxu0 0.0
    %864 = vmatpush1.msra.mxu0 0.0
    %865 = vmatprep.subr.mxu0 0.0
    %866 = vmatpush1.msra.mxu0 0.0
    %867 = vmatprep.subr.mxu0 0.0
    %868 = vmatpush1.msra.mxu0 0.0
    %869 = vmatprep.subr.mxu0 0.0
    %870 = vmatpush1.msra.mxu0 0.0
    %871 = vmatprep.subr.mxu0 0.0
    %872 = vmatpush1.msra.mxu0 0.0
    %873 = vmatprep.subr.mxu0 0.0
    %874 = vmatpush1.msra.mxu0 0.0
    %875 = vmatprep.subr.mxu0 0.0
    %876 = vmatpush1.msra.mxu0 0.0
    %877 = vmatprep.subr.mxu0 0.0
    %878 = vmatpush1.msra.mxu0 0.0
    %879 = vmatprep.subr.mxu0 0.0
    %880 = vmatpush1.msra.mxu0 0.0
    %881 = vmatprep.subr.mxu0 0.0
    %882 = vmatpush1.msra.mxu0 0.0
    %883 = vmatprep.subr.mxu0 0.0
    %884 = vmatpush1.msra.mxu0 0.0
    %885 = vmatprep.subr.mxu0 0.0
    %886 = vmatpush1.msra.mxu0 0.0
    %887 = vmatprep.subr.mxu0 0.0
    %888 = vmatpush1.msra.mxu0 0.0
    %889 = vmatprep.subr.mxu0 0.0
    %890 = vmatpush1.msra.mxu0 0.0
    %891 = vmatprep.subr.mxu0 0.0
    %892 = vmatpush1.msra.mxu0 0.0
    %893 = vmatprep.subr.mxu0 0.0
    %894 = vmatpush1.msra.mxu0 0.0
    %895 = vmatprep.subr.mxu0 0.0
    %896 = vmatpush1.msra.mxu0 0.0
    %897 = vmatprep.subr.mxu0 0.0
    %898 = vmatpush1.msra.mxu0 0.0
    %899 = vmatprep.subr.mxu0 0.0
    %900 = vmatpush1.msra.mxu0 0.0
    %901 = vmatprep.subr.mxu0 0.0
    %902 = vmatpush1.msra.mxu0 0.0
    %903 = vmatprep.subr.mxu0 0.0
    %904 = vmatpush1.msra.mxu0 0.0
    %905 = vmatprep.subr.mxu0 0.0
    %906 = vmatpush1.msra.mxu0 0.0
    %907 = vmatprep.subr.mxu0 0.0
    %908 = vmatpush1.msra.mxu0 0.0
    %909 = vmatprep.subr.mxu0 0.0
    %910 = vmatpush1.msra.mxu0 0.0
    %911 = vmatprep.subr.mxu0 0.0
    %912 = vmatpush1.msra.mxu0 0.0
    %913 = vmatprep.subr.mxu0 0.0
    %914 = vmatpush1.msra.mxu0 0.0
    %915 = vmatprep.subr.mxu0 0.0
    %916 = vmatpush1.msra.mxu0 0.0
    %917 = vmatprep.mubr.f32.mxu0 0.0
    %918 = vmatmul.mubr.f32.gmra.mrb[0].mxu0 %v830
    %v919 = vpop.f32.mrb[0].mxu0
    %v920 = vadd.f32 0.0, %v919
    %v921 = vpop.f32.mrb[0].mxu0
    %922 = vmatprep.mubr.f32.mxu0 0.0
    %923 = vmatmul.mubr.f32.gmra.mrb[0].mxu0 %v833
    %v924 = vpop.f32.mrb[0].mxu0
    %v925 = vadd.f32 0.0, %v924
    %v926 = vpop.f32.mrb[0].mxu0
    %927 = vmatprep.mubr.f32.mxu0 0.0
    %928 = vmatmul.mubr.f32.gmra.mrb[0].mxu0 %v836
    %v929 = vpop.f32.mrb[0].mxu0
    %v930 = vadd.f32 0.0, %v929
    %v931 = vpop.f32.mrb[0].mxu0
    %932 = vmatprep.mubr.f32.mxu0 0.0
    %933 = vmatmul.mubr.f32.gmra.mrb[0].mxu0 %v839
    %v934 = vpop.f32.mrb[0].mxu0
    %v935 = vadd.f32 0.0, %v934
    %v936 = vpop.f32.mrb[0].mxu0
    %937 = vmatprep.mubr.f32.mxu0 0.0
    %938 = vmatmul.mubr.f32.gmra.mrb[0].mxu0 %v842
    %v939 = vpop.f32.mrb[0].mxu0
    %v940 = vadd.f32 0.0, %v939
    %v941 = vpop.f32.mrb[0].mxu0
    %942 = vmatprep.mubr.f32.mxu0 0.0
    %943 = vmatmul.mubr.f32.gmra.mrb[0].mxu0 %v845
    %v944 = vpop.f32.mrb[0].mxu0
    %v945 = vadd.f32 0.0, %v944
    %v946 = vpop.f32.mrb[0].mxu0
    %947 = vmatprep.mubr.f32.mxu0 0.0
    %948 = vmatmul.mubr.f32.gmra.mrb[0].mxu0 %v848
    %v949 = vpop.f32.mrb[0].mxu0
    %v950 = vadd.f32 0.0, %v949
    %v951 = vpop.f32.mrb[0].mxu0
    %952 = vmatprep.mubr.f32.mxu0 0.0
    %953 = vmatmul.mubr.f32.gmra.mrb[0].mxu0 %v851
    %v954 = vpop.f32.mrb[0].mxu0
    %v955 = vadd.f32 0.0, %v954
    %v956 = vpop.f32.mrb[0].mxu0
    %957 = vdwg.mxu0
    %v958 = vld [vmem:[%s3] sm:$0xff]
    %v959 = vld [vmem:[%s3 + $0x8] sm:$0xff]
    %s960 = scalar_lea.vmem %s3, 16
    %v961 = vld [vmem:[%s960] sm:$0xff]
    %v962 = vld [vmem:[%s960 + $0x8] sm:$0xff]
    %v964 = vsel %vm184, %v930, 0
    %v967 = vsel %vm184, %v935, 0
    %969 = vmatprep.subr.mxu0 0.0
    %970 = vmatpush1.msra.mxu0 %v961
    %971 = vmatprep.subr.mxu0 0.0
    %972 = vmatpush1.msra.mxu0 %v962
    %973 = vmatprep.subr.mxu0 0.0
    %974 = vmatpush1.msra.mxu0 0.0
    %975 = vmatprep.subr.mxu0 0.0
    %976 = vmatpush1.msra.mxu0 0.0
    %977 = vmatprep.subr.mxu0 0.0
    %978 = vmatpush1.msra.mxu0 0.0
    %979 = vmatprep.subr.mxu0 0.0
    %980 = vmatpush1.msra.mxu0 0.0
    %981 = vmatprep.subr.mxu0 0.0
    %982 = vmatpush1.msra.mxu0 0.0
    %983 = vmatprep.subr.mxu0 0.0
    %984 = vmatpush1.msra.mxu0 0.0
    %985 = vmatprep.subr.mxu0 0.0
    %986 = vmatpush1.msra.mxu0 0.0
    %987 = vmatprep.subr.mxu0 0.0
    %988 = vmatpush1.msra.mxu0 0.0
    %989 = vmatprep.subr.mxu0 0.0
    %990 = vmatpush1.msra.mxu0 0.0
    %991 = vmatprep.subr.mxu0 0.0
    %992 = vmatpush1.msra.mxu0 0.0
    %993 = vmatprep.subr.mxu0 0.0
    %994 = vmatpush1.msra.mxu0 0.0
    %995 = vmatprep.subr.mxu0 0.0
    %996 = vmatpush1.msra.mxu0 0.0
    %997 = vmatprep.subr.mxu0 0.0
    %998 = vmatpush1.msra.mxu0 0.0
    %999 = vmatprep.subr.mxu0 0.0
    %1000 = vmatpush1.msra.mxu0 0.0
    %1001 = vmatprep.subr.mxu0 0.0
    %1002 = vmatpush1.msra.mxu0 0.0
    %1003 = vmatprep.subr.mxu0 0.0
    %1004 = vmatpush1.msra.mxu0 0.0
    %1005 = vmatprep.subr.mxu0 0.0
    %1006 = vmatpush1.msra.mxu0 0.0
    %1007 = vmatprep.subr.mxu0 0.0
    %1008 = vmatpush1.msra.mxu0 0.0
    %1009 = vmatprep.subr.mxu0 0.0
    %1010 = vmatpush1.msra.mxu0 0.0
    %1011 = vmatprep.subr.mxu0 0.0
    %1012 = vmatpush1.msra.mxu0 0.0
    %1013 = vmatprep.subr.mxu0 0.0
    %1014 = vmatpush1.msra.mxu0 0.0
    %1015 = vmatprep.subr.mxu0 0.0
    %1016 = vmatpush1.msra.mxu0 0.0
    %1017 = vmatprep.subr.mxu0 0.0
    %1018 = vmatpush1.msra.mxu0 0.0
    %1019 = vmatprep.subr.mxu0 0.0
    %1020 = vmatpush1.msra.mxu0 0.0
    %1021 = vmatprep.subr.mxu0 0.0
    %1022 = vmatpush1.msra.mxu0 0.0
    %1023 = vmatprep.subr.mxu0 0.0
    %1024 = vmatpush1.msra.mxu0 0.0
    %1025 = vmatprep.subr.mxu0 0.0
    %1026 = vmatpush1.msra.mxu0 0.0
    %1027 = vmatprep.subr.mxu0 0.0
    %1028 = vmatpush1.msra.mxu0 0.0
    %1029 = vmatprep.subr.mxu0 0.0
    %1030 = vmatpush1.msra.mxu0 0.0
    %1031 = vmatprep.subr.mxu0 0.0
    %1032 = vmatpush1.msra.mxu0 0.0
    %1033 = vmatprep.mubr.f32.mxu0 0.0
    %1034 = vmatmul.mubr.f32.gmra.mrb[0].mxu0 %v964
    %v1035 = vpop.f32.mrb[0].mxu0
    %v1036 = vadd.f32 0.0, %v1035
    %v1037 = vpop.f32.mrb[0].mxu0
    %1038 = vmatprep.mubr.f32.mxu0 0.0
    %1039 = vmatmul.mubr.f32.gmra.mrb[0].mxu0 %v967
    %v1040 = vpop.f32.mrb[0].mxu0
    %v1041 = vadd.f32 0.0, %v1040
    %v1042 = vpop.f32.mrb[0].mxu0
    %1043 = vdwg.mxu0
    %v1045 = vsel %vm184, %v920, 0
    %v1048 = vsel %vm184, %v925, 0
    %1050 = vmatprep.subr.mxu0 0.0
    %1051 = vmatpush1.msra.mxu0 %v958
    %1052 = vmatprep.subr.mxu0 0.0
    %1053 = vmatpush1.msra.mxu0 %v959
    %1054 = vmatprep.subr.mxu0 0.0
    %1055 = vmatpush1.msra.mxu0 0.0
    %1056 = vmatprep.subr.mxu0 0.0
    %1057 = vmatpush1.msra.mxu0 0.0
    %1058 = vmatprep.subr.mxu0 0.0
    %1059 = vmatpush1.msra.mxu0 0.0
    %1060 = vmatprep.subr.mxu0 0.0
    %1061 = vmatpush1.msra.mxu0 0.0
    %1062 = vmatprep.subr.mxu0 0.0
    %1063 = vmatpush1.msra.mxu0 0.0
    %1064 = vmatprep.subr.mxu0 0.0
    %1065 = vmatpush1.msra.mxu0 0.0
    %1066 = vmatprep.subr.mxu0 0.0
    %1067 = vmatpush1.msra.mxu0 0.0
    %1068 = vmatprep.subr.mxu0 0.0
    %1069 = vmatpush1.msra.mxu0 0.0
    %1070 = vmatprep.subr.mxu0 0.0
    %1071 = vmatpush1.msra.mxu0 0.0
    %1072 = vmatprep.subr.mxu0 0.0
    %1073 = vmatpush1.msra.mxu0 0.0
    %1074 = vmatprep.subr.mxu0 0.0
    %1075 = vmatpush1.msra.mxu0 0.0
    %1076 = vmatprep.subr.mxu0 0.0
    %1077 = vmatpush1.msra.mxu0 0.0
    %1078 = vmatprep.subr.mxu0 0.0
    %1079 = vmatpush1.msra.mxu0 0.0
    %1080 = vmatprep.subr.mxu0 0.0
    %1081 = vmatpush1.msra.mxu0 0.0
    %1082 = vmatprep.subr.mxu0 0.0
    %1083 = vmatpush1.msra.mxu0 0.0
    %1084 = vmatprep.subr.mxu0 0.0
    %1085 = vmatpush1.msra.mxu0 0.0
    %1086 = vmatprep.subr.mxu0 0.0
    %1087 = vmatpush1.msra.mxu0 0.0
    %1088 = vmatprep.subr.mxu0 0.0
    %1089 = vmatpush1.msra.mxu0 0.0
    %1090 = vmatprep.subr.mxu0 0.0
    %1091 = vmatpush1.msra.mxu0 0.0
    %1092 = vmatprep.subr.mxu0 0.0
    %1093 = vmatpush1.msra.mxu0 0.0
    %1094 = vmatprep.subr.mxu0 0.0
    %1095 = vmatpush1.msra.mxu0 0.0
    %1096 = vmatprep.subr.mxu0 0.0
    %1097 = vmatpush1.msra.mxu0 0.0
    %1098 = vmatprep.subr.mxu0 0.0
    %1099 = vmatpush1.msra.mxu0 0.0
    %1100 = vmatprep.subr.mxu0 0.0
    %1101 = vmatpush1.msra.mxu0 0.0
    %1102 = vmatprep.subr.mxu0 0.0
    %1103 = vmatpush1.msra.mxu0 0.0
    %1104 = vmatprep.subr.mxu0 0.0
    %1105 = vmatpush1.msra.mxu0 0.0
    %1106 = vmatprep.subr.mxu0 0.0
    %1107 = vmatpush1.msra.mxu0 0.0
    %1108 = vmatprep.subr.mxu0 0.0
    %1109 = vmatpush1.msra.mxu0 0.0
    %1110 = vmatprep.subr.mxu0 0.0
    %1111 = vmatpush1.msra.mxu0 0.0
    %1112 = vmatprep.subr.mxu0 0.0
    %1113 = vmatpush1.msra.mxu0 0.0
    %1114 = vmatprep.mubr.f32.mxu0 0.0
    %1115 = vmatmul.mubr.f32.gmra.mrb[0].mxu0 %v1045
    %v1116 = vpop.f32.mrb[0].mxu0
    %v1117 = vadd.f32 %v1036, %v1116
    %v1118 = vpop.f32.mrb[0].mxu0
    %1119 = vmatprep.mubr.f32.mxu0 0.0
    %1120 = vmatmul.mubr.f32.gmra.mrb[0].mxu0 %v1048
    %v1121 = vpop.f32.mrb[0].mxu0
    %v1122 = vadd.f32 %v1041, %v1121
    %v1123 = vpop.f32.mrb[0].mxu0
    %1124 = vdwg.mxu0
    %s1125 = scalar_lea.vmem %s3, 32
    %v1126 = vld [vmem:[%s1125] sm:$0xff]
    %v1127 = vld [vmem:[%s1125 + $0x8] sm:$0xff]
    %v1129 = vsel %vm184, %v940, 0
    %v1132 = vsel %vm184, %v945, 0
    %1134 = vmatprep.subr.mxu0 0.0
    %1135 = vmatpush1.msra.mxu0 %v1126
    %1136 = vmatprep.subr.mxu0 0.0
    %1137 = vmatpush1.msra.mxu0 %v1127
    %1138 = vmatprep.subr.mxu0 0.0
    %1139 = vmatpush1.msra.mxu0 0.0
    %1140 = vmatprep.subr.mxu0 0.0
    %1141 = vmatpush1.msra.mxu0 0.0
    %1142 = vmatprep.subr.mxu0 0.0
    %1143 = vmatpush1.msra.mxu0 0.0
    %1144 = vmatprep.subr.mxu0 0.0
    %1145 = vmatpush1.msra.mxu0 0.0
    %1146 = vmatprep.subr.mxu0 0.0
    %1147 = vmatpush1.msra.mxu0 0.0
    %1148 = vmatprep.subr.mxu0 0.0
    %1149 = vmatpush1.msra.mxu0 0.0
    %1150 = vmatprep.subr.mxu0 0.0
    %1151 = vmatpush1.msra.mxu0 0.0
    %1152 = vmatprep.subr.mxu0 0.0
    %1153 = vmatpush1.msra.mxu0 0.0
    %1154 = vmatprep.subr.mxu0 0.0
    %1155 = vmatpush1.msra.mxu0 0.0
    %1156 = vmatprep.subr.mxu0 0.0
    %1157 = vmatpush1.msra.mxu0 0.0
    %1158 = vmatprep.subr.mxu0 0.0
    %1159 = vmatpush1.msra.mxu0 0.0
    %1160 = vmatprep.subr.mxu0 0.0
    %1161 = vmatpush1.msra.mxu0 0.0
    %1162 = vmatprep.subr.mxu0 0.0
    %1163 = vmatpush1.msra.mxu0 0.0
    %1164 = vmatprep.subr.mxu0 0.0
    %1165 = vmatpush1.msra.mxu0 0.0
    %1166 = vmatprep.subr.mxu0 0.0
    %1167 = vmatpush1.msra.mxu0 0.0
    %1168 = vmatprep.subr.mxu0 0.0
    %1169 = vmatpush1.msra.mxu0 0.0
    %1170 = vmatprep.subr.mxu0 0.0
    %1171 = vmatpush1.msra.mxu0 0.0
    %1172 = vmatprep.subr.mxu0 0.0
    %1173 = vmatpush1.msra.mxu0 0.0
    %1174 = vmatprep.subr.mxu0 0.0
    %1175 = vmatpush1.msra.mxu0 0.0
    %1176 = vmatprep.subr.mxu0 0.0
    %1177 = vmatpush1.msra.mxu0 0.0
    %1178 = vmatprep.subr.mxu0 0.0
    %1179 = vmatpush1.msra.mxu0 0.0
    %1180 = vmatprep.subr.mxu0 0.0
    %1181 = vmatpush1.msra.mxu0 0.0
    %1182 = vmatprep.subr.mxu0 0.0
    %1183 = vmatpush1.msra.mxu0 0.0
    %1184 = vmatprep.subr.mxu0 0.0
    %1185 = vmatpush1.msra.mxu0 0.0
    %1186 = vmatprep.subr.mxu0 0.0
    %1187 = vmatpush1.msra.mxu0 0.0
    %1188 = vmatprep.subr.mxu0 0.0
    %1189 = vmatpush1.msra.mxu0 0.0
    %1190 = vmatprep.subr.mxu0 0.0
    %1191 = vmatpush1.msra.mxu0 0.0
    %1192 = vmatprep.subr.mxu0 0.0
    %1193 = vmatpush1.msra.mxu0 0.0
    %1194 = vmatprep.subr.mxu0 0.0
    %1195 = vmatpush1.msra.mxu0 0.0
    %1196 = vmatprep.subr.mxu0 0.0
    %1197 = vmatpush1.msra.mxu0 0.0
    %1198 = vmatprep.mubr.f32.mxu0 0.0
    %1199 = vmatmul.mubr.f32.gmra.mrb[0].mxu0 %v1129
    %v1200 = vpop.f32.mrb[0].mxu0
    %v1201 = vadd.f32 0.0, %v1200
    %v1202 = vpop.f32.mrb[0].mxu0
    %1203 = vmatprep.mubr.f32.mxu0 0.0
    %1204 = vmatmul.mubr.f32.gmra.mrb[0].mxu0 %v1132
    %v1205 = vpop.f32.mrb[0].mxu0
    %v1206 = vadd.f32 0.0, %v1205
    %v1207 = vpop.f32.mrb[0].mxu0
    %1208 = vdwg.mxu0
    %v1209 = vadd.f32 %v1117, %v1201
    %v1210 = vadd.f32 %v1122, %v1206
    %s1211 = scalar_lea.vmem %s3, 48
    %v1212 = vld [vmem:[%s1211] sm:$0xff]
    %v1213 = vld [vmem:[%s1211 + $0x8] sm:$0xff]
    %v1215 = vsel %vm184, %v950, 0
    %v1218 = vsel %vm184, %v955, 0
    %1220 = vmatprep.subr.mxu0 0.0
    %1221 = vmatpush1.msra.mxu0 %v1212
    %1222 = vmatprep.subr.mxu0 0.0
    %1223 = vmatpush1.msra.mxu0 %v1213
    %1224 = vmatprep.subr.mxu0 0.0
    %1225 = vmatpush1.msra.mxu0 0.0
    %1226 = vmatprep.subr.mxu0 0.0
    %1227 = vmatpush1.msra.mxu0 0.0
    %1228 = vmatprep.subr.mxu0 0.0
    %1229 = vmatpush1.msra.mxu0 0.0
    %1230 = vmatprep.subr.mxu0 0.0
    %1231 = vmatpush1.msra.mxu0 0.0
    %1232 = vmatprep.subr.mxu0 0.0
    %1233 = vmatpush1.msra.mxu0 0.0
    %1234 = vmatprep.subr.mxu0 0.0
    %1235 = vmatpush1.msra.mxu0 0.0
    %1236 = vmatprep.subr.mxu0 0.0
    %1237 = vmatpush1.msra.mxu0 0.0
    %1238 = vmatprep.subr.mxu0 0.0
    %1239 = vmatpush1.msra.mxu0 0.0
    %1240 = vmatprep.subr.mxu0 0.0
    %1241 = vmatpush1.msra.mxu0 0.0
    %1242 = vmatprep.subr.mxu0 0.0
    %1243 = vmatpush1.msra.mxu0 0.0
    %1244 = vmatprep.subr.mxu0 0.0
    %1245 = vmatpush1.msra.mxu0 0.0
    %1246 = vmatprep.subr.mxu0 0.0
    %1247 = vmatpush1.msra.mxu0 0.0
    %1248 = vmatprep.subr.mxu0 0.0
    %1249 = vmatpush1.msra.mxu0 0.0
    %1250 = vmatprep.subr.mxu0 0.0
    %1251 = vmatpush1.msra.mxu0 0.0
    %1252 = vmatprep.subr.mxu0 0.0
    %1253 = vmatpush1.msra.mxu0 0.0
    %1254 = vmatprep.subr.mxu0 0.0
    %1255 = vmatpush1.msra.mxu0 0.0
    %1256 = vmatprep.subr.mxu0 0.0
    %1257 = vmatpush1.msra.mxu0 0.0
    %1258 = vmatprep.subr.mxu0 0.0
    %1259 = vmatpush1.msra.mxu0 0.0
    %1260 = vmatprep.subr.mxu0 0.0
    %1261 = vmatpush1.msra.mxu0 0.0
    %1262 = vmatprep.subr.mxu0 0.0
    %1263 = vmatpush1.msra.mxu0 0.0
    %1264 = vmatprep.subr.mxu0 0.0
    %1265 = vmatpush1.msra.mxu0 0.0
    %1266 = vmatprep.subr.mxu0 0.0
    %1267 = vmatpush1.msra.mxu0 0.0
    %1268 = vmatprep.subr.mxu0 0.0
    %1269 = vmatpush1.msra.mxu0 0.0
    %1270 = vmatprep.subr.mxu0 0.0
    %1271 = vmatpush1.msra.mxu0 0.0
    %1272 = vmatprep.subr.mxu0 0.0
    %1273 = vmatpush1.msra.mxu0 0.0
    %1274 = vmatprep.subr.mxu0 0.0
    %1275 = vmatpush1.msra.mxu0 0.0
    %1276 = vmatprep.subr.mxu0 0.0
    %1277 = vmatpush1.msra.mxu0 0.0
    %1278 = vmatprep.subr.mxu0 0.0
    %1279 = vmatpush1.msra.mxu0 0.0
    %1280 = vmatprep.subr.mxu0 0.0
    %1281 = vmatpush1.msra.mxu0 0.0
    %1282 = vmatprep.subr.mxu0 0.0
    %1283 = vmatpush1.msra.mxu0 0.0
    %1284 = vmatprep.mubr.f32.mxu0 0.0
    %1285 = vmatmul.mubr.f32.gmra.mrb[0].mxu0 %v1215
    %v1286 = vpop.f32.mrb[0].mxu0
    %v1287 = vadd.f32 0.0, %v1286
    %v1288 = vpop.f32.mrb[0].mxu0
    %1289 = vmatprep.mubr.f32.mxu0 0.0
    %1290 = vmatmul.mubr.f32.gmra.mrb[0].mxu0 %v1218
    %v1291 = vpop.f32.mrb[0].mxu0
    %v1292 = vadd.f32 0.0, %v1291
    %v1293 = vpop.f32.mrb[0].mxu0
    %1294 = vdwg.mxu0
    %v1295 = vadd.f32 %v1209, %v1287
    %v1296 = vadd.f32 %v1210, %v1292
    %s1297 = scalar_lea.vmem %s6, 2
    %v1298 = vld [vmem:[%s1297] sm:$0x1]
    %v1299 = vsel %vm61, %v1295, 0.0
    %1300 = vadd.xlane.f32.xlu0 %v1299
    %v1301 = vpop.xlane.xlu0 %1300
    %v1302 = vsel %vm61, %v1296, 0.0
    %1303 = vadd.xlane.f32.xlu0 %v1302
    %v1304 = vpop.xlane.xlu0 %1303
    %v1305 = vmul.f32 %v1301, %v68
    %v1306 = vmul.f32 %v1304, %v68
    %v1307 = vsub.f32 %v1295, %v1305
    %v1308 = vsub.f32 %v1296, %v1306
    %v1309 = vmul.f32 %v1307, %v1307
    %v1310 = vmul.f32 %v1308, %v1308
    %v1311 = vsel %vm61, %v1309, 0.0
    %1312 = vadd.xlane.f32.xlu0 %v1311
    %v1313 = vpop.xlane.xlu0 %1312
    %v1314 = vsel %vm61, %v1310, 0.0
    %1315 = vadd.xlane.f32.xlu0 %v1314
    %v1316 = vpop.xlane.xlu0 %1315
    %v1317 = vmul.f32 %v1313, %v68
    %v1318 = vmul.f32 %v1316, %v68
    %v1319 = vadd.f32 %v1317, 1e-05
    %v1320 = vadd.f32 %v1318, 1e-05
    %v1321 = vrsqrt.pop %v1319
    %v1322 = vrsqrt.pop %v1320
    %v1323 = vmul.f32 %v1307, %v1321
    %v1324 = vmul.f32 %v1308, %v1322
    %v1326 = vlaneseq
    %v1327 = vshrl.u32 %v1326, 7
    %v1328 = vsub.s32 0, %v1327
    %v1329 = vrot.slane %v1298, %v1328
    %v1331 = vmul.f32 %v1323, %v1329
    %v1332 = vmul.f32 %v1324, %v1329
    %v1333 = vadd.f32 %v1331, %v39
    %v1334 = vadd.f32 %v1332, %v40
    %s1335 = scalar_lea.vmem %s6, 4
    %v1336 = vld [vmem:[%s1335] sm:$0x1]
    %v1337 = vsel %vm61, %v1333, 0.0
    %1338 = vadd.xlane.f32.xlu0 %v1337
    %v1339 = vpop.xlane.xlu0 %1338
    %v1340 = vsel %vm61, %v1334, 0.0
    %1341 = vadd.xlane.f32.xlu0 %v1340
    %v1342 = vpop.xlane.xlu0 %1341
    %v1343 = vmul.f32 %v1339, %v68
    %v1344 = vmul.f32 %v1342, %v68
    %v1345 = vsub.f32 %v1333, %v1343
    %v1346 = vsub.f32 %v1334, %v1344
    %v1347 = vmul.f32 %v1345, %v1345
    %v1348 = vmul.f32 %v1346, %v1346
    %v1349 = vsel %vm61, %v1347, 0.0
    %1350 = vadd.xlane.f32.xlu0 %v1349
    %v1351 = vpop.xlane.xlu0 %1350
    %v1352 = vsel %vm61, %v1348, 0.0
    %1353 = vadd.xlane.f32.xlu0 %v1352
    %v1354 = vpop.xlane.xlu0 %1353
    %v1355 = vmul.f32 %v1351, %v68
    %v1356 = vmul.f32 %v1354, %v68
    %v1357 = vadd.f32 %v1355, 1e-05
    %v1358 = vadd.f32 %v1356, 1e-05
    %v1359 = vrsqrt.pop %v1357
    %v1360 = vrsqrt.pop %v1358
    %v1361 = vmul.f32 %v1345, %v1359
    %v1362 = vmul.f32 %v1346, %v1360
    %v1364 = vlaneseq
    %v1365 = vshrl.u32 %v1364, 7
    %v1366 = vsub.s32 0, %v1365
    %v1367 = vrot.slane %v1336, %v1366
    %v1369 = vmul.f32 %v1361, %v1367
    %v1370 = vmul.f32 %v1362, %v1367
    %v1371 = vld [vmem:[%s4] sm:$0xff]
    %v1372 = vld [vmem:[%s4 + $0x8] sm:$0xff]
    %v1373 = vld [vmem:[%s4 + $0x10] sm:$0xff]
    %v1374 = vld [vmem:[%s4 + $0x18] sm:$0xff]
    %v1375 = vld [vmem:[%s4 + $0x20] sm:$0xff]
    %v1376 = vld [vmem:[%s4 + $0x28] sm:$0xff]
    %v1377 = vld [vmem:[%s4 + $0x30] sm:$0xff]
    %v1378 = vld [vmem:[%s4 + $0x38] sm:$0xff]
    %v1380 = vsel %vm61, %v1369, 0
    %v1383 = vsel %vm61, %v1370, 0
    %1385 = vmatprep.subr.mxu0 %v1372
    %1386 = vmatpush1.msra.mxu0 %v1371
    %1387 = vmatprep.subr.mxu0 %v1374
    %1388 = vmatpush1.msra.mxu0 %v1373
    %1389 = vmatprep.subr.mxu0 %v1376
    %1390 = vmatpush1.msra.mxu0 %v1375
    %1391 = vmatprep.subr.mxu0 %v1378
    %1392 = vmatpush1.msra.mxu0 %v1377
    %1393 = vmatprep.subr.mxu0 0.0
    %1394 = vmatpush1.msra.mxu0 0.0
    %1395 = vmatprep.subr.mxu0 0.0
    %1396 = vmatpush1.msra.mxu0 0.0
    %1397 = vmatprep.subr.mxu0 0.0
    %1398 = vmatpush1.msra.mxu0 0.0
    %1399 = vmatprep.subr.mxu0 0.0
    %1400 = vmatpush1.msra.mxu0 0.0
    %1401 = vmatprep.subr.mxu0 0.0
    %1402 = vmatpush1.msra.mxu0 0.0
    %1403 = vmatprep.subr.mxu0 0.0
    %1404 = vmatpush1.msra.mxu0 0.0
    %1405 = vmatprep.subr.mxu0 0.0
    %1406 = vmatpush1.msra.mxu0 0.0
    %1407 = vmatprep.subr.mxu0 0.0
    %1408 = vmatpush1.msra.mxu0 0.0
    %1409 = vmatprep.subr.mxu0 0.0
    %1410 = vmatpush1.msra.mxu0 0.0
    %1411 = vmatprep.subr.mxu0 0.0
    %1412 = vmatpush1.msra.mxu0 0.0
    %1413 = vmatprep.subr.mxu0 0.0
    %1414 = vmatpush1.msra.mxu0 0.0
    %1415 = vmatprep.subr.mxu0 0.0
    %1416 = vmatpush1.msra.mxu0 0.0
    %1417 = vmatprep.subr.mxu0 0.0
    %1418 = vmatpush1.msra.mxu0 0.0
    %1419 = vmatprep.subr.mxu0 0.0
    %1420 = vmatpush1.msra.mxu0 0.0
    %1421 = vmatprep.subr.mxu0 0.0
    %1422 = vmatpush1.msra.mxu0 0.0
    %1423 = vmatprep.subr.mxu0 0.0
    %1424 = vmatpush1.msra.mxu0 0.0
    %1425 = vmatprep.subr.mxu0 0.0
    %1426 = vmatpush1.msra.mxu0 0.0
    %1427 = vmatprep.subr.mxu0 0.0
    %1428 = vmatpush1.msra.mxu0 0.0
    %1429 = vmatprep.subr.mxu0 0.0
    %1430 = vmatpush1.msra.mxu0 0.0
    %1431 = vmatprep.subr.mxu0 0.0
    %1432 = vmatpush1.msra.mxu0 0.0
    %1433 = vmatprep.subr.mxu0 0.0
    %1434 = vmatpush1.msra.mxu0 0.0
    %1435 = vmatprep.subr.mxu0 0.0
    %1436 = vmatpush1.msra.mxu0 0.0
    %1437 = vmatprep.subr.mxu0 0.0
    %1438 = vmatpush1.msra.mxu0 0.0
    %1439 = vmatprep.subr.mxu0 0.0
    %1440 = vmatpush1.msra.mxu0 0.0
    %1441 = vmatprep.subr.mxu0 0.0
    %1442 = vmatpush1.msra.mxu0 0.0
    %1443 = vmatprep.subr.mxu0 0.0
    %1444 = vmatpush1.msra.mxu0 0.0
    %1445 = vmatprep.subr.mxu0 0.0
    %1446 = vmatpush1.msra.mxu0 0.0
    %1447 = vmatprep.subr.mxu0 0.0
    %1448 = vmatpush1.msra.mxu0 0.0
    %1449 = vmatprep.mubr.f32.mxu0 0.0
    %1450 = vmatmul.mubr.f32.gmra.mrb[0].mxu0 %v1380
    %v1451 = vpop.f32.mrb[0].mxu0
    %v1452 = vadd.f32 0.0, %v1451
    %v1453 = vpop.f32.mrb[0].mxu0
    %v1454 = vadd.f32 0.0, %v1453
    %1455 = vmatprep.mubr.f32.mxu0 0.0
    %1456 = vmatmul.mubr.f32.gmra.mrb[0].mxu0 %v1383
    %v1457 = vpop.f32.mrb[0].mxu0
    %v1458 = vadd.f32 0.0, %v1457
    %v1459 = vpop.f32.mrb[0].mxu0
    %v1460 = vadd.f32 0.0, %v1459
    %1461 = vdwg.mxu0
    %v1462 = vxor.u32 %v1454, 2147483648
    %v1463 = vxor.u32 %v1460, 2147483648
    %v1464 = vmul.f32 %v1462, 1.442695
    %v1465 = vpow.pop %v1464
    %v1466 = vmul.f32 %v1463, 1.442695
    %v1467 = vpow.pop %v1466
    %v1468 = vadd.f32 %v1465, 1.0
    %v1469 = vadd.f32 %v1467, 1.0
    %v1470 = vrcp.pop %v1468
    %v1471 = vmul.f32 1.0, %v1470
    %v1472 = vrcp.pop %v1469
    %v1473 = vmul.f32 1.0, %v1472
    %v1474 = vmul.f32 %v1454, %v1471
    %v1475 = vmul.f32 %v1460, %v1473
    %v1476 = vmul.f32 %v1452, %v1474
    %v1477 = vmul.f32 %v1458, %v1475
    %v1478 = vld [vmem:[%s5] sm:$0xff]
    %v1479 = vld [vmem:[%s5 + $0x8] sm:$0xff]
    %v1480 = vld [vmem:[%s5 + $0x10] sm:$0xff]
    %v1481 = vld [vmem:[%s5 + $0x18] sm:$0xff]
    %v1482 = vld [vmem:[%s5 + $0x20] sm:$0xff]
    %v1483 = vld [vmem:[%s5 + $0x28] sm:$0xff]
    %v1484 = vld [vmem:[%s5 + $0x30] sm:$0xff]
    %v1485 = vld [vmem:[%s5 + $0x38] sm:$0xff]
    %v1486 = vld [vmem:[%s5 + $0x40] sm:$0xff]
    %v1487 = vld [vmem:[%s5 + $0x48] sm:$0xff]
    %v1488 = vld [vmem:[%s5 + $0x50] sm:$0xff]
    %v1489 = vld [vmem:[%s5 + $0x58] sm:$0xff]
    %v1490 = vld [vmem:[%s5 + $0x60] sm:$0xff]
    %v1491 = vld [vmem:[%s5 + $0x68] sm:$0xff]
    %v1492 = vld [vmem:[%s5 + $0x70] sm:$0xff]
    %v1493 = vld [vmem:[%s5 + $0x78] sm:$0xff]
    %1494 = vmatprep.subr.mxu0 0.0
    %1495 = vmatpush1.msra.mxu0 %v1478
    %1496 = vmatprep.subr.mxu0 0.0
    %1497 = vmatpush1.msra.mxu0 %v1479
    %1498 = vmatprep.subr.mxu0 0.0
    %1499 = vmatpush1.msra.mxu0 %v1480
    %1500 = vmatprep.subr.mxu0 0.0
    %1501 = vmatpush1.msra.mxu0 %v1481
    %1502 = vmatprep.subr.mxu0 0.0
    %1503 = vmatpush1.msra.mxu0 %v1482
    %1504 = vmatprep.subr.mxu0 0.0
    %1505 = vmatpush1.msra.mxu0 %v1483
    %1506 = vmatprep.subr.mxu0 0.0
    %1507 = vmatpush1.msra.mxu0 %v1484
    %1508 = vmatprep.subr.mxu0 0.0
    %1509 = vmatpush1.msra.mxu0 %v1485
    %1510 = vmatprep.subr.mxu0 0.0
    %1511 = vmatpush1.msra.mxu0 %v1486
    %1512 = vmatprep.subr.mxu0 0.0
    %1513 = vmatpush1.msra.mxu0 %v1487
    %1514 = vmatprep.subr.mxu0 0.0
    %1515 = vmatpush1.msra.mxu0 %v1488
    %1516 = vmatprep.subr.mxu0 0.0
    %1517 = vmatpush1.msra.mxu0 %v1489
    %1518 = vmatprep.subr.mxu0 0.0
    %1519 = vmatpush1.msra.mxu0 %v1490
    %1520 = vmatprep.subr.mxu0 0.0
    %1521 = vmatpush1.msra.mxu0 %v1491
    %1522 = vmatprep.subr.mxu0 0.0
    %1523 = vmatpush1.msra.mxu0 %v1492
    %1524 = vmatprep.subr.mxu0 0.0
    %1525 = vmatpush1.msra.mxu0 %v1493
    %1526 = vmatprep.subr.mxu0 0.0
    %1527 = vmatpush1.msra.mxu0 0.0
    %1528 = vmatprep.subr.mxu0 0.0
    %1529 = vmatpush1.msra.mxu0 0.0
    %1530 = vmatprep.subr.mxu0 0.0
    %1531 = vmatpush1.msra.mxu0 0.0
    %1532 = vmatprep.subr.mxu0 0.0
    %1533 = vmatpush1.msra.mxu0 0.0
    %1534 = vmatprep.subr.mxu0 0.0
    %1535 = vmatpush1.msra.mxu0 0.0
    %1536 = vmatprep.subr.mxu0 0.0
    %1537 = vmatpush1.msra.mxu0 0.0
    %1538 = vmatprep.subr.mxu0 0.0
    %1539 = vmatpush1.msra.mxu0 0.0
    %1540 = vmatprep.subr.mxu0 0.0
    %1541 = vmatpush1.msra.mxu0 0.0
    %1542 = vmatprep.subr.mxu0 0.0
    %1543 = vmatpush1.msra.mxu0 0.0
    %1544 = vmatprep.subr.mxu0 0.0
    %1545 = vmatpush1.msra.mxu0 0.0
    %1546 = vmatprep.subr.mxu0 0.0
    %1547 = vmatpush1.msra.mxu0 0.0
    %1548 = vmatprep.subr.mxu0 0.0
    %1549 = vmatpush1.msra.mxu0 0.0
    %1550 = vmatprep.subr.mxu0 0.0
    %1551 = vmatpush1.msra.mxu0 0.0
    %1552 = vmatprep.subr.mxu0 0.0
    %1553 = vmatpush1.msra.mxu0 0.0
    %1554 = vmatprep.subr.mxu0 0.0
    %1555 = vmatpush1.msra.mxu0 0.0
    %1556 = vmatprep.subr.mxu0 0.0
    %1557 = vmatpush1.msra.mxu0 0.0
    %1558 = vmatprep.mubr.f32.mxu0 0.0
    %1559 = vmatmul.mubr.f32.gmra.mrb[0].mxu0 %v1476
    %v1560 = vpop.f32.mrb[0].mxu0
    %v1561 = vadd.f32 %v1333, %v1560
    %v1562 = vpop.f32.mrb[0].mxu0
    %1563 = vmatprep.mubr.f32.mxu0 0.0
    %1564 = vmatmul.mubr.f32.gmra.mrb[0].mxu0 %v1477
    %v1565 = vpop.f32.mrb[0].mxu0
    %v1566 = vadd.f32 %v1334, %v1565
    %v1567 = vpop.f32.mrb[0].mxu0
    %1568 = vdwg.mxu0
    %s1569 = scalar_lea.vmem %s6, 1
    %v1570 = vld [vmem:[%s1569] sm:$0x1]
    %v1571 = vsel %vm61, %v1561, 0.0
    %1572 = vadd.xlane.f32.xlu0 %v1571
    %v1573 = vpop.xlane.xlu0 %1572
    %v1574 = vsel %vm61, %v1566, 0.0
    %1575 = vadd.xlane.f32.xlu0 %v1574
    %v1576 = vpop.xlane.xlu0 %1575
    %v1577 = vmul.f32 %v1573, %v68
    %v1578 = vmul.f32 %v1576, %v68
    %v1579 = vsub.f32 %v1561, %v1577
    %v1580 = vsub.f32 %v1566, %v1578
    %v1581 = vmul.f32 %v1579, %v1579
    %v1582 = vmul.f32 %v1580, %v1580
    %v1583 = vsel %vm61, %v1581, 0.0
    %1584 = vadd.xlane.f32.xlu0 %v1583
    %v1585 = vpop.xlane.xlu0 %1584
    %v1586 = vsel %vm61, %v1582, 0.0
    %1587 = vadd.xlane.f32.xlu0 %v1586
    %v1588 = vpop.xlane.xlu0 %1587
    %v1589 = vmul.f32 %v1585, %v68
    %v1590 = vmul.f32 %v1588, %v68
    %v1591 = vadd.f32 %v1589, 1e-05
    %v1592 = vadd.f32 %v1590, 1e-05
    %v1593 = vrsqrt.pop %v1591
    %v1594 = vrsqrt.pop %v1592
    %v1595 = vmul.f32 %v1579, %v1593
    %v1596 = vmul.f32 %v1580, %v1594
    %v1598 = vlaneseq
    %v1599 = vshrl.u32 %v1598, 7
    %v1600 = vsub.s32 0, %v1599
    %v1601 = vrot.slane %v1570, %v1600
    %v1603 = vmul.f32 %v1595, %v1601
    %v1604 = vmul.f32 %v1596, %v1601
    %s1605 = scalar_lea.vmem %s2, 32
    %v1606 = vld [vmem:[%s1605] sm:$0xff]
    %v1607 = vld [vmem:[%s1605 + $0x8] sm:$0xff]
    %v1608 = vld [vmem:[%s1605 + $0x10] sm:$0xff]
    %v1609 = vld [vmem:[%s1605 + $0x18] sm:$0xff]
    %v1611 = vsel %vm61, %v1603, 0
    %v1614 = vsel %vm61, %v1604, 0
    %1616 = vmatprep.subr.mxu0 0.0
    %1617 = vmatpush1.msra.mxu0 %v1606
    %1618 = vmatprep.subr.mxu0 0.0
    %1619 = vmatpush1.msra.mxu0 %v1607
    %1620 = vmatprep.subr.mxu0 0.0
    %1621 = vmatpush1.msra.mxu0 %v1608
    %1622 = vmatprep.subr.mxu0 0.0
    %1623 = vmatpush1.msra.mxu0 %v1609
    %1624 = vmatprep.subr.mxu0 0.0
    %1625 = vmatpush1.msra.mxu0 0.0
    %1626 = vmatprep.subr.mxu0 0.0
    %1627 = vmatpush1.msra.mxu0 0.0
    %1628 = vmatprep.subr.mxu0 0.0
    %1629 = vmatpush1.msra.mxu0 0.0
    %1630 = vmatprep.subr.mxu0 0.0
    %1631 = vmatpush1.msra.mxu0 0.0
    %1632 = vmatprep.subr.mxu0 0.0
    %1633 = vmatpush1.msra.mxu0 0.0
    %1634 = vmatprep.subr.mxu0 0.0
    %1635 = vmatpush1.msra.mxu0 0.0
    %1636 = vmatprep.subr.mxu0 0.0
    %1637 = vmatpush1.msra.mxu0 0.0
    %1638 = vmatprep.subr.mxu0 0.0
    %1639 = vmatpush1.msra.mxu0 0.0
    %1640 = vmatprep.subr.mxu0 0.0
    %1641 = vmatpush1.msra.mxu0 0.0
    %1642 = vmatprep.subr.mxu0 0.0
    %1643 = vmatpush1.msra.mxu0 0.0
    %1644 = vmatprep.subr.mxu0 0.0
    %1645 = vmatpush1.msra.mxu0 0.0
    %1646 = vmatprep.subr.mxu0 0.0
    %1647 = vmatpush1.msra.mxu0 0.0
    %1648 = vmatprep.subr.mxu0 0.0
    %1649 = vmatpush1.msra.mxu0 0.0
    %1650 = vmatprep.subr.mxu0 0.0
    %1651 = vmatpush1.msra.mxu0 0.0
    %1652 = vmatprep.subr.mxu0 0.0
    %1653 = vmatpush1.msra.mxu0 0.0
    %1654 = vmatprep.subr.mxu0 0.0
    %1655 = vmatpush1.msra.mxu0 0.0
    %1656 = vmatprep.subr.mxu0 0.0
    %1657 = vmatpush1.msra.mxu0 0.0
    %1658 = vmatprep.subr.mxu0 0.0
    %1659 = vmatpush1.msra.mxu0 0.0
    %1660 = vmatprep.subr.mxu0 0.0
    %1661 = vmatpush1.msra.mxu0 0.0
    %1662 = vmatprep.subr.mxu0 0.0
    %1663 = vmatpush1.msra.mxu0 0.0
    %1664 = vmatprep.subr.mxu0 0.0
    %1665 = vmatpush1.msra.mxu0 0.0
    %1666 = vmatprep.subr.mxu0 0.0
    %1667 = vmatpush1.msra.mxu0 0.0
    %1668 = vmatprep.subr.mxu0 0.0
    %1669 = vmatpush1.msra.mxu0 0.0
    %1670 = vmatprep.subr.mxu0 0.0
    %1671 = vmatpush1.msra.mxu0 0.0
    %1672 = vmatprep.subr.mxu0 0.0
    %1673 = vmatpush1.msra.mxu0 0.0
    %1674 = vmatprep.subr.mxu0 0.0
    %1675 = vmatpush1.msra.mxu0 0.0
    %1676 = vmatprep.subr.mxu0 0.0
    %1677 = vmatpush1.msra.mxu0 0.0
    %1678 = vmatprep.subr.mxu0 0.0
    %1679 = vmatpush1.msra.mxu0 0.0
    %1680 = vmatprep.mubr.f32.mxu0 0.0
    %1681 = vmatmul.mubr.f32.gmra.mrb[0].mxu0 %v1611
    %v1682 = vpop.f32.mrb[0].mxu0
    %v1683 = vadd.f32 0.0, %v1682
    %v1684 = vpop.f32.mrb[0].mxu0
    %1685 = vmatprep.mubr.f32.mxu0 0.0
    %1686 = vmatmul.mubr.f32.gmra.mrb[0].mxu0 %v1614
    %v1687 = vpop.f32.mrb[0].mxu0
    %v1688 = vadd.f32 0.0, %v1687
    %v1689 = vpop.f32.mrb[0].mxu0
    %1690 = vdwg.mxu0
    %v1691 = vmul.f32 %v1683, %v43
    %v1692 = vmul.f32 %v1688, %v44
    %v1694 = vsel %vm184, %v1683, 0
    %v1697 = vsel %vm184, %v1688, 0
    %1699 = vmatprep.subr.mxu0 0.0
    %1700 = vmatpush1.msra.mxu0 %v41
    %1701 = vmatprep.subr.mxu0 0.0
    %1702 = vmatpush1.msra.mxu0 %v42
    %1703 = vmatprep.subr.mxu0 0.0
    %1704 = vmatpush1.msra.mxu0 0.0
    %1705 = vmatprep.subr.mxu0 0.0
    %1706 = vmatpush1.msra.mxu0 0.0
    %1707 = vmatprep.subr.mxu0 0.0
    %1708 = vmatpush1.msra.mxu0 0.0
    %1709 = vmatprep.subr.mxu0 0.0
    %1710 = vmatpush1.msra.mxu0 0.0
    %1711 = vmatprep.subr.mxu0 0.0
    %1712 = vmatpush1.msra.mxu0 0.0
    %1713 = vmatprep.subr.mxu0 0.0
    %1714 = vmatpush1.msra.mxu0 0.0
    %1715 = vmatprep.subr.mxu0 0.0
    %1716 = vmatpush1.msra.mxu0 0.0
    %1717 = vmatprep.subr.mxu0 0.0
    %1718 = vmatpush1.msra.mxu0 0.0
    %1719 = vmatprep.subr.mxu0 0.0
    %1720 = vmatpush1.msra.mxu0 0.0
    %1721 = vmatprep.subr.mxu0 0.0
    %1722 = vmatpush1.msra.mxu0 0.0
    %1723 = vmatprep.subr.mxu0 0.0
    %1724 = vmatpush1.msra.mxu0 0.0
    %1725 = vmatprep.subr.mxu0 0.0
    %1726 = vmatpush1.msra.mxu0 0.0
    %1727 = vmatprep.subr.mxu0 0.0
    %1728 = vmatpush1.msra.mxu0 0.0
    %1729 = vmatprep.subr.mxu0 0.0
    %1730 = vmatpush1.msra.mxu0 0.0
    %1731 = vmatprep.subr.mxu0 0.0
    %1732 = vmatpush1.msra.mxu0 0.0
    %1733 = vmatprep.subr.mxu0 0.0
    %1734 = vmatpush1.msra.mxu0 0.0
    %1735 = vmatprep.subr.mxu0 0.0
    %1736 = vmatpush1.msra.mxu0 0.0
    %1737 = vmatprep.subr.mxu0 0.0
    %1738 = vmatpush1.msra.mxu0 0.0
    %1739 = vmatprep.subr.mxu0 0.0
    %1740 = vmatpush1.msra.mxu0 0.0
    %1741 = vmatprep.subr.mxu0 0.0
    %1742 = vmatpush1.msra.mxu0 0.0
    %1743 = vmatprep.subr.mxu0 0.0
    %1744 = vmatpush1.msra.mxu0 0.0
    %1745 = vmatprep.subr.mxu0 0.0
    %1746 = vmatpush1.msra.mxu0 0.0
    %1747 = vmatprep.subr.mxu0 0.0
    %1748 = vmatpush1.msra.mxu0 0.0
    %1749 = vmatprep.subr.mxu0 0.0
    %1750 = vmatpush1.msra.mxu0 0.0
    %1751 = vmatprep.subr.mxu0 0.0
    %1752 = vmatpush1.msra.mxu0 0.0
    %1753 = vmatprep.subr.mxu0 0.0
    %1754 = vmatpush1.msra.mxu0 0.0
    %1755 = vmatprep.subr.mxu0 0.0
    %1756 = vmatpush1.msra.mxu0 0.0
    %1757 = vmatprep.subr.mxu0 0.0
    %1758 = vmatpush1.msra.mxu0 0.0
    %1759 = vmatprep.subr.mxu0 0.0
    %1760 = vmatpush1.msra.mxu0 0.0
    %1761 = vmatprep.subr.mxu0 0.0
    %1762 = vmatpush1.msra.mxu0 0.0
    %1763 = vmatprep.mubr.f32.mxu0 0.0
    %1764 = vmatmul.mubr.f32.gmra.mrb[0].mxu0 %v1694
    %v1765 = vpop.f32.mrb[0].mxu0
    %v1766 = vadd.f32 0.0, %v1765
    %v1767 = vpop.f32.mrb[0].mxu0
    %1768 = vmatprep.mubr.f32.mxu0 0.0
    %1769 = vmatmul.mubr.f32.gmra.mrb[0].mxu0 %v1697
    %v1770 = vpop.f32.mrb[0].mxu0
    %v1771 = vadd.f32 0.0, %v1770
    %v1772 = vpop.f32.mrb[0].mxu0
    %1773 = vdwg.mxu0
    %v1774 = vmul.f32 %v1766, %v52
    %v1775 = vmul.f32 %v1771, %v53
    %v1776 = vadd.f32 %v1691, %v1774
    %v1777 = vadd.f32 %v1692, %v1775
    %v1778 = vmul.f32 %v1776, %v1776
    %v1779 = vmul.f32 %v1777, %v1777
    %v1780 = vsel %vm184, %v1778, 0.0
    %1781 = vadd.xlane.f32.xlu0 %v1780
    %v1782 = vpop.xlane.xlu0 %1781
    %v1783 = vsel %vm184, %v1779, 0.0
    %1784 = vadd.xlane.f32.xlu0 %v1783
    %v1785 = vpop.xlane.xlu0 %1784
    %v1786 = vmax.f32 %v1782, 1e-24
    %v1787 = vmax.f32 %v1785, 1e-24
    %v1788 = vrsqrt.pop %v1786
    %v1789 = vrsqrt.pop %v1787
    %v1790 = vmul.f32 %v1776, %v1788
    %v1791 = vmul.f32 %v1777, %v1789
    %s1792 = scalar_lea.vmem %s1, 32
    %v1793 = vld [vmem:[%s1792] sm:$0xff]
    %v1794 = vld [vmem:[%s1792 + $0x8] sm:$0xff]
    %v1795 = vld [vmem:[%s1792 + $0x10] sm:$0xff]
    %v1796 = vld [vmem:[%s1792 + $0x18] sm:$0xff]
    %1797 = vmatprep.subr.mxu0 0.0
    %1798 = vmatpush1.msra.mxu0 %v1793
    %1799 = vmatprep.subr.mxu0 0.0
    %1800 = vmatpush1.msra.mxu0 %v1794
    %1801 = vmatprep.subr.mxu0 0.0
    %1802 = vmatpush1.msra.mxu0 %v1795
    %1803 = vmatprep.subr.mxu0 0.0
    %1804 = vmatpush1.msra.mxu0 %v1796
    %1805 = vmatprep.subr.mxu0 0.0
    %1806 = vmatpush1.msra.mxu0 0.0
    %1807 = vmatprep.subr.mxu0 0.0
    %1808 = vmatpush1.msra.mxu0 0.0
    %1809 = vmatprep.subr.mxu0 0.0
    %1810 = vmatpush1.msra.mxu0 0.0
    %1811 = vmatprep.subr.mxu0 0.0
    %1812 = vmatpush1.msra.mxu0 0.0
    %1813 = vmatprep.subr.mxu0 0.0
    %1814 = vmatpush1.msra.mxu0 0.0
    %1815 = vmatprep.subr.mxu0 0.0
    %1816 = vmatpush1.msra.mxu0 0.0
    %1817 = vmatprep.subr.mxu0 0.0
    %1818 = vmatpush1.msra.mxu0 0.0
    %1819 = vmatprep.subr.mxu0 0.0
    %1820 = vmatpush1.msra.mxu0 0.0
    %1821 = vmatprep.subr.mxu0 0.0
    %1822 = vmatpush1.msra.mxu0 0.0
    %1823 = vmatprep.subr.mxu0 0.0
    %1824 = vmatpush1.msra.mxu0 0.0
    %1825 = vmatprep.subr.mxu0 0.0
    %1826 = vmatpush1.msra.mxu0 0.0
    %1827 = vmatprep.subr.mxu0 0.0
    %1828 = vmatpush1.msra.mxu0 0.0
    %1829 = vmatprep.subr.mxu0 0.0
    %1830 = vmatpush1.msra.mxu0 0.0
    %1831 = vmatprep.subr.mxu0 0.0
    %1832 = vmatpush1.msra.mxu0 0.0
    %1833 = vmatprep.subr.mxu0 0.0
    %1834 = vmatpush1.msra.mxu0 0.0
    %1835 = vmatprep.subr.mxu0 0.0
    %1836 = vmatpush1.msra.mxu0 0.0
    %1837 = vmatprep.subr.mxu0 0.0
    %1838 = vmatpush1.msra.mxu0 0.0
    %1839 = vmatprep.subr.mxu0 0.0
    %1840 = vmatpush1.msra.mxu0 0.0
    %1841 = vmatprep.subr.mxu0 0.0
    %1842 = vmatpush1.msra.mxu0 0.0
    %1843 = vmatprep.subr.mxu0 0.0
    %1844 = vmatpush1.msra.mxu0 0.0
    %1845 = vmatprep.subr.mxu0 0.0
    %1846 = vmatpush1.msra.mxu0 0.0
    %1847 = vmatprep.subr.mxu0 0.0
    %1848 = vmatpush1.msra.mxu0 0.0
    %1849 = vmatprep.subr.mxu0 0.0
    %1850 = vmatpush1.msra.mxu0 0.0
    %1851 = vmatprep.subr.mxu0 0.0
    %1852 = vmatpush1.msra.mxu0 0.0
    %1853 = vmatprep.subr.mxu0 0.0
    %1854 = vmatpush1.msra.mxu0 0.0
    %1855 = vmatprep.subr.mxu0 0.0
    %1856 = vmatpush1.msra.mxu0 0.0
    %1857 = vmatprep.subr.mxu0 0.0
    %1858 = vmatpush1.msra.mxu0 0.0
    %1859 = vmatprep.subr.mxu0 0.0
    %1860 = vmatpush1.msra.mxu0 0.0
    %1861 = vmatprep.mubr.f32.mxu0 0.0
    %1862 = vmatmul.mubr.f32.gmra.mrb[0].mxu0 %v1611
    %v1863 = vpop.f32.mrb[0].mxu0
    %v1864 = vadd.f32 0.0, %v1863
    %v1865 = vpop.f32.mrb[0].mxu0
    %1866 = vmatprep.mubr.f32.mxu0 0.0
    %1867 = vmatmul.mubr.f32.gmra.mrb[0].mxu0 %v1614
    %v1868 = vpop.f32.mrb[0].mxu0
    %v1869 = vadd.f32 0.0, %v1868
    %v1870 = vpop.f32.mrb[0].mxu0
    %1871 = vdwg.mxu0
    %1874 = vrot.lane.b32.xlu0 %v1864, 112
    %v1875 = vpop.permute.xlu0 %1874
    %1876 = vrot.lane.b32.xlu0 %v1869, 112
    %v1877 = vpop.permute.xlu0 %1876
    %1880 = vrot.lane.b32.xlu0 %v1864, 96
    %v1881 = vpop.permute.xlu0 %1880
    %1882 = vrot.lane.b32.xlu0 %v1869, 96
    %v1883 = vpop.permute.xlu0 %1882
    %1886 = vrot.lane.b32.xlu0 %v1864, 80
    %v1887 = vpop.permute.xlu0 %1886
    %1888 = vrot.lane.b32.xlu0 %v1869, 80
    %v1889 = vpop.permute.xlu0 %1888
    %v1892 = vmul.f32 %v1864, %v43
    %v1893 = vmul.f32 %v1869, %v44
    %v1894 = vmul.f32 %v1875, %v45
    %v1895 = vmul.f32 %v1877, %v46
    %v1896 = vmul.f32 %v1881, %v47
    %v1897 = vmul.f32 %v1883, %v48
    %v1898 = vmul.f32 %v1887, %v49
    %v1899 = vmul.f32 %v1889, %v50
    %v1900 = vsel %vm184, %v1864, 0
    %v1902 = vsel %vm184, %v1869, 0
    %v1904 = vsel %vm184, %v1875, 0
    %v1906 = vsel %vm184, %v1877, 0
    %v1908 = vsel %vm184, %v1881, 0
    %v1910 = vsel %vm184, %v1883, 0
    %v1912 = vsel %vm184, %v1887, 0
    %v1914 = vsel %vm184, %v1889, 0
    %1916 = vmatprep.subr.mxu0 0.0
    %1917 = vmatpush1.msra.mxu0 %v41
    %1918 = vmatprep.subr.mxu0 0.0
    %1919 = vmatpush1.msra.mxu0 %v42
    %1920 = vmatprep.subr.mxu0 0.0
    %1921 = vmatpush1.msra.mxu0 0.0
    %1922 = vmatprep.subr.mxu0 0.0
    %1923 = vmatpush1.msra.mxu0 0.0
    %1924 = vmatprep.subr.mxu0 0.0
    %1925 = vmatpush1.msra.mxu0 0.0
    %1926 = vmatprep.subr.mxu0 0.0
    %1927 = vmatpush1.msra.mxu0 0.0
    %1928 = vmatprep.subr.mxu0 0.0
    %1929 = vmatpush1.msra.mxu0 0.0
    %1930 = vmatprep.subr.mxu0 0.0
    %1931 = vmatpush1.msra.mxu0 0.0
    %1932 = vmatprep.subr.mxu0 0.0
    %1933 = vmatpush1.msra.mxu0 0.0
    %1934 = vmatprep.subr.mxu0 0.0
    %1935 = vmatpush1.msra.mxu0 0.0
    %1936 = vmatprep.subr.mxu0 0.0
    %1937 = vmatpush1.msra.mxu0 0.0
    %1938 = vmatprep.subr.mxu0 0.0
    %1939 = vmatpush1.msra.mxu0 0.0
    %1940 = vmatprep.subr.mxu0 0.0
    %1941 = vmatpush1.msra.mxu0 0.0
    %1942 = vmatprep.subr.mxu0 0.0
    %1943 = vmatpush1.msra.mxu0 0.0
    %1944 = vmatprep.subr.mxu0 0.0
    %1945 = vmatpush1.msra.mxu0 0.0
    %1946 = vmatprep.subr.mxu0 0.0
    %1947 = vmatpush1.msra.mxu0 0.0
    %1948 = vmatprep.subr.mxu0 0.0
    %1949 = vmatpush1.msra.mxu0 0.0
    %1950 = vmatprep.subr.mxu0 0.0
    %1951 = vmatpush1.msra.mxu0 0.0
    %1952 = vmatprep.subr.mxu0 0.0
    %1953 = vmatpush1.msra.mxu0 0.0
    %1954 = vmatprep.subr.mxu0 0.0
    %1955 = vmatpush1.msra.mxu0 0.0
    %1956 = vmatprep.subr.mxu0 0.0
    %1957 = vmatpush1.msra.mxu0 0.0
    %1958 = vmatprep.subr.mxu0 0.0
    %1959 = vmatpush1.msra.mxu0 0.0
    %1960 = vmatprep.subr.mxu0 0.0
    %1961 = vmatpush1.msra.mxu0 0.0
    %1962 = vmatprep.subr.mxu0 0.0
    %1963 = vmatpush1.msra.mxu0 0.0
    %1964 = vmatprep.subr.mxu0 0.0
    %1965 = vmatpush1.msra.mxu0 0.0
    %1966 = vmatprep.subr.mxu0 0.0
    %1967 = vmatpush1.msra.mxu0 0.0
    %1968 = vmatprep.subr.mxu0 0.0
    %1969 = vmatpush1.msra.mxu0 0.0
    %1970 = vmatprep.subr.mxu0 0.0
    %1971 = vmatpush1.msra.mxu0 0.0
    %1972 = vmatprep.subr.mxu0 0.0
    %1973 = vmatpush1.msra.mxu0 0.0
    %1974 = vmatprep.subr.mxu0 0.0
    %1975 = vmatpush1.msra.mxu0 0.0
    %1976 = vmatprep.subr.mxu0 0.0
    %1977 = vmatpush1.msra.mxu0 0.0
    %1978 = vmatprep.subr.mxu0 0.0
    %1979 = vmatpush1.msra.mxu0 0.0
    %1980 = vmatprep.mubr.f32.mxu0 0.0
    %1981 = vmatmul.mubr.f32.gmra.mrb[0].mxu0 %v1900
    %v1982 = vpop.f32.mrb[0].mxu0
    %v1983 = vadd.f32 0.0, %v1982
    %v1984 = vpop.f32.mrb[0].mxu0
    %1985 = vmatprep.mubr.f32.mxu0 0.0
    %1986 = vmatmul.mubr.f32.gmra.mrb[0].mxu0 %v1902
    %v1987 = vpop.f32.mrb[0].mxu0
    %v1988 = vadd.f32 0.0, %v1987
    %v1989 = vpop.f32.mrb[0].mxu0
    %1990 = vmatprep.mubr.f32.mxu0 0.0
    %1991 = vmatmul.mubr.f32.gmra.mrb[0].mxu0 %v1904
    %v1992 = vpop.f32.mrb[0].mxu0
    %v1993 = vadd.f32 0.0, %v1992
    %v1994 = vpop.f32.mrb[0].mxu0
    %1995 = vmatprep.mubr.f32.mxu0 0.0
    %1996 = vmatmul.mubr.f32.gmra.mrb[0].mxu0 %v1906
    %v1997 = vpop.f32.mrb[0].mxu0
    %v1998 = vadd.f32 0.0, %v1997
    %v1999 = vpop.f32.mrb[0].mxu0
    %2000 = vmatprep.mubr.f32.mxu0 0.0
    %2001 = vmatmul.mubr.f32.gmra.mrb[0].mxu0 %v1908
    %v2002 = vpop.f32.mrb[0].mxu0
    %v2003 = vadd.f32 0.0, %v2002
    %v2004 = vpop.f32.mrb[0].mxu0
    %2005 = vmatprep.mubr.f32.mxu0 0.0
    %2006 = vmatmul.mubr.f32.gmra.mrb[0].mxu0 %v1910
    %v2007 = vpop.f32.mrb[0].mxu0
    %v2008 = vadd.f32 0.0, %v2007
    %v2009 = vpop.f32.mrb[0].mxu0
    %2010 = vmatprep.mubr.f32.mxu0 0.0
    %2011 = vmatmul.mubr.f32.gmra.mrb[0].mxu0 %v1912
    %v2012 = vpop.f32.mrb[0].mxu0
    %v2013 = vadd.f32 0.0, %v2012
    %v2014 = vpop.f32.mrb[0].mxu0
    %2015 = vmatprep.mubr.f32.mxu0 0.0
    %2016 = vmatmul.mubr.f32.gmra.mrb[0].mxu0 %v1914
    %v2017 = vpop.f32.mrb[0].mxu0
    %v2018 = vadd.f32 0.0, %v2017
    %v2019 = vpop.f32.mrb[0].mxu0
    %2020 = vdwg.mxu0
    %v2021 = vmul.f32 %v1983, %v52
    %v2022 = vmul.f32 %v1988, %v53
    %v2023 = vmul.f32 %v1993, %v54
    %v2024 = vmul.f32 %v1998, %v55
    %v2025 = vmul.f32 %v2003, %v56
    %v2026 = vmul.f32 %v2008, %v57
    %v2027 = vmul.f32 %v2013, %v58
    %v2028 = vmul.f32 %v2018, %v59
    %v2029 = vadd.f32 %v1892, %v2021
    %v2030 = vadd.f32 %v1893, %v2022
    %v2031 = vadd.f32 %v1894, %v2023
    %v2032 = vadd.f32 %v1895, %v2024
    %v2033 = vadd.f32 %v1896, %v2025
    %v2034 = vadd.f32 %v1897, %v2026
    %v2035 = vadd.f32 %v1898, %v2027
    %v2036 = vadd.f32 %v1899, %v2028
    %v2037 = vmul.f32 %v2029, %v2029
    %v2038 = vmul.f32 %v2030, %v2030
    %v2039 = vmul.f32 %v2031, %v2031
    %v2040 = vmul.f32 %v2032, %v2032
    %v2041 = vmul.f32 %v2033, %v2033
    %v2042 = vmul.f32 %v2034, %v2034
    %v2043 = vmul.f32 %v2035, %v2035
    %v2044 = vmul.f32 %v2036, %v2036
    %v2045 = vsel %vm184, %v2037, 0.0
    %2046 = vadd.xlane.f32.xlu0 %v2045
    %v2047 = vpop.xlane.xlu0 %2046
    %v2048 = vsel %vm184, %v2038, 0.0
    %2049 = vadd.xlane.f32.xlu0 %v2048
    %v2050 = vpop.xlane.xlu0 %2049
    %v2051 = vsel %vm184, %v2039, 0.0
    %2052 = vadd.xlane.f32.xlu0 %v2051
    %v2053 = vpop.xlane.xlu0 %2052
    %v2054 = vsel %vm184, %v2040, 0.0
    %2055 = vadd.xlane.f32.xlu0 %v2054
    %v2056 = vpop.xlane.xlu0 %2055
    %v2057 = vsel %vm184, %v2041, 0.0
    %2058 = vadd.xlane.f32.xlu0 %v2057
    %v2059 = vpop.xlane.xlu0 %2058
    %v2060 = vsel %vm184, %v2042, 0.0
    %2061 = vadd.xlane.f32.xlu0 %v2060
    %v2062 = vpop.xlane.xlu0 %2061
    %v2063 = vsel %vm184, %v2043, 0.0
    %2064 = vadd.xlane.f32.xlu0 %v2063
    %v2065 = vpop.xlane.xlu0 %2064
    %v2066 = vsel %vm184, %v2044, 0.0
    %2067 = vadd.xlane.f32.xlu0 %v2066
    %v2068 = vpop.xlane.xlu0 %2067
    %v2069 = vmax.f32 %v2047, 1e-24
    %v2070 = vmax.f32 %v2050, 1e-24
    %v2071 = vmax.f32 %v2053, 1e-24
    %v2072 = vmax.f32 %v2056, 1e-24
    %v2073 = vmax.f32 %v2059, 1e-24
    %v2074 = vmax.f32 %v2062, 1e-24
    %v2075 = vmax.f32 %v2065, 1e-24
    %v2076 = vmax.f32 %v2068, 1e-24
    %v2077 = vrsqrt.pop %v2069
    %v2078 = vrsqrt.pop %v2070
    %v2079 = vrsqrt.pop %v2071
    %v2080 = vrsqrt.pop %v2072
    %v2081 = vrsqrt.pop %v2073
    %v2082 = vrsqrt.pop %v2074
    %v2083 = vrsqrt.pop %v2075
    %v2084 = vrsqrt.pop %v2076
    %v2085 = vmul.f32 %v2077, 16.0
    %v2086 = vmul.f32 %v2078, 16.0
    %v2087 = vmul.f32 %v2079, 16.0
    %v2088 = vmul.f32 %v2080, 16.0
    %v2089 = vmul.f32 %v2081, 16.0
    %v2090 = vmul.f32 %v2082, 16.0
    %v2091 = vmul.f32 %v2083, 16.0
    %v2092 = vmul.f32 %v2084, 16.0
    %v2093 = vmul.f32 %v2029, %v2085
    %v2094 = vmul.f32 %v2030, %v2086
    %v2095 = vmul.f32 %v2031, %v2087
    %v2096 = vmul.f32 %v2032, %v2088
    %v2097 = vmul.f32 %v2033, %v2089
    %v2098 = vmul.f32 %v2034, %v2090
    %v2099 = vmul.f32 %v2035, %v2091
    %v2100 = vmul.f32 %v2036, %v2092
    %v2102 = vsel %vm184, %v2093, 0
    %v2105 = vsel %vm184, %v2094, 0
    %v2108 = vsel %vm184, %v2095, 0
    %v2111 = vsel %vm184, %v2096, 0
    %v2114 = vsel %vm184, %v2097, 0
    %v2117 = vsel %vm184, %v2098, 0
    %v2120 = vsel %vm184, %v2099, 0
    %v2123 = vsel %vm184, %v2100, 0
    %v2126 = vsel %vm184, %v1790, 0
    %v2129 = vsel %vm184, %v1791, 0
    %2131 = vmatprep.subr.mxu0 0.0
    %2132 = vmatpush1.xpose.msra.mxu0 %v2126
    %2133 = vmatprep.subr.mxu0 0.0
    %2134 = vmatpush1.xpose.msra.mxu0 %v2129
    %2135 = vmatprep.subr.mxu0 0.0
    %2136 = vmatpush1.xpose.msra.mxu0 0.0
    %2137 = vmatprep.subr.mxu0 0.0
    %2138 = vmatpush1.xpose.msra.mxu0 0.0
    %2139 = vmatprep.subr.mxu0 0.0
    %2140 = vmatpush1.xpose.msra.mxu0 0.0
    %2141 = vmatprep.subr.mxu0 0.0
    %2142 = vmatpush1.xpose.msra.mxu0 0.0
    %2143 = vmatprep.subr.mxu0 0.0
    %2144 = vmatpush1.xpose.msra.mxu0 0.0
    %2145 = vmatprep.subr.mxu0 0.0
    %2146 = vmatpush1.xpose.msra.mxu0 0.0
    %2147 = vmatprep.subr.mxu0 0.0
    %2148 = vmatpush1.xpose.msra.mxu0 0.0
    %2149 = vmatprep.subr.mxu0 0.0
    %2150 = vmatpush1.xpose.msra.mxu0 0.0
    %2151 = vmatprep.subr.mxu0 0.0
    %2152 = vmatpush1.xpose.msra.mxu0 0.0
    %2153 = vmatprep.subr.mxu0 0.0
    %2154 = vmatpush1.xpose.msra.mxu0 0.0
    %2155 = vmatprep.subr.mxu0 0.0
    %2156 = vmatpush1.xpose.msra.mxu0 0.0
    %2157 = vmatprep.subr.mxu0 0.0
    %2158 = vmatpush1.xpose.msra.mxu0 0.0
    %2159 = vmatprep.subr.mxu0 0.0
    %2160 = vmatpush1.xpose.msra.mxu0 0.0
    %2161 = vmatprep.subr.mxu0 0.0
    %2162 = vmatpush1.xpose.msra.mxu0 0.0
    %2163 = vmatprep.subr.mxu0 0.0
    %2164 = vmatpush1.xpose.msra.mxu0 0.0
    %2165 = vmatprep.subr.mxu0 0.0
    %2166 = vmatpush1.xpose.msra.mxu0 0.0
    %2167 = vmatprep.subr.mxu0 0.0
    %2168 = vmatpush1.xpose.msra.mxu0 0.0
    %2169 = vmatprep.subr.mxu0 0.0
    %2170 = vmatpush1.xpose.msra.mxu0 0.0
    %2171 = vmatprep.subr.mxu0 0.0
    %2172 = vmatpush1.xpose.msra.mxu0 0.0
    %2173 = vmatprep.subr.mxu0 0.0
    %2174 = vmatpush1.xpose.msra.mxu0 0.0
    %2175 = vmatprep.subr.mxu0 0.0
    %2176 = vmatpush1.xpose.msra.mxu0 0.0
    %2177 = vmatprep.subr.mxu0 0.0
    %2178 = vmatpush1.xpose.msra.mxu0 0.0
    %2179 = vmatprep.subr.mxu0 0.0
    %2180 = vmatpush1.xpose.msra.mxu0 0.0
    %2181 = vmatprep.subr.mxu0 0.0
    %2182 = vmatpush1.xpose.msra.mxu0 0.0
    %2183 = vmatprep.subr.mxu0 0.0
    %2184 = vmatpush1.xpose.msra.mxu0 0.0
    %2185 = vmatprep.subr.mxu0 0.0
    %2186 = vmatpush1.xpose.msra.mxu0 0.0
    %2187 = vmatprep.subr.mxu0 0.0
    %2188 = vmatpush1.xpose.msra.mxu0 0.0
    %2189 = vmatprep.subr.mxu0 0.0
    %2190 = vmatpush1.xpose.msra.mxu0 0.0
    %2191 = vmatprep.subr.mxu0 0.0
    %2192 = vmatpush1.xpose.msra.mxu0 0.0
    %2193 = vmatprep.subr.mxu0 0.0
    %2194 = vmatpush1.xpose.msra.mxu0 0.0
    %2195 = vmatprep.mubr.f32.mxu0 0.0
    %2196 = vmatmul.mubr.f32.gmra.mrb[0].mxu0 %v2102
    %v2197 = vpop.f32.mrb[0].mxu0
    %v2198 = vadd.f32 %v592, %v2197
    %v2199 = vpop.f32.mrb[0].mxu0
    %2200 = vmatprep.mubr.f32.mxu0 0.0
    %2201 = vmatmul.mubr.f32.gmra.mrb[0].mxu0 %v2105
    %v2202 = vpop.f32.mrb[0].mxu0
    %v2203 = vadd.f32 %v593, %v2202
    %v2204 = vpop.f32.mrb[0].mxu0
    %2205 = vmatprep.mubr.f32.mxu0 0.0
    %2206 = vmatmul.mubr.f32.gmra.mrb[0].mxu0 %v2108
    %v2207 = vpop.f32.mrb[0].mxu0
    %v2208 = vadd.f32 %v594, %v2207
    %v2209 = vpop.f32.mrb[0].mxu0
    %2210 = vmatprep.mubr.f32.mxu0 0.0
    %2211 = vmatmul.mubr.f32.gmra.mrb[0].mxu0 %v2111
    %v2212 = vpop.f32.mrb[0].mxu0
    %v2213 = vadd.f32 %v595, %v2212
    %v2214 = vpop.f32.mrb[0].mxu0
    %2215 = vmatprep.mubr.f32.mxu0 0.0
    %2216 = vmatmul.mubr.f32.gmra.mrb[0].mxu0 %v2114
    %v2217 = vpop.f32.mrb[0].mxu0
    %v2218 = vadd.f32 %v596, %v2217
    %v2219 = vpop.f32.mrb[0].mxu0
    %2220 = vmatprep.mubr.f32.mxu0 0.0
    %2221 = vmatmul.mubr.f32.gmra.mrb[0].mxu0 %v2117
    %v2222 = vpop.f32.mrb[0].mxu0
    %v2223 = vadd.f32 %v597, %v2222
    %v2224 = vpop.f32.mrb[0].mxu0
    %2225 = vmatprep.mubr.f32.mxu0 0.0
    %2226 = vmatmul.mubr.f32.gmra.mrb[0].mxu0 %v2120
    %v2227 = vpop.f32.mrb[0].mxu0
    %v2228 = vadd.f32 %v598, %v2227
    %v2229 = vpop.f32.mrb[0].mxu0
    %2230 = vmatprep.mubr.f32.mxu0 0.0
    %2231 = vmatmul.mubr.f32.gmra.mrb[0].mxu0 %v2123
    %v2232 = vpop.f32.mrb[0].mxu0
    %v2233 = vadd.f32 %v599, %v2232
    %v2234 = vpop.f32.mrb[0].mxu0
    %2235 = vdwg.mxu0
    %v2236 = vsel %vm184, %v2198, -inf
    %2237 = vmax.xlane.f32.xlu0 %v2236
    %v2238 = vpop.xlane.xlu0 %2237
    %v2239 = vsel %vm184, %v2203, -inf
    %2240 = vmax.xlane.f32.xlu0 %v2239
    %v2241 = vpop.xlane.xlu0 %2240
    %v2242 = vsel %vm184, %v2208, -inf
    %2243 = vmax.xlane.f32.xlu0 %v2242
    %v2244 = vpop.xlane.xlu0 %2243
    %v2245 = vsel %vm184, %v2213, -inf
    %2246 = vmax.xlane.f32.xlu0 %v2245
    %v2247 = vpop.xlane.xlu0 %2246
    %v2248 = vsel %vm184, %v2218, -inf
    %2249 = vmax.xlane.f32.xlu0 %v2248
    %v2250 = vpop.xlane.xlu0 %2249
    %v2251 = vsel %vm184, %v2223, -inf
    %2252 = vmax.xlane.f32.xlu0 %v2251
    %v2253 = vpop.xlane.xlu0 %2252
    %v2254 = vsel %vm184, %v2228, -inf
    %2255 = vmax.xlane.f32.xlu0 %v2254
    %v2256 = vpop.xlane.xlu0 %2255
    %v2257 = vsel %vm184, %v2233, -inf
    %2258 = vmax.xlane.f32.xlu0 %v2257
    %v2259 = vpop.xlane.xlu0 %2258
    %v2260 = vsub.f32 %v2198, %v2238
    %v2261 = vsub.f32 %v2203, %v2241
    %v2262 = vsub.f32 %v2208, %v2244
    %v2263 = vsub.f32 %v2213, %v2247
    %v2264 = vsub.f32 %v2218, %v2250
    %v2265 = vsub.f32 %v2223, %v2253
    %v2266 = vsub.f32 %v2228, %v2256
    %v2267 = vsub.f32 %v2233, %v2259
    %v2268 = vmul.f32 %v2260, 1.442695
    %v2269 = vpow.pop %v2268
    %v2270 = vmul.f32 %v2261, 1.442695
    %v2271 = vpow.pop %v2270
    %v2272 = vmul.f32 %v2262, 1.442695
    %v2273 = vpow.pop %v2272
    %v2274 = vmul.f32 %v2263, 1.442695
    %v2275 = vpow.pop %v2274
    %v2276 = vmul.f32 %v2264, 1.442695
    %v2277 = vpow.pop %v2276
    %v2278 = vmul.f32 %v2265, 1.442695
    %v2279 = vpow.pop %v2278
    %v2280 = vmul.f32 %v2266, 1.442695
    %v2281 = vpow.pop %v2280
    %v2282 = vmul.f32 %v2267, 1.442695
    %v2283 = vpow.pop %v2282
    %v2284 = vsel %vm184, %v2269, 0.0
    %2285 = vadd.xlane.f32.xlu0 %v2284
    %v2286 = vpop.xlane.xlu0 %2285
    %v2287 = vsel %vm184, %v2271, 0.0
    %2288 = vadd.xlane.f32.xlu0 %v2287
    %v2289 = vpop.xlane.xlu0 %2288
    %v2290 = vsel %vm184, %v2273, 0.0
    %2291 = vadd.xlane.f32.xlu0 %v2290
    %v2292 = vpop.xlane.xlu0 %2291
    %v2293 = vsel %vm184, %v2275, 0.0
    %2294 = vadd.xlane.f32.xlu0 %v2293
    %v2295 = vpop.xlane.xlu0 %2294
    %v2296 = vsel %vm184, %v2277, 0.0
    %2297 = vadd.xlane.f32.xlu0 %v2296
    %v2298 = vpop.xlane.xlu0 %2297
    %v2299 = vsel %vm184, %v2279, 0.0
    %2300 = vadd.xlane.f32.xlu0 %v2299
    %v2301 = vpop.xlane.xlu0 %2300
    %v2302 = vsel %vm184, %v2281, 0.0
    %2303 = vadd.xlane.f32.xlu0 %v2302
    %v2304 = vpop.xlane.xlu0 %2303
    %v2305 = vsel %vm184, %v2283, 0.0
    %2306 = vadd.xlane.f32.xlu0 %v2305
    %v2307 = vpop.xlane.xlu0 %2306
    %v2308 = vrcp.pop %v2286
    %v2309 = vrcp.pop %v2289
    %v2310 = vrcp.pop %v2292
    %v2311 = vrcp.pop %v2295
    %v2312 = vrcp.pop %v2298
    %v2313 = vrcp.pop %v2301
    %v2314 = vrcp.pop %v2304
    %v2315 = vrcp.pop %v2307
    %v2316 = vmul.f32 %v2269, %v2308
    %v2317 = vmul.f32 %v2271, %v2309
    %v2318 = vmul.f32 %v2273, %v2310
    %v2319 = vmul.f32 %v2275, %v2311
    %v2320 = vmul.f32 %v2277, %v2312
    %v2321 = vmul.f32 %v2279, %v2313
    %v2322 = vmul.f32 %v2281, %v2314
    %v2323 = vmul.f32 %v2283, %v2315
    %2324 = vrot.lane.b32.xlu0 %v1683, 112
    %v2325 = vpop.permute.xlu0 %2324
    %2326 = vrot.lane.b32.xlu0 %v1688, 112
    %v2327 = vpop.permute.xlu0 %2326
    %v2331 = vsel %vm184, %v2316, 0
    %v2334 = vsel %vm184, %v2317, 0
    %v2337 = vsel %vm184, %v2318, 0
    %v2340 = vsel %vm184, %v2319, 0
    %v2343 = vsel %vm184, %v2320, 0
    %v2346 = vsel %vm184, %v2321, 0
    %v2349 = vsel %vm184, %v2322, 0
    %v2352 = vsel %vm184, %v2323, 0
    %2354 = vmatprep.subr.mxu0 0.0
    %2355 = vmatpush1.msra.mxu0 %v2325
    %2356 = vmatprep.subr.mxu0 0.0
    %2357 = vmatpush1.msra.mxu0 %v2327
    %2358 = vmatprep.subr.mxu0 0.0
    %2359 = vmatpush1.msra.mxu0 0.0
    %2360 = vmatprep.subr.mxu0 0.0
    %2361 = vmatpush1.msra.mxu0 0.0
    %2362 = vmatprep.subr.mxu0 0.0
    %2363 = vmatpush1.msra.mxu0 0.0
    %2364 = vmatprep.subr.mxu0 0.0
    %2365 = vmatpush1.msra.mxu0 0.0
    %2366 = vmatprep.subr.mxu0 0.0
    %2367 = vmatpush1.msra.mxu0 0.0
    %2368 = vmatprep.subr.mxu0 0.0
    %2369 = vmatpush1.msra.mxu0 0.0
    %2370 = vmatprep.subr.mxu0 0.0
    %2371 = vmatpush1.msra.mxu0 0.0
    %2372 = vmatprep.subr.mxu0 0.0
    %2373 = vmatpush1.msra.mxu0 0.0
    %2374 = vmatprep.subr.mxu0 0.0
    %2375 = vmatpush1.msra.mxu0 0.0
    %2376 = vmatprep.subr.mxu0 0.0
    %2377 = vmatpush1.msra.mxu0 0.0
    %2378 = vmatprep.subr.mxu0 0.0
    %2379 = vmatpush1.msra.mxu0 0.0
    %2380 = vmatprep.subr.mxu0 0.0
    %2381 = vmatpush1.msra.mxu0 0.0
    %2382 = vmatprep.subr.mxu0 0.0
    %2383 = vmatpush1.msra.mxu0 0.0
    %2384 = vmatprep.subr.mxu0 0.0
    %2385 = vmatpush1.msra.mxu0 0.0
    %2386 = vmatprep.subr.mxu0 0.0
    %2387 = vmatpush1.msra.mxu0 0.0
    %2388 = vmatprep.subr.mxu0 0.0
    %2389 = vmatpush1.msra.mxu0 0.0
    %2390 = vmatprep.subr.mxu0 0.0
    %2391 = vmatpush1.msra.mxu0 0.0
    %2392 = vmatprep.subr.mxu0 0.0
    %2393 = vmatpush1.msra.mxu0 0.0
    %2394 = vmatprep.subr.mxu0 0.0
    %2395 = vmatpush1.msra.mxu0 0.0
    %2396 = vmatprep.subr.mxu0 0.0
    %2397 = vmatpush1.msra.mxu0 0.0
    %2398 = vmatprep.subr.mxu0 0.0
    %2399 = vmatpush1.msra.mxu0 0.0
    %2400 = vmatprep.subr.mxu0 0.0
    %2401 = vmatpush1.msra.mxu0 0.0
    %2402 = vmatprep.subr.mxu0 0.0
    %2403 = vmatpush1.msra.mxu0 0.0
    %2404 = vmatprep.subr.mxu0 0.0
    %2405 = vmatpush1.msra.mxu0 0.0
    %2406 = vmatprep.subr.mxu0 0.0
    %2407 = vmatpush1.msra.mxu0 0.0
    %2408 = vmatprep.subr.mxu0 0.0
    %2409 = vmatpush1.msra.mxu0 0.0
    %2410 = vmatprep.subr.mxu0 0.0
    %2411 = vmatpush1.msra.mxu0 0.0
    %2412 = vmatprep.subr.mxu0 0.0
    %2413 = vmatpush1.msra.mxu0 0.0
    %2414 = vmatprep.subr.mxu0 0.0
    %2415 = vmatpush1.msra.mxu0 0.0
    %2416 = vmatprep.subr.mxu0 0.0
    %2417 = vmatpush1.msra.mxu0 0.0
    %2418 = vmatprep.mubr.f32.mxu0 0.0
    %2419 = vmatmul.mubr.f32.gmra.mrb[0].mxu0 %v2331
    %v2420 = vpop.f32.mrb[0].mxu0
    %v2421 = vadd.f32 0.0, %v2420
    %v2422 = vpop.f32.mrb[0].mxu0
    %2423 = vmatprep.mubr.f32.mxu0 0.0
    %2424 = vmatmul.mubr.f32.gmra.mrb[0].mxu0 %v2334
    %v2425 = vpop.f32.mrb[0].mxu0
    %v2426 = vadd.f32 0.0, %v2425
    %v2427 = vpop.f32.mrb[0].mxu0
    %2428 = vmatprep.mubr.f32.mxu0 0.0
    %2429 = vmatmul.mubr.f32.gmra.mrb[0].mxu0 %v2337
    %v2430 = vpop.f32.mrb[0].mxu0
    %v2431 = vadd.f32 0.0, %v2430
    %v2432 = vpop.f32.mrb[0].mxu0
    %2433 = vmatprep.mubr.f32.mxu0 0.0
    %2434 = vmatmul.mubr.f32.gmra.mrb[0].mxu0 %v2340
    %v2435 = vpop.f32.mrb[0].mxu0
    %v2436 = vadd.f32 0.0, %v2435
    %v2437 = vpop.f32.mrb[0].mxu0
    %2438 = vmatprep.mubr.f32.mxu0 0.0
    %2439 = vmatmul.mubr.f32.gmra.mrb[0].mxu0 %v2343
    %v2440 = vpop.f32.mrb[0].mxu0
    %v2441 = vadd.f32 0.0, %v2440
    %v2442 = vpop.f32.mrb[0].mxu0
    %2443 = vmatprep.mubr.f32.mxu0 0.0
    %2444 = vmatmul.mubr.f32.gmra.mrb[0].mxu0 %v2346
    %v2445 = vpop.f32.mrb[0].mxu0
    %v2446 = vadd.f32 0.0, %v2445
    %v2447 = vpop.f32.mrb[0].mxu0
    %2448 = vmatprep.mubr.f32.mxu0 0.0
    %2449 = vmatmul.mubr.f32.gmra.mrb[0].mxu0 %v2349
    %v2450 = vpop.f32.mrb[0].mxu0
    %v2451 = vadd.f32 0.0, %v2450
    %v2452 = vpop.f32.mrb[0].mxu0
    %2453 = vmatprep.mubr.f32.mxu0 0.0
    %2454 = vmatmul.mubr.f32.gmra.mrb[0].mxu0 %v2352
    %v2455 = vpop.f32.mrb[0].mxu0
    %v2456 = vadd.f32 0.0, %v2455
    %v2457 = vpop.f32.mrb[0].mxu0
    %2458 = vdwg.mxu0
    %s2459 = scalar_lea.vmem %s3, 64
    %v2460 = vld [vmem:[%s2459] sm:$0xff]
    %v2461 = vld [vmem:[%s2459 + $0x8] sm:$0xff]
    %s2462 = scalar_lea.vmem %s3, 80
    %v2463 = vld [vmem:[%s2462] sm:$0xff]
    %v2464 = vld [vmem:[%s2462 + $0x8] sm:$0xff]
    %v2466 = vsel %vm184, %v2431, 0
    %v2469 = vsel %vm184, %v2436, 0
    %2471 = vmatprep.subr.mxu0 0.0
    %2472 = vmatpush1.msra.mxu0 %v2463
    %2473 = vmatprep.subr.mxu0 0.0
    %2474 = vmatpush1.msra.mxu0 %v2464
    %2475 = vmatprep.subr.mxu0 0.0
    %2476 = vmatpush1.msra.mxu0 0.0
    %2477 = vmatprep.subr.mxu0 0.0
    %2478 = vmatpush1.msra.mxu0 0.0
    %2479 = vmatprep.subr.mxu0 0.0
    %2480 = vmatpush1.msra.mxu0 0.0
    %2481 = vmatprep.subr.mxu0 0.0
    %2482 = vmatpush1.msra.mxu0 0.0
    %2483 = vmatprep.subr.mxu0 0.0
    %2484 = vmatpush1.msra.mxu0 0.0
    %2485 = vmatprep.subr.mxu0 0.0
    %2486 = vmatpush1.msra.mxu0 0.0
    %2487 = vmatprep.subr.mxu0 0.0
    %2488 = vmatpush1.msra.mxu0 0.0
    %2489 = vmatprep.subr.mxu0 0.0
    %2490 = vmatpush1.msra.mxu0 0.0
    %2491 = vmatprep.subr.mxu0 0.0
    %2492 = vmatpush1.msra.mxu0 0.0
    %2493 = vmatprep.subr.mxu0 0.0
    %2494 = vmatpush1.msra.mxu0 0.0
    %2495 = vmatprep.subr.mxu0 0.0
    %2496 = vmatpush1.msra.mxu0 0.0
    %2497 = vmatprep.subr.mxu0 0.0
    %2498 = vmatpush1.msra.mxu0 0.0
    %2499 = vmatprep.subr.mxu0 0.0
    %2500 = vmatpush1.msra.mxu0 0.0
    %2501 = vmatprep.subr.mxu0 0.0
    %2502 = vmatpush1.msra.mxu0 0.0
    %2503 = vmatprep.subr.mxu0 0.0
    %2504 = vmatpush1.msra.mxu0 0.0
    %2505 = vmatprep.subr.mxu0 0.0
    %2506 = vmatpush1.msra.mxu0 0.0
    %2507 = vmatprep.subr.mxu0 0.0
    %2508 = vmatpush1.msra.mxu0 0.0
    %2509 = vmatprep.subr.mxu0 0.0
    %2510 = vmatpush1.msra.mxu0 0.0
    %2511 = vmatprep.subr.mxu0 0.0
    %2512 = vmatpush1.msra.mxu0 0.0
    %2513 = vmatprep.subr.mxu0 0.0
    %2514 = vmatpush1.msra.mxu0 0.0
    %2515 = vmatprep.subr.mxu0 0.0
    %2516 = vmatpush1.msra.mxu0 0.0
    %2517 = vmatprep.subr.mxu0 0.0
    %2518 = vmatpush1.msra.mxu0 0.0
    %2519 = vmatprep.subr.mxu0 0.0
    %2520 = vmatpush1.msra.mxu0 0.0
    %2521 = vmatprep.subr.mxu0 0.0
    %2522 = vmatpush1.msra.mxu0 0.0
    %2523 = vmatprep.subr.mxu0 0.0
    %2524 = vmatpush1.msra.mxu0 0.0
    %2525 = vmatprep.subr.mxu0 0.0
    %2526 = vmatpush1.msra.mxu0 0.0
    %2527 = vmatprep.subr.mxu0 0.0
    %2528 = vmatpush1.msra.mxu0 0.0
    %2529 = vmatprep.subr.mxu0 0.0
    %2530 = vmatpush1.msra.mxu0 0.0
    %2531 = vmatprep.subr.mxu0 0.0
    %2532 = vmatpush1.msra.mxu0 0.0
    %2533 = vmatprep.subr.mxu0 0.0
    %2534 = vmatpush1.msra.mxu0 0.0
    %2535 = vmatprep.mubr.f32.mxu0 0.0
    %2536 = vmatmul.mubr.f32.gmra.mrb[0].mxu0 %v2466
    %v2537 = vpop.f32.mrb[0].mxu0
    %v2538 = vadd.f32 0.0, %v2537
    %v2539 = vpop.f32.mrb[0].mxu0
    %2540 = vmatprep.mubr.f32.mxu0 0.0
    %2541 = vmatmul.mubr.f32.gmra.mrb[0].mxu0 %v2469
    %v2542 = vpop.f32.mrb[0].mxu0
    %v2543 = vadd.f32 0.0, %v2542
    %v2544 = vpop.f32.mrb[0].mxu0
    %2545 = vdwg.mxu0
    %v2547 = vsel %vm184, %v2421, 0
    %v2550 = vsel %vm184, %v2426, 0
    %2552 = vmatprep.subr.mxu0 0.0
    %2553 = vmatpush1.msra.mxu0 %v2460
    %2554 = vmatprep.subr.mxu0 0.0
    %2555 = vmatpush1.msra.mxu0 %v2461
    %2556 = vmatprep.subr.mxu0 0.0
    %2557 = vmatpush1.msra.mxu0 0.0
    %2558 = vmatprep.subr.mxu0 0.0
    %2559 = vmatpush1.msra.mxu0 0.0
    %2560 = vmatprep.subr.mxu0 0.0
    %2561 = vmatpush1.msra.mxu0 0.0
    %2562 = vmatprep.subr.mxu0 0.0
    %2563 = vmatpush1.msra.mxu0 0.0
    %2564 = vmatprep.subr.mxu0 0.0
    %2565 = vmatpush1.msra.mxu0 0.0
    %2566 = vmatprep.subr.mxu0 0.0
    %2567 = vmatpush1.msra.mxu0 0.0
    %2568 = vmatprep.subr.mxu0 0.0
    %2569 = vmatpush1.msra.mxu0 0.0
    %2570 = vmatprep.subr.mxu0 0.0
    %2571 = vmatpush1.msra.mxu0 0.0
    %2572 = vmatprep.subr.mxu0 0.0
    %2573 = vmatpush1.msra.mxu0 0.0
    %2574 = vmatprep.subr.mxu0 0.0
    %2575 = vmatpush1.msra.mxu0 0.0
    %2576 = vmatprep.subr.mxu0 0.0
    %2577 = vmatpush1.msra.mxu0 0.0
    %2578 = vmatprep.subr.mxu0 0.0
    %2579 = vmatpush1.msra.mxu0 0.0
    %2580 = vmatprep.subr.mxu0 0.0
    %2581 = vmatpush1.msra.mxu0 0.0
    %2582 = vmatprep.subr.mxu0 0.0
    %2583 = vmatpush1.msra.mxu0 0.0
    %2584 = vmatprep.subr.mxu0 0.0
    %2585 = vmatpush1.msra.mxu0 0.0
    %2586 = vmatprep.subr.mxu0 0.0
    %2587 = vmatpush1.msra.mxu0 0.0
    %2588 = vmatprep.subr.mxu0 0.0
    %2589 = vmatpush1.msra.mxu0 0.0
    %2590 = vmatprep.subr.mxu0 0.0
    %2591 = vmatpush1.msra.mxu0 0.0
    %2592 = vmatprep.subr.mxu0 0.0
    %2593 = vmatpush1.msra.mxu0 0.0
    %2594 = vmatprep.subr.mxu0 0.0
    %2595 = vmatpush1.msra.mxu0 0.0
    %2596 = vmatprep.subr.mxu0 0.0
    %2597 = vmatpush1.msra.mxu0 0.0
    %2598 = vmatprep.subr.mxu0 0.0
    %2599 = vmatpush1.msra.mxu0 0.0
    %2600 = vmatprep.subr.mxu0 0.0
    %2601 = vmatpush1.msra.mxu0 0.0
    %2602 = vmatprep.subr.mxu0 0.0
    %2603 = vmatpush1.msra.mxu0 0.0
    %2604 = vmatprep.subr.mxu0 0.0
    %2605 = vmatpush1.msra.mxu0 0.0
    %2606 = vmatprep.subr.mxu0 0.0
    %2607 = vmatpush1.msra.mxu0 0.0
    %2608 = vmatprep.subr.mxu0 0.0
    %2609 = vmatpush1.msra.mxu0 0.0
    %2610 = vmatprep.subr.mxu0 0.0
    %2611 = vmatpush1.msra.mxu0 0.0
    %2612 = vmatprep.subr.mxu0 0.0
    %2613 = vmatpush1.msra.mxu0 0.0
    %2614 = vmatprep.subr.mxu0 0.0
    %2615 = vmatpush1.msra.mxu0 0.0
    %2616 = vmatprep.mubr.f32.mxu0 0.0
    %2617 = vmatmul.mubr.f32.gmra.mrb[0].mxu0 %v2547
    %v2618 = vpop.f32.mrb[0].mxu0
    %v2619 = vadd.f32 %v2538, %v2618
    %v2620 = vpop.f32.mrb[0].mxu0
    %2621 = vmatprep.mubr.f32.mxu0 0.0
    %2622 = vmatmul.mubr.f32.gmra.mrb[0].mxu0 %v2550
    %v2623 = vpop.f32.mrb[0].mxu0
    %v2624 = vadd.f32 %v2543, %v2623
    %v2625 = vpop.f32.mrb[0].mxu0
    %2626 = vdwg.mxu0
    %s2627 = scalar_lea.vmem %s3, 96
    %v2628 = vld [vmem:[%s2627] sm:$0xff]
    %v2629 = vld [vmem:[%s2627 + $0x8] sm:$0xff]
    %v2631 = vsel %vm184, %v2441, 0
    %v2634 = vsel %vm184, %v2446, 0
    %2636 = vmatprep.subr.mxu0 0.0
    %2637 = vmatpush1.msra.mxu0 %v2628
    %2638 = vmatprep.subr.mxu0 0.0
    %2639 = vmatpush1.msra.mxu0 %v2629
    %2640 = vmatprep.subr.mxu0 0.0
    %2641 = vmatpush1.msra.mxu0 0.0
    %2642 = vmatprep.subr.mxu0 0.0
    %2643 = vmatpush1.msra.mxu0 0.0
    %2644 = vmatprep.subr.mxu0 0.0
    %2645 = vmatpush1.msra.mxu0 0.0
    %2646 = vmatprep.subr.mxu0 0.0
    %2647 = vmatpush1.msra.mxu0 0.0
    %2648 = vmatprep.subr.mxu0 0.0
    %2649 = vmatpush1.msra.mxu0 0.0
    %2650 = vmatprep.subr.mxu0 0.0
    %2651 = vmatpush1.msra.mxu0 0.0
    %2652 = vmatprep.subr.mxu0 0.0
    %2653 = vmatpush1.msra.mxu0 0.0
    %2654 = vmatprep.subr.mxu0 0.0
    %2655 = vmatpush1.msra.mxu0 0.0
    %2656 = vmatprep.subr.mxu0 0.0
    %2657 = vmatpush1.msra.mxu0 0.0
    %2658 = vmatprep.subr.mxu0 0.0
    %2659 = vmatpush1.msra.mxu0 0.0
    %2660 = vmatprep.subr.mxu0 0.0
    %2661 = vmatpush1.msra.mxu0 0.0
    %2662 = vmatprep.subr.mxu0 0.0
    %2663 = vmatpush1.msra.mxu0 0.0
    %2664 = vmatprep.subr.mxu0 0.0
    %2665 = vmatpush1.msra.mxu0 0.0
    %2666 = vmatprep.subr.mxu0 0.0
    %2667 = vmatpush1.msra.mxu0 0.0
    %2668 = vmatprep.subr.mxu0 0.0
    %2669 = vmatpush1.msra.mxu0 0.0
    %2670 = vmatprep.subr.mxu0 0.0
    %2671 = vmatpush1.msra.mxu0 0.0
    %2672 = vmatprep.subr.mxu0 0.0
    %2673 = vmatpush1.msra.mxu0 0.0
    %2674 = vmatprep.subr.mxu0 0.0
    %2675 = vmatpush1.msra.mxu0 0.0
    %2676 = vmatprep.subr.mxu0 0.0
    %2677 = vmatpush1.msra.mxu0 0.0
    %2678 = vmatprep.subr.mxu0 0.0
    %2679 = vmatpush1.msra.mxu0 0.0
    %2680 = vmatprep.subr.mxu0 0.0
    %2681 = vmatpush1.msra.mxu0 0.0
    %2682 = vmatprep.subr.mxu0 0.0
    %2683 = vmatpush1.msra.mxu0 0.0
    %2684 = vmatprep.subr.mxu0 0.0
    %2685 = vmatpush1.msra.mxu0 0.0
    %2686 = vmatprep.subr.mxu0 0.0
    %2687 = vmatpush1.msra.mxu0 0.0
    %2688 = vmatprep.subr.mxu0 0.0
    %2689 = vmatpush1.msra.mxu0 0.0
    %2690 = vmatprep.subr.mxu0 0.0
    %2691 = vmatpush1.msra.mxu0 0.0
    %2692 = vmatprep.subr.mxu0 0.0
    %2693 = vmatpush1.msra.mxu0 0.0
    %2694 = vmatprep.subr.mxu0 0.0
    %2695 = vmatpush1.msra.mxu0 0.0
    %2696 = vmatprep.subr.mxu0 0.0
    %2697 = vmatpush1.msra.mxu0 0.0
    %2698 = vmatprep.subr.mxu0 0.0
    %2699 = vmatpush1.msra.mxu0 0.0
    %2700 = vmatprep.mubr.f32.mxu0 0.0
    %2701 = vmatmul.mubr.f32.gmra.mrb[0].mxu0 %v2631
    %v2702 = vpop.f32.mrb[0].mxu0
    %v2703 = vadd.f32 0.0, %v2702
    %v2704 = vpop.f32.mrb[0].mxu0
    %2705 = vmatprep.mubr.f32.mxu0 0.0
    %2706 = vmatmul.mubr.f32.gmra.mrb[0].mxu0 %v2634
    %v2707 = vpop.f32.mrb[0].mxu0
    %v2708 = vadd.f32 0.0, %v2707
    %v2709 = vpop.f32.mrb[0].mxu0
    %2710 = vdwg.mxu0
    %v2711 = vadd.f32 %v2619, %v2703
    %v2712 = vadd.f32 %v2624, %v2708
    %s2713 = scalar_lea.vmem %s3, 112
    %v2714 = vld [vmem:[%s2713] sm:$0xff]
    %v2715 = vld [vmem:[%s2713 + $0x8] sm:$0xff]
    %v2717 = vsel %vm184, %v2451, 0
    %v2720 = vsel %vm184, %v2456, 0
    %2722 = vmatprep.subr.mxu0 0.0
    %2723 = vmatpush1.msra.mxu0 %v2714
    %2724 = vmatprep.subr.mxu0 0.0
    %2725 = vmatpush1.msra.mxu0 %v2715
    %2726 = vmatprep.subr.mxu0 0.0
    %2727 = vmatpush1.msra.mxu0 0.0
    %2728 = vmatprep.subr.mxu0 0.0
    %2729 = vmatpush1.msra.mxu0 0.0
    %2730 = vmatprep.subr.mxu0 0.0
    %2731 = vmatpush1.msra.mxu0 0.0
    %2732 = vmatprep.subr.mxu0 0.0
    %2733 = vmatpush1.msra.mxu0 0.0
    %2734 = vmatprep.subr.mxu0 0.0
    %2735 = vmatpush1.msra.mxu0 0.0
    %2736 = vmatprep.subr.mxu0 0.0
    %2737 = vmatpush1.msra.mxu0 0.0
    %2738 = vmatprep.subr.mxu0 0.0
    %2739 = vmatpush1.msra.mxu0 0.0
    %2740 = vmatprep.subr.mxu0 0.0
    %2741 = vmatpush1.msra.mxu0 0.0
    %2742 = vmatprep.subr.mxu0 0.0
    %2743 = vmatpush1.msra.mxu0 0.0
    %2744 = vmatprep.subr.mxu0 0.0
    %2745 = vmatpush1.msra.mxu0 0.0
    %2746 = vmatprep.subr.mxu0 0.0
    %2747 = vmatpush1.msra.mxu0 0.0
    %2748 = vmatprep.subr.mxu0 0.0
    %2749 = vmatpush1.msra.mxu0 0.0
    %2750 = vmatprep.subr.mxu0 0.0
    %2751 = vmatpush1.msra.mxu0 0.0
    %2752 = vmatprep.subr.mxu0 0.0
    %2753 = vmatpush1.msra.mxu0 0.0
    %2754 = vmatprep.subr.mxu0 0.0
    %2755 = vmatpush1.msra.mxu0 0.0
    %2756 = vmatprep.subr.mxu0 0.0
    %2757 = vmatpush1.msra.mxu0 0.0
    %2758 = vmatprep.subr.mxu0 0.0
    %2759 = vmatpush1.msra.mxu0 0.0
    %2760 = vmatprep.subr.mxu0 0.0
    %2761 = vmatpush1.msra.mxu0 0.0
    %2762 = vmatprep.subr.mxu0 0.0
    %2763 = vmatpush1.msra.mxu0 0.0
    %2764 = vmatprep.subr.mxu0 0.0
    %2765 = vmatpush1.msra.mxu0 0.0
    %2766 = vmatprep.subr.mxu0 0.0
    %2767 = vmatpush1.msra.mxu0 0.0
    %2768 = vmatprep.subr.mxu0 0.0
    %2769 = vmatpush1.msra.mxu0 0.0
    %2770 = vmatprep.subr.mxu0 0.0
    %2771 = vmatpush1.msra.mxu0 0.0
    %2772 = vmatprep.subr.mxu0 0.0
    %2773 = vmatpush1.msra.mxu0 0.0
    %2774 = vmatprep.subr.mxu0 0.0
    %2775 = vmatpush1.msra.mxu0 0.0
    %2776 = vmatprep.subr.mxu0 0.0
    %2777 = vmatpush1.msra.mxu0 0.0
    %2778 = vmatprep.subr.mxu0 0.0
    %2779 = vmatpush1.msra.mxu0 0.0
    %2780 = vmatprep.subr.mxu0 0.0
    %2781 = vmatpush1.msra.mxu0 0.0
    %2782 = vmatprep.subr.mxu0 0.0
    %2783 = vmatpush1.msra.mxu0 0.0
    %2784 = vmatprep.subr.mxu0 0.0
    %2785 = vmatpush1.msra.mxu0 0.0
    %2786 = vmatprep.mubr.f32.mxu0 0.0
    %2787 = vmatmul.mubr.f32.gmra.mrb[0].mxu0 %v2717
    %v2788 = vpop.f32.mrb[0].mxu0
    %v2789 = vadd.f32 0.0, %v2788
    %v2790 = vpop.f32.mrb[0].mxu0
    %2791 = vmatprep.mubr.f32.mxu0 0.0
    %2792 = vmatmul.mubr.f32.gmra.mrb[0].mxu0 %v2720
    %v2793 = vpop.f32.mrb[0].mxu0
    %v2794 = vadd.f32 0.0, %v2793
    %v2795 = vpop.f32.mrb[0].mxu0
    %2796 = vdwg.mxu0
    %v2797 = vadd.f32 %v2711, %v2789
    %v2798 = vadd.f32 %v2712, %v2794
    %s2799 = scalar_lea.vmem %s6, 3
    %v2800 = vld [vmem:[%s2799] sm:$0x1]
    %v2801 = vsel %vm61, %v2797, 0.0
    %2802 = vadd.xlane.f32.xlu0 %v2801
    %v2803 = vpop.xlane.xlu0 %2802
    %v2804 = vsel %vm61, %v2798, 0.0
    %2805 = vadd.xlane.f32.xlu0 %v2804
    %v2806 = vpop.xlane.xlu0 %2805
    %v2807 = vmul.f32 %v2803, %v68
    %v2808 = vmul.f32 %v2806, %v68
    %v2809 = vsub.f32 %v2797, %v2807
    %v2810 = vsub.f32 %v2798, %v2808
    %v2811 = vmul.f32 %v2809, %v2809
    %v2812 = vmul.f32 %v2810, %v2810
    %v2813 = vsel %vm61, %v2811, 0.0
    %2814 = vadd.xlane.f32.xlu0 %v2813
    %v2815 = vpop.xlane.xlu0 %2814
    %v2816 = vsel %vm61, %v2812, 0.0
    %2817 = vadd.xlane.f32.xlu0 %v2816
    %v2818 = vpop.xlane.xlu0 %2817
    %v2819 = vmul.f32 %v2815, %v68
    %v2820 = vmul.f32 %v2818, %v68
    %v2821 = vadd.f32 %v2819, 1e-05
    %v2822 = vadd.f32 %v2820, 1e-05
    %v2823 = vrsqrt.pop %v2821
    %v2824 = vrsqrt.pop %v2822
    %v2825 = vmul.f32 %v2809, %v2823
    %v2826 = vmul.f32 %v2810, %v2824
    %v2828 = vlaneseq
    %v2829 = vshrl.u32 %v2828, 7
    %v2830 = vsub.s32 0, %v2829
    %v2831 = vrot.slane %v2800, %v2830
    %v2833 = vmul.f32 %v2825, %v2831
    %v2834 = vmul.f32 %v2826, %v2831
    %v2835 = vadd.f32 %v2833, %v1561
    %v2836 = vadd.f32 %v2834, %v1566
    %s2837 = scalar_lea.vmem %s6, 5
    %v2838 = vld [vmem:[%s2837] sm:$0x1]
    %v2839 = vsel %vm61, %v2835, 0.0
    %2840 = vadd.xlane.f32.xlu0 %v2839
    %v2841 = vpop.xlane.xlu0 %2840
    %v2842 = vsel %vm61, %v2836, 0.0
    %2843 = vadd.xlane.f32.xlu0 %v2842
    %v2844 = vpop.xlane.xlu0 %2843
    %v2845 = vmul.f32 %v2841, %v68
    %v2846 = vmul.f32 %v2844, %v68
    %v2847 = vsub.f32 %v2835, %v2845
    %v2848 = vsub.f32 %v2836, %v2846
    %v2849 = vmul.f32 %v2847, %v2847
    %v2850 = vmul.f32 %v2848, %v2848
    %v2851 = vsel %vm61, %v2849, 0.0
    %2852 = vadd.xlane.f32.xlu0 %v2851
    %v2853 = vpop.xlane.xlu0 %2852
    %v2854 = vsel %vm61, %v2850, 0.0
    %2855 = vadd.xlane.f32.xlu0 %v2854
    %v2856 = vpop.xlane.xlu0 %2855
    %v2857 = vmul.f32 %v2853, %v68
    %v2858 = vmul.f32 %v2856, %v68
    %v2859 = vadd.f32 %v2857, 1e-05
    %v2860 = vadd.f32 %v2858, 1e-05
    %v2861 = vrsqrt.pop %v2859
    %v2862 = vrsqrt.pop %v2860
    %v2863 = vmul.f32 %v2847, %v2861
    %v2864 = vmul.f32 %v2848, %v2862
    %v2866 = vlaneseq
    %v2867 = vshrl.u32 %v2866, 7
    %v2868 = vsub.s32 0, %v2867
    %v2869 = vrot.slane %v2838, %v2868
    %v2871 = vmul.f32 %v2863, %v2869
    %v2872 = vmul.f32 %v2864, %v2869
    %s2873 = scalar_lea.vmem %s4, 64
    %v2874 = vld [vmem:[%s2873] sm:$0xff]
    %v2875 = vld [vmem:[%s2873 + $0x8] sm:$0xff]
    %v2876 = vld [vmem:[%s2873 + $0x10] sm:$0xff]
    %v2877 = vld [vmem:[%s2873 + $0x18] sm:$0xff]
    %v2878 = vld [vmem:[%s2873 + $0x20] sm:$0xff]
    %v2879 = vld [vmem:[%s2873 + $0x28] sm:$0xff]
    %v2880 = vld [vmem:[%s2873 + $0x30] sm:$0xff]
    %v2881 = vld [vmem:[%s2873 + $0x38] sm:$0xff]
    %v2883 = vsel %vm61, %v2871, 0
    %v2886 = vsel %vm61, %v2872, 0
    %2888 = vmatprep.subr.mxu0 %v2875
    %2889 = vmatpush1.msra.mxu0 %v2874
    %2890 = vmatprep.subr.mxu0 %v2877
    %2891 = vmatpush1.msra.mxu0 %v2876
    %2892 = vmatprep.subr.mxu0 %v2879
    %2893 = vmatpush1.msra.mxu0 %v2878
    %2894 = vmatprep.subr.mxu0 %v2881
    %2895 = vmatpush1.msra.mxu0 %v2880
    %2896 = vmatprep.subr.mxu0 0.0
    %2897 = vmatpush1.msra.mxu0 0.0
    %2898 = vmatprep.subr.mxu0 0.0
    %2899 = vmatpush1.msra.mxu0 0.0
    %2900 = vmatprep.subr.mxu0 0.0
    %2901 = vmatpush1.msra.mxu0 0.0
    %2902 = vmatprep.subr.mxu0 0.0
    %2903 = vmatpush1.msra.mxu0 0.0
    %2904 = vmatprep.subr.mxu0 0.0
    %2905 = vmatpush1.msra.mxu0 0.0
    %2906 = vmatprep.subr.mxu0 0.0
    %2907 = vmatpush1.msra.mxu0 0.0
    %2908 = vmatprep.subr.mxu0 0.0
    %2909 = vmatpush1.msra.mxu0 0.0
    %2910 = vmatprep.subr.mxu0 0.0
    %2911 = vmatpush1.msra.mxu0 0.0
    %2912 = vmatprep.subr.mxu0 0.0
    %2913 = vmatpush1.msra.mxu0 0.0
    %2914 = vmatprep.subr.mxu0 0.0
    %2915 = vmatpush1.msra.mxu0 0.0
    %2916 = vmatprep.subr.mxu0 0.0
    %2917 = vmatpush1.msra.mxu0 0.0
    %2918 = vmatprep.subr.mxu0 0.0
    %2919 = vmatpush1.msra.mxu0 0.0
    %2920 = vmatprep.subr.mxu0 0.0
    %2921 = vmatpush1.msra.mxu0 0.0
    %2922 = vmatprep.subr.mxu0 0.0
    %2923 = vmatpush1.msra.mxu0 0.0
    %2924 = vmatprep.subr.mxu0 0.0
    %2925 = vmatpush1.msra.mxu0 0.0
    %2926 = vmatprep.subr.mxu0 0.0
    %2927 = vmatpush1.msra.mxu0 0.0
    %2928 = vmatprep.subr.mxu0 0.0
    %2929 = vmatpush1.msra.mxu0 0.0
    %2930 = vmatprep.subr.mxu0 0.0
    %2931 = vmatpush1.msra.mxu0 0.0
    %2932 = vmatprep.subr.mxu0 0.0
    %2933 = vmatpush1.msra.mxu0 0.0
    %2934 = vmatprep.subr.mxu0 0.0
    %2935 = vmatpush1.msra.mxu0 0.0
    %2936 = vmatprep.subr.mxu0 0.0
    %2937 = vmatpush1.msra.mxu0 0.0
    %2938 = vmatprep.subr.mxu0 0.0
    %2939 = vmatpush1.msra.mxu0 0.0
    %2940 = vmatprep.subr.mxu0 0.0
    %2941 = vmatpush1.msra.mxu0 0.0
    %2942 = vmatprep.subr.mxu0 0.0
    %2943 = vmatpush1.msra.mxu0 0.0
    %2944 = vmatprep.subr.mxu0 0.0
    %2945 = vmatpush1.msra.mxu0 0.0
    %2946 = vmatprep.subr.mxu0 0.0
    %2947 = vmatpush1.msra.mxu0 0.0
    %2948 = vmatprep.subr.mxu0 0.0
    %2949 = vmatpush1.msra.mxu0 0.0
    %2950 = vmatprep.subr.mxu0 0.0
    %2951 = vmatpush1.msra.mxu0 0.0
    %2952 = vmatprep.mubr.f32.mxu0 0.0
    %2953 = vmatmul.mubr.f32.gmra.mrb[0].mxu0 %v2883
    %v2954 = vpop.f32.mrb[0].mxu0
    %v2955 = vadd.f32 0.0, %v2954
    %v2956 = vpop.f32.mrb[0].mxu0
    %v2957 = vadd.f32 0.0, %v2956
    %2958 = vmatprep.mubr.f32.mxu0 0.0
    %2959 = vmatmul.mubr.f32.gmra.mrb[0].mxu0 %v2886
    %v2960 = vpop.f32.mrb[0].mxu0
    %v2961 = vadd.f32 0.0, %v2960
    %v2962 = vpop.f32.mrb[0].mxu0
    %v2963 = vadd.f32 0.0, %v2962
    %2964 = vdwg.mxu0
    %v2965 = vxor.u32 %v2957, 2147483648
    %v2966 = vxor.u32 %v2963, 2147483648
    %v2967 = vmul.f32 %v2965, 1.442695
    %v2968 = vpow.pop %v2967
    %v2969 = vmul.f32 %v2966, 1.442695
    %v2970 = vpow.pop %v2969
    %v2971 = vadd.f32 %v2968, 1.0
    %v2972 = vadd.f32 %v2970, 1.0
    %v2973 = vrcp.pop %v2971
    %v2974 = vmul.f32 1.0, %v2973
    %v2975 = vrcp.pop %v2972
    %v2976 = vmul.f32 1.0, %v2975
    %v2977 = vmul.f32 %v2957, %v2974
    %v2978 = vmul.f32 %v2963, %v2976
    %v2979 = vmul.f32 %v2955, %v2977
    %v2980 = vmul.f32 %v2961, %v2978
    %s2981 = scalar_lea.vmem %s5, 128
    %v2982 = vld [vmem:[%s2981] sm:$0xff]
    %v2983 = vld [vmem:[%s2981 + $0x8] sm:$0xff]
    %v2984 = vld [vmem:[%s2981 + $0x10] sm:$0xff]
    %v2985 = vld [vmem:[%s2981 + $0x18] sm:$0xff]
    %v2986 = vld [vmem:[%s2981 + $0x20] sm:$0xff]
    %v2987 = vld [vmem:[%s2981 + $0x28] sm:$0xff]
    %v2988 = vld [vmem:[%s2981 + $0x30] sm:$0xff]
    %v2989 = vld [vmem:[%s2981 + $0x38] sm:$0xff]
    %v2990 = vld [vmem:[%s2981 + $0x40] sm:$0xff]
    %v2991 = vld [vmem:[%s2981 + $0x48] sm:$0xff]
    %v2992 = vld [vmem:[%s2981 + $0x50] sm:$0xff]
    %v2993 = vld [vmem:[%s2981 + $0x58] sm:$0xff]
    %v2994 = vld [vmem:[%s2981 + $0x60] sm:$0xff]
    %v2995 = vld [vmem:[%s2981 + $0x68] sm:$0xff]
    %v2996 = vld [vmem:[%s2981 + $0x70] sm:$0xff]
    %v2997 = vld [vmem:[%s2981 + $0x78] sm:$0xff]
    %2998 = vmatprep.subr.mxu0 0.0
    %2999 = vmatpush1.msra.mxu0 %v2982
    %3000 = vmatprep.subr.mxu0 0.0
    %3001 = vmatpush1.msra.mxu0 %v2983
    %3002 = vmatprep.subr.mxu0 0.0
    %3003 = vmatpush1.msra.mxu0 %v2984
    %3004 = vmatprep.subr.mxu0 0.0
    %3005 = vmatpush1.msra.mxu0 %v2985
    %3006 = vmatprep.subr.mxu0 0.0
    %3007 = vmatpush1.msra.mxu0 %v2986
    %3008 = vmatprep.subr.mxu0 0.0
    %3009 = vmatpush1.msra.mxu0 %v2987
    %3010 = vmatprep.subr.mxu0 0.0
    %3011 = vmatpush1.msra.mxu0 %v2988
    %3012 = vmatprep.subr.mxu0 0.0
    %3013 = vmatpush1.msra.mxu0 %v2989
    %3014 = vmatprep.subr.mxu0 0.0
    %3015 = vmatpush1.msra.mxu0 %v2990
    %3016 = vmatprep.subr.mxu0 0.0
    %3017 = vmatpush1.msra.mxu0 %v2991
    %3018 = vmatprep.subr.mxu0 0.0
    %3019 = vmatpush1.msra.mxu0 %v2992
    %3020 = vmatprep.subr.mxu0 0.0
    %3021 = vmatpush1.msra.mxu0 %v2993
    %3022 = vmatprep.subr.mxu0 0.0
    %3023 = vmatpush1.msra.mxu0 %v2994
    %3024 = vmatprep.subr.mxu0 0.0
    %3025 = vmatpush1.msra.mxu0 %v2995
    %3026 = vmatprep.subr.mxu0 0.0
    %3027 = vmatpush1.msra.mxu0 %v2996
    %3028 = vmatprep.subr.mxu0 0.0
    %3029 = vmatpush1.msra.mxu0 %v2997
    %3030 = vmatprep.subr.mxu0 0.0
    %3031 = vmatpush1.msra.mxu0 0.0
    %3032 = vmatprep.subr.mxu0 0.0
    %3033 = vmatpush1.msra.mxu0 0.0
    %3034 = vmatprep.subr.mxu0 0.0
    %3035 = vmatpush1.msra.mxu0 0.0
    %3036 = vmatprep.subr.mxu0 0.0
    %3037 = vmatpush1.msra.mxu0 0.0
    %3038 = vmatprep.subr.mxu0 0.0
    %3039 = vmatpush1.msra.mxu0 0.0
    %3040 = vmatprep.subr.mxu0 0.0
    %3041 = vmatpush1.msra.mxu0 0.0
    %3042 = vmatprep.subr.mxu0 0.0
    %3043 = vmatpush1.msra.mxu0 0.0
    %3044 = vmatprep.subr.mxu0 0.0
    %3045 = vmatpush1.msra.mxu0 0.0
    %3046 = vmatprep.subr.mxu0 0.0
    %3047 = vmatpush1.msra.mxu0 0.0
    %3048 = vmatprep.subr.mxu0 0.0
    %3049 = vmatpush1.msra.mxu0 0.0
    %3050 = vmatprep.subr.mxu0 0.0
    %3051 = vmatpush1.msra.mxu0 0.0
    %3052 = vmatprep.subr.mxu0 0.0
    %3053 = vmatpush1.msra.mxu0 0.0
    %3054 = vmatprep.subr.mxu0 0.0
    %3055 = vmatpush1.msra.mxu0 0.0
    %3056 = vmatprep.subr.mxu0 0.0
    %3057 = vmatpush1.msra.mxu0 0.0
    %3058 = vmatprep.subr.mxu0 0.0
    %3059 = vmatpush1.msra.mxu0 0.0
    %3060 = vmatprep.subr.mxu0 0.0
    %3061 = vmatpush1.msra.mxu0 0.0
    %3062 = vmatprep.mubr.f32.mxu0 0.0
    %3063 = vmatmul.mubr.f32.gmra.mrb[0].mxu0 %v2979
    %v3064 = vpop.f32.mrb[0].mxu0
    %v3065 = vadd.f32 %v2835, %v3064
    %v3066 = vpop.f32.mrb[0].mxu0
    %3067 = vmatprep.mubr.f32.mxu0 0.0
    %3068 = vmatmul.mubr.f32.gmra.mrb[0].mxu0 %v2980
    %v3069 = vpop.f32.mrb[0].mxu0
    %v3070 = vadd.f32 %v2836, %v3069
    %v3071 = vpop.f32.mrb[0].mxu0
    %3072 = vdwg.mxu0
    %v3073 = vsel %vm61, %v3065, -inf
    %3074 = vmax.xlane.f32.xlu0 %v3073
    %v3075 = vpop.xlane.xlu0 %3074
    %v3076 = vsel %vm61, %v3070, -inf
    %3077 = vmax.xlane.f32.xlu0 %v3076
    %v3078 = vpop.xlane.xlu0 %3077
    %v3079 = vrcp.pop %v3075
    %v3080 = vrcp.pop %v3078
    %v3081 = vmul.f32 %v3065, %v3079
    %v3082 = vmul.f32 %v3070, %v3080
    %s3083 = scalar_lea.vmem %s6, 6
    %v3084 = vld [vmem:[%s3083] sm:$0x1]
    %v3085 = vsel %vm61, %v3081, 0.0
    %3086 = vadd.xlane.f32.xlu0 %v3085
    %v3087 = vpop.xlane.xlu0 %3086
    %v3088 = vsel %vm61, %v3082, 0.0
    %3089 = vadd.xlane.f32.xlu0 %v3088
    %v3090 = vpop.xlane.xlu0 %3089
    %v3091 = vmul.f32 %v3087, %v68
    %v3092 = vmul.f32 %v3090, %v68
    %v3093 = vsub.f32 %v3081, %v3091
    %v3094 = vsub.f32 %v3082, %v3092
    %v3095 = vmul.f32 %v3093, %v3093
    %v3096 = vmul.f32 %v3094, %v3094
    %v3097 = vsel %vm61, %v3095, 0.0
    %3098 = vadd.xlane.f32.xlu0 %v3097
    %v3099 = vpop.xlane.xlu0 %3098
    %v3100 = vsel %vm61, %v3096, 0.0
    %3101 = vadd.xlane.f32.xlu0 %v3100
    %v3102 = vpop.xlane.xlu0 %3101
    %v3103 = vmul.f32 %v3099, %v68
    %v3104 = vmul.f32 %v3102, %v68
    %v3105 = vadd.f32 %v3103, 1e-05
    %v3106 = vadd.f32 %v3104, 1e-05
    %v3107 = vrsqrt.pop %v3105
    %v3108 = vrsqrt.pop %v3106
    %v3109 = vmul.f32 %v3093, %v3107
    %v3110 = vmul.f32 %v3094, %v3108
    %v3112 = vlaneseq
    %v3113 = vshrl.u32 %v3112, 7
    %v3114 = vsub.s32 0, %v3113
    %v3115 = vrot.slane %v3084, %v3114
    %v3117 = vmul.f32 %v3109, %v3115
    %v3118 = vmul.f32 %v3110, %v3115
    %v3119 = vld [vmem:[%s7] sm:$0xff]
    %v3120 = vld [vmem:[%s7 + $0x8] sm:$0xff]
    %v3121 = vld [vmem:[%s7 + $0x10] sm:$0xff]
    %v3122 = vld [vmem:[%s7 + $0x18] sm:$0xff]
    %v3124 = vsel %vm61, %v3117, 0
    %v3127 = vsel %vm61, %v3118, 0
    %3129 = vmatprep.subr.mxu0 0.0
    %3130 = vmatpush1.msra.mxu0 %v3119
    %3131 = vmatprep.subr.mxu0 0.0
    %3132 = vmatpush1.msra.mxu0 %v3120
    %3133 = vmatprep.subr.mxu0 0.0
    %3134 = vmatpush1.msra.mxu0 %v3121
    %3135 = vmatprep.subr.mxu0 0.0
    %3136 = vmatpush1.msra.mxu0 %v3122
    %3137 = vmatprep.subr.mxu0 0.0
    %3138 = vmatpush1.msra.mxu0 0.0
    %3139 = vmatprep.subr.mxu0 0.0
    %3140 = vmatpush1.msra.mxu0 0.0
    %3141 = vmatprep.subr.mxu0 0.0
    %3142 = vmatpush1.msra.mxu0 0.0
    %3143 = vmatprep.subr.mxu0 0.0
    %3144 = vmatpush1.msra.mxu0 0.0
    %3145 = vmatprep.subr.mxu0 0.0
    %3146 = vmatpush1.msra.mxu0 0.0
    %3147 = vmatprep.subr.mxu0 0.0
    %3148 = vmatpush1.msra.mxu0 0.0
    %3149 = vmatprep.subr.mxu0 0.0
    %3150 = vmatpush1.msra.mxu0 0.0
    %3151 = vmatprep.subr.mxu0 0.0
    %3152 = vmatpush1.msra.mxu0 0.0
    %3153 = vmatprep.subr.mxu0 0.0
    %3154 = vmatpush1.msra.mxu0 0.0
    %3155 = vmatprep.subr.mxu0 0.0
    %3156 = vmatpush1.msra.mxu0 0.0
    %3157 = vmatprep.subr.mxu0 0.0
    %3158 = vmatpush1.msra.mxu0 0.0
    %3159 = vmatprep.subr.mxu0 0.0
    %3160 = vmatpush1.msra.mxu0 0.0
    %3161 = vmatprep.subr.mxu0 0.0
    %3162 = vmatpush1.msra.mxu0 0.0
    %3163 = vmatprep.subr.mxu0 0.0
    %3164 = vmatpush1.msra.mxu0 0.0
    %3165 = vmatprep.subr.mxu0 0.0
    %3166 = vmatpush1.msra.mxu0 0.0
    %3167 = vmatprep.subr.mxu0 0.0
    %3168 = vmatpush1.msra.mxu0 0.0
    %3169 = vmatprep.subr.mxu0 0.0
    %3170 = vmatpush1.msra.mxu0 0.0
    %3171 = vmatprep.subr.mxu0 0.0
    %3172 = vmatpush1.msra.mxu0 0.0
    %3173 = vmatprep.subr.mxu0 0.0
    %3174 = vmatpush1.msra.mxu0 0.0
    %3175 = vmatprep.subr.mxu0 0.0
    %3176 = vmatpush1.msra.mxu0 0.0
    %3177 = vmatprep.subr.mxu0 0.0
    %3178 = vmatpush1.msra.mxu0 0.0
    %3179 = vmatprep.subr.mxu0 0.0
    %3180 = vmatpush1.msra.mxu0 0.0
    %3181 = vmatprep.subr.mxu0 0.0
    %3182 = vmatpush1.msra.mxu0 0.0
    %3183 = vmatprep.subr.mxu0 0.0
    %3184 = vmatpush1.msra.mxu0 0.0
    %3185 = vmatprep.subr.mxu0 0.0
    %3186 = vmatpush1.msra.mxu0 0.0
    %3187 = vmatprep.subr.mxu0 0.0
    %3188 = vmatpush1.msra.mxu0 0.0
    %3189 = vmatprep.subr.mxu0 0.0
    %3190 = vmatpush1.msra.mxu0 0.0
    %3191 = vmatprep.subr.mxu0 0.0
    %3192 = vmatpush1.msra.mxu0 0.0
    %3193 = vmatprep.mubr.f32.mxu0 0.0
    %3194 = vmatmul.mubr.f32.gmra.mrb[0].mxu0 %v3124
    %v3195 = vpop.f32.mrb[0].mxu0
    %v3196 = vadd.f32 0.0, %v3195
    %v3197 = vpop.f32.mrb[0].mxu0
    %3198 = vmatprep.mubr.f32.mxu0 0.0
    %3199 = vmatmul.mubr.f32.gmra.mrb[0].mxu0 %v3127
    %v3200 = vpop.f32.mrb[0].mxu0
    %v3201 = vadd.f32 0.0, %v3200
    %v3202 = vpop.f32.mrb[0].mxu0
    %3203 = vdwg.mxu0
    %3204 = vst.msk [vmem:[#allocation2] sm:$0xff] %vm184, %v3196
    %3205 = vst.msk [vmem:[#allocation2 + $0x8] sm:$0xff] %vm184, %v3201
    // Predicated region
    $region46: #{tpu_custom_call.1} parent=1 // pred_check
      _
    $region47: #{tpu_custom_call.1} parent=1 // pred_check_branch
      %3207 = sbr.rel (0) target = $region49
    $region48: #{tpu_custom_call.1} parent=1 // pred_region
      %s3209 = ssub.s32 256, 256
      %3210 = vsyncadd [#allocation3], %s3209
      %s3211 = sshll.u32 [#allocation2], 4
      %s3212 = int_to_ptr.vmem [resolvable:$true] %s3211
      %3217 = dma.vmem_to_hbm [thread:$0]  %s3212, 256, %s11, [#allocation3], 128, 128, 8
    $region49: #{tpu_custom_call.1} parent=1 // pred_fallthru
      _
    // Predicated region
    $region50: #{tpu_custom_call.1} parent=1 // pred_check
      _
    $region51: #{tpu_custom_call.1} parent=1 // pred_check_branch
      %3219 = sbr.rel (0) target = $region53
    $region52: #{tpu_custom_call.1} parent=1 // pred_region
      %3220 = dma.done [#allocation3], 256
    $region53: #{tpu_custom_call.1} parent=1 // pred_fallthru
      _
    %3221 = vsyncpa [#allocation3], 1

</llo_original>
